<compile_context>
chip_gen: v6e
topology: v6e:2x2x1
jax: 0.10.0
libtpu: 0.0.40
codegen_flags: <defaults>
</compile_context>

<pallas_src>
import jax
import jax.numpy as jnp
from jax.experimental import pallas as pl
from jax.experimental.pallas import tpu as pltpu

C_OUT = 96     # logical channel count of the module
C_PAD = 128    # lane-padded channel count used inside the kernel


# ---------------------------------------------------------------------------
# Fused kernel: dlayers + flayers + merge + convpool for one batch element.
# ---------------------------------------------------------------------------
def _receptive_field_kernel(xd_ref, xf_ref, wd_ref, wf1_ref, wf2_ref,
                            wf3_ref, wp_ref, b_ref, o_ref, f1pad_ref):
    """Per-grid-step (one batch image) shapes:
      xd_ref : (1, Hh*Wh, 363)  bf16   im2col for the 11x11 / stride-2 conv
      xf_ref : (1, H*W, 27)     bf16   im2col for the first 3x3 conv
      wd_ref : (363, 128)       bf16
      wf1_ref: (27, 128)        bf16
      wf2_ref: (3, 384, 128)    bf16   (kw, cin) folded into the contraction
      wf3_ref: (2, 256, 128)    bf16   (kw, cin) folded into the contraction
      wp_ref : (2, 256, 128)    bf16
      b_ref  : (5, 128)         f32    biases [dlayers, f1, f2, f3, pool]
      o_ref  : (1, Hq*Wq, 128)  f32    lane-dense output slab
      f1pad_ref: VMEM scratch (H+2, W+2, 128) bf16 - zero-padded f1 activation
    """
    f32 = jnp.float32
    bf16 = jnp.bfloat16
    C = o_ref.shape[2]                       # 128 (lane-padded)
    H = f1pad_ref.shape[0] - 2
    W = f1pad_ref.shape[1] - 2
    Hh, Wh = H // 2, W // 2
    Hq, Wq = H // 4, W // 4

    # ---- dlayers: Conv2d(3, 96, k=11, pad=5, stride=2) + ReLU --------------
    # single im2col matmul, contraction depth 11*11*3 = 363, bf16 MXU, f32 acc
    u = jnp.dot(xd_ref[0], wd_ref[...], preferred_element_type=f32)
    u = jnp.maximum(u + b_ref[0:1, :], 0.0)                    # (Hh*Wh, C) f32

    # ---- flayers conv1: Conv2d(3, 96, k=3, pad=1) + ReLU -------------------
    f1 = jnp.dot(xf_ref[0], wf1_ref[...], preferred_element_type=f32)
    f1 = jnp.maximum(f1 + b_ref[1:2, :], 0.0).astype(bf16)     # (H*W, C)

    # Stage f1 zero-padded in VMEM ('same' padding for the next 3x3 conv).
    # Single pass: two zero halo rows + the interior rows with the zero side
    # columns concatenated in-register (no full-buffer zeroing pass).
    zrow = jnp.zeros((1, W + 2, C), bf16)
    zcol = jnp.zeros((H, 1, C), bf16)
    f1pad_ref[0:1, :, :] = zrow
    f1pad_ref[H + 1:H + 2, :, :] = zrow
    f1pad_ref[1:H + 1, :, :] = jnp.concatenate(
        [zcol, f1.reshape(H, W, C), zcol], axis=1)

    # ---- flayers conv2: Conv2d(96, 96, k=3, pad=1) + ReLU ------------------
    # kw taps folded into the contraction: 3 dots of depth 3*C = 384; the
    # activation stays resident in VMEM (f1pad_ref), never touching HBM.
    acc = None
    for kh in range(3):
        win = jnp.concatenate(
            [f1pad_ref[kh:kh + H, kw:kw + W, :] for kw in range(3)], axis=-1)
        d = jnp.dot(win.reshape(H * W, 3 * C), wf2_ref[kh],
                    preferred_element_type=f32)
        acc = d if acc is None else acc + d
    f2 = jnp.maximum(acc + b_ref[2:3, :], 0.0).astype(bf16)    # (H*W, C)

    # ---- flayers down: ZeroPad2d((0,1,0,1)) + Conv2d(k=2, s=2) + ReLU ------
    # For even H/W the asymmetric pad never contributes -> exact 2x2/stride-2.
    # In-register space-to-depth: adjacent column pairs packed onto lanes,
    # 2 dots of contraction depth 2*C = 256.
    f2_pp = f2.reshape(H * Wh, 2 * C).reshape(Hh, 2, Wh, 2 * C)
    v = (jnp.dot(f2_pp[:, 0].reshape(Hh * Wh, 2 * C), wf3_ref[0],
                 preferred_element_type=f32)
         + jnp.dot(f2_pp[:, 1].reshape(Hh * Wh, 2 * C), wf3_ref[1],
                   preferred_element_type=f32))
    v = jnp.maximum(v + b_ref[3:4, :], 0.0)                    # (Hh*Wh, C) f32

    # ---- merge + convpool: x = (u+v)/2; ZeroPad2d + Conv2d(k=2,s=2) + ReLU -
    m = ((u + v) * 0.5).astype(bf16)                           # (Hh*Wh, C)
    m_pp = m.reshape(Hh * Wq, 2 * C).reshape(Hq, 2, Wq, 2 * C)
    out = (jnp.dot(m_pp[:, 0].reshape(Hq * Wq, 2 * C), wp_ref[0],
                   preferred_element_type=f32)
           + jnp.dot(m_pp[:, 1].reshape(Hq * Wq, 2 * C), wp_ref[1],
                     preferred_element_type=f32))
    out = jnp.maximum(out + b_ref[4:5, :], 0.0)                # (Hq*Wq, C) f32

    # lane-dense output slab: (Hq*Wq, 128) -> one unmasked store
    o_ref[0] = out.astype(o_ref.dtype)


# ---------------------------------------------------------------------------
# Wrapper
# ---------------------------------------------------------------------------
def _im2col(x_nhwc, k, pad, stride):
    """Extract KxK patches -> (B, Ho*Wo, K*K*C), channel order (kh, kw, c)."""
    B, H, W, Cin = x_nhwc.shape
    Ho = (H + 2 * pad - k) // stride + 1
    Wo = (W + 2 * pad - k) // stride + 1
    xp = jnp.pad(x_nhwc, ((0, 0), (pad, pad), (pad, pad), (0, 0)))
    cols = []
    for kh in range(k):
        for kw in range(k):
            sl = xp[:, kh::stride, kw::stride, :][:, :Ho, :Wo, :]
            cols.append(sl)
    patches = jnp.concatenate(cols, axis=-1)                 # (B,Ho,Wo,K*K*Cin)
    return patches.reshape(B, Ho * Wo, k * k * Cin)


@jax.jit
def receptive_field_forward(params, x_nchw):
    """NCHW in, NCHW out -- matches ReceptiveField.forward."""
    B, Cin, H, W = x_nchw.shape
    # TODO(synk): general H/W (odd sizes need the ZeroPad2d((0,1,0,1)) edge).
    assert H % 4 == 0 and W % 4 == 0, (H, W)
    C = params["wd"].shape[-1]
    cpad = C_PAD - C
    Hh, Wh, Hq, Wq = H // 2, W // 2, H // 4, W // 4

    x = jnp.transpose(x_nchw, (0, 2, 3, 1)).astype(jnp.float32)   # NHWC

    # im2col of the raw (3-channel) input for the two entry convolutions,
    # shipped in bf16 (halves the dominant DMA).
    # TODO(synk): build the 11x11 patches in-kernel from a padded raw-input
    #             scratch to avoid the ~30x im2col HBM blow-up (v5e/v6e).
    xd_col = _im2col(x, 11, 5, 2).astype(jnp.bfloat16)   # (B, Hh*Wh, 363)
    xf_col = _im2col(x, 3, 1, 1).astype(jnp.bfloat16)    # (B, H*W, 27)

    # Lane-pad Cout (and Cin of the 96->96 convs) to 128; padded channels
    # carry exact zeros through every stage (zero weights + zero biases).
    wd = jnp.pad(params["wd"].reshape(11 * 11 * Cin, C),
                 ((0, 0), (0, cpad))).astype(jnp.bfloat16)
    wf1 = jnp.pad(params["wf1"].reshape(3 * 3 * Cin, C),
                  ((0, 0), (0, cpad))).astype(jnp.bfloat16)
    wf2 = jnp.pad(params["wf2"], ((0, 0), (0, 0), (0, cpad), (0, cpad)))
    wf2 = wf2.reshape(3, 3 * C_PAD, C_PAD).astype(jnp.bfloat16)
    wf3 = jnp.pad(params["wf3"], ((0, 0), (0, 0), (0, cpad), (0, cpad)))
    wf3 = wf3.reshape(2, 2 * C_PAD, C_PAD).astype(jnp.bfloat16)
    wp = jnp.pad(params["wp"], ((0, 0), (0, 0), (0, cpad), (0, cpad)))
    wp = wp.reshape(2, 2 * C_PAD, C_PAD).astype(jnp.bfloat16)
    b = jnp.pad(jnp.stack([params["bd"], params["bf1"], params["bf2"],
                           params["bf3"], params["bp"]], axis=0),
                ((0, 0), (0, cpad))).astype(jnp.float32)          # (5, 128)

    # TODO(synk): row-strip spatial grid axis with halo for production
    #             resolutions (strip heights sized per-generation VMEM).
    out_slab = pl.pallas_call(
        _receptive_field_kernel,
        out_shape=jax.ShapeDtypeStruct((B, Hq * Wq, C_PAD), jnp.float32),
        grid=(B,),
        in_specs=[
            pl.BlockSpec((1, Hh * Wh, 11 * 11 * Cin), lambda i: (i, 0, 0)),
            pl.BlockSpec((1, H * W, 3 * 3 * Cin), lambda i: (i, 0, 0)),
            pl.BlockSpec((11 * 11 * Cin, C_PAD), lambda i: (0, 0)),
            pl.BlockSpec((3 * 3 * Cin, C_PAD), lambda i: (0, 0)),
            pl.BlockSpec((3, 3 * C_PAD, C_PAD), lambda i: (0, 0, 0)),
            pl.BlockSpec((2, 2 * C_PAD, C_PAD), lambda i: (0, 0, 0)),
            pl.BlockSpec((2, 2 * C_PAD, C_PAD), lambda i: (0, 0, 0)),
            pl.BlockSpec((5, C_PAD), lambda i: (0, 0)),
        ],
        out_specs=pl.BlockSpec((1, Hq * Wq, C_PAD), lambda i: (i, 0, 0)),
        scratch_shapes=[pltpu.VMEM((H + 2, W + 2, C_PAD), jnp.bfloat16)],
        compiler_params=pltpu.CompilerParams(
            dimension_semantics=("parallel",),
            vmem_limit_bytes=32 * 1024 * 1024),
    )(xd_col, xf_col, wd, wf1, wf2, wf3, wp, b)

    out = out_slab[:, :, :C].reshape(B, Hq, Wq, C)
    return jnp.transpose(out, (0, 3, 1, 2))                   # NCHW


# ---------------------------------------------------------------------------
# Parameters (PyTorch Conv2d default init, weights stored as (Kh, Kw, Cin, Cout))
# ---------------------------------------------------------------------------
def init_receptive_field_params(key):
    def conv_init(k, ksize, cin, cout):
        kw_key, kb_key = jax.random.split(k)
        bound = (cin * ksize * ksize) ** -0.5
        w = jax.random.uniform(kw_key, (ksize, ksize, cin, cout),
                               minval=-bound, maxval=bound, dtype=jnp.float32)
        b = jax.random.uniform(kb_key, (cout,), minval=-bound, maxval=bound,
                               dtype=jnp.float32)
        return w, b

    keys = jax.random.split(key, 5)
    wd, bd = conv_init(keys[0], 11, 3, C_OUT)
    wf1, bf1 = conv_init(keys[1], 3, 3, C_OUT)
    wf2, bf2 = conv_init(keys[2], 3, C_OUT, C_OUT)
    wf3, bf3 = conv_init(keys[3], 2, C_OUT, C_OUT)
    wp, bp = conv_init(keys[4], 2, C_OUT, C_OUT)
    return dict(wd=wd, bd=bd, wf1=wf1, bf1=bf1, wf2=wf2, bf2=bf2,
                wf3=wf3, bf3=bf3, wp=wp, bp=bp)


# ---------------------------------------------------------------------------
# Pure-JAX reference (correctness check only, f32)
# ---------------------------------------------------------------------------
def receptive_field_reference(params, x_nchw):
    def conv_relu(x, w_khkwio, b, stride, pad):
        w_oihw = jnp.transpose(w_khkwio, (3, 2, 0, 1))
        y = jax.lax.conv_general_dilated(
            x, w_oihw, (stride, stride), pad,
            dimension_numbers=("NCHW", "OIHW", "NCHW"))
        return jax.nn.relu(y + b.reshape(1, -1, 1, 1))

    u = conv_relu(x_nchw, params["wd"], params["bd"], 2, ((5, 5), (5, 5)))
    v = conv_relu(x_nchw, params["wf1"], params["bf1"], 1, ((1, 1), (1, 1)))
    v = conv_relu(v, params["wf2"], params["bf2"], 1, ((1, 1), (1, 1)))
    v = conv_relu(v, params["wf3"], params["bf3"], 2, ((0, 1), (0, 1)))
    m = (u + v) / 2
    return conv_relu(m, params["wp"], params["bp"], 2, ((0, 1), (0, 1)))


# ---------------------------------------------------------------------------
if __name__ == "__main__":
    B, Cin, H, W = 2, 3, 16, 16

    key = jax.random.PRNGKey(0)
    pkey, xkey = jax.random.split(key)
    params = init_receptive_field_params(pkey)
    x = jax.random.normal(xkey, (B, Cin, H, W), dtype=jnp.float32)

    out = receptive_field_forward(params, x)
    out = jax.block_until_ready(out)

    ref = receptive_field_reference(params, x)
    assert out.shape == (B, C_OUT, H // 4, W // 4), out.shape
    # bf16 MXU operands (kernel) vs f32 reference -> loosened tolerance.
    assert jnp.allclose(out, ref, atol=5e-2, rtol=5e-2), \
        float(jnp.max(jnp.abs(out - ref)))

    print("KERNEL_OK")
</pallas_src>

<mosaic_0001>
module attributes {stable_mosaic.version = 11 : i64} {
  func.func @_receptive_field_kernel(%arg0: i32, %arg1: memref<1x64x363xbf16, #tpu.memory_space<vmem>>, %arg2: memref<1x256x27xbf16, #tpu.memory_space<vmem>>, %arg3: memref<363x128xbf16, #tpu.memory_space<vmem>>, %arg4: memref<27x128xbf16, #tpu.memory_space<vmem>>, %arg5: memref<3x384x128xbf16, #tpu.memory_space<vmem>>, %arg6: memref<2x256x128xbf16, #tpu.memory_space<vmem>>, %arg7: memref<2x256x128xbf16, #tpu.memory_space<vmem>>, %arg8: memref<5x128xf32, #tpu.memory_space<vmem>>, %arg9: memref<1x16x128xf32, #tpu.memory_space<vmem>>, %arg10: memref<18x18x128xbf16, #tpu.memory_space<vmem>>) attributes {dimension_semantics = [#tpu.dimension_semantics<parallel>], iteration_bounds = array<i64: 2>, scalar_prefetch = 0 : i64, scratch_operands = 1 : i64, tpu.core_type = #tpu.core_type<tc>, window_params = [{transform_indices = @transform_0, window_bounds = array<i64: 1, 64, 363>}, {transform_indices = @transform_1, window_bounds = array<i64: 1, 256, 27>}, {pipeline_mode = #tpu.pipeline_mode<synchronous>, transform_indices = @transform_2, window_bounds = array<i64: 363, 128>}, {pipeline_mode = #tpu.pipeline_mode<synchronous>, transform_indices = @transform_3, window_bounds = array<i64: 27, 128>}, {pipeline_mode = #tpu.pipeline_mode<synchronous>, transform_indices = @transform_4, window_bounds = array<i64: 3, 384, 128>}, {pipeline_mode = #tpu.pipeline_mode<synchronous>, transform_indices = @transform_5, window_bounds = array<i64: 2, 256, 128>}, {pipeline_mode = #tpu.pipeline_mode<synchronous>, transform_indices = @transform_6, window_bounds = array<i64: 2, 256, 128>}, {pipeline_mode = #tpu.pipeline_mode<synchronous>, transform_indices = @transform_7, window_bounds = array<i64: 5, 128>}, {transform_indices = @transform_8, window_bounds = array<i64: 1, 16, 128>}]} {
    %c0 = arith.constant 0 : index
    %c0_0 = arith.constant 0 : index
    %c0_1 = arith.constant 0 : index
    %0 = vector.load %arg1[%c0, %c0_0, %c0_1] : memref<1x64x363xbf16, #tpu.memory_space<vmem>>, vector<1x64x363xbf16>
    %1 = vector.shape_cast %0 : vector<1x64x363xbf16> to vector<64x363xbf16>
    %c0_2 = arith.constant 0 : index
    %c0_3 = arith.constant 0 : index
    %2 = vector.load %arg3[%c0_2, %c0_3] : memref<363x128xbf16, #tpu.memory_space<vmem>>, vector<363x128xbf16>
    %cst = arith.constant dense<0.000000e+00> : vector<64x128xf32>
    %3 = tpu.matmul %1, %2, %cst {dimension_numbers = #tpu.dot_dimension_numbers<[1], [0], [0], [1], [0, 0, 1, 1], [], []>} : vector<64x363xbf16>, vector<363x128xbf16>, vector<64x128xf32> -> vector<64x128xf32>
    %c0_4 = arith.constant 0 : index
    %c0_5 = arith.constant 0 : index
    %4 = vector.load %arg8[%c0_4, %c0_5] : memref<5x128xf32, #tpu.memory_space<vmem>>, vector<1x128xf32>
    %5 = vector.broadcast %4 : vector<1x128xf32> to vector<64x128xf32>
    %6 = arith.addf %3, %5 : vector<64x128xf32>
    %cst_6 = arith.constant 0.000000e+00 : f32
    %7 = vector.broadcast %cst_6 : f32 to vector<64x128xf32>
    %8 = arith.maximumf %6, %7 : vector<64x128xf32>
    %c0_7 = arith.constant 0 : index
    %c0_8 = arith.constant 0 : index
    %c0_9 = arith.constant 0 : index
    %9 = vector.load %arg2[%c0_7, %c0_8, %c0_9] : memref<1x256x27xbf16, #tpu.memory_space<vmem>>, vector<1x256x27xbf16>
    %10 = vector.shape_cast %9 : vector<1x256x27xbf16> to vector<256x27xbf16>
    %c0_10 = arith.constant 0 : index
    %c0_11 = arith.constant 0 : index
    %11 = vector.load %arg4[%c0_10, %c0_11] : memref<27x128xbf16, #tpu.memory_space<vmem>>, vector<27x128xbf16>
    %cst_12 = arith.constant dense<0.000000e+00> : vector<256x128xf32>
    %12 = tpu.matmul %10, %11, %cst_12 {dimension_numbers = #tpu.dot_dimension_numbers<[1], [0], [0], [1], [0, 0, 1, 1], [], []>} : vector<256x27xbf16>, vector<27x128xbf16>, vector<256x128xf32> -> vector<256x128xf32>
    %c1 = arith.constant 1 : index
    %c0_13 = arith.constant 0 : index
    %13 = vector.load %arg8[%c1, %c0_13] : memref<5x128xf32, #tpu.memory_space<vmem>>, vector<1x128xf32>
    %14 = vector.broadcast %13 : vector<1x128xf32> to vector<256x128xf32>
    %15 = arith.addf %12, %14 : vector<256x128xf32>
    %cst_14 = arith.constant 0.000000e+00 : f32
    %16 = vector.broadcast %cst_14 : f32 to vector<256x128xf32>
    %17 = arith.maximumf %15, %16 : vector<256x128xf32>
    %18 = arith.truncf %17 : vector<256x128xf32> to vector<256x128xbf16>
    %cst_15 = arith.constant 0.000000e+00 : bf16
    %19 = vector.broadcast %cst_15 : bf16 to vector<1x18x128xbf16>
    %cst_16 = arith.constant 0.000000e+00 : bf16
    %20 = vector.broadcast %cst_16 : bf16 to vector<16x1x128xbf16>
    %c0_17 = arith.constant 0 : index
    %c0_18 = arith.constant 0 : index
    %c0_19 = arith.constant 0 : index
    %21 = vector.load %arg10[%c0_17, %c0_18, %c0_19] : memref<18x18x128xbf16, #tpu.memory_space<vmem>>, vector<1x18x128xbf16>
    tpu.vector_store %arg10[%c0_17, %c0_18, %c0_19], %19 {strides = array<i32>} : memref<18x18x128xbf16, #tpu.memory_space<vmem>>, vector<1x18x128xbf16>,
    %c17 = arith.constant 17 : index
    %c0_20 = arith.constant 0 : index
    %c0_21 = arith.constant 0 : index
    %22 = vector.load %arg10[%c17, %c0_20, %c0_21] : memref<18x18x128xbf16, #tpu.memory_space<vmem>>, vector<1x18x128xbf16>
    tpu.vector_store %arg10[%c17, %c0_20, %c0_21], %19 {strides = array<i32>} : memref<18x18x128xbf16, #tpu.memory_space<vmem>>, vector<1x18x128xbf16>,
    %23 = vector.shape_cast %18 : vector<256x128xbf16> to vector<16x16x128xbf16>
    %24 = tpu.concatenate %20, %23, %20 in 1 : vector<16x1x128xbf16>, vector<16x16x128xbf16>, vector<16x1x128xbf16> -> vector<16x18x128xbf16>
    %c1_22 = arith.constant 1 : index
    %c0_23 = arith.constant 0 : index
    %c0_24 = arith.constant 0 : index
    %25 = vector.load %arg10[%c1_22, %c0_23, %c0_24] : memref<18x18x128xbf16, #tpu.memory_space<vmem>>, vector<16x18x128xbf16>
    tpu.vector_store %arg10[%c1_22, %c0_23, %c0_24], %24 {strides = array<i32>} : memref<18x18x128xbf16, #tpu.memory_space<vmem>>, vector<16x18x128xbf16>,
    %c0_25 = arith.constant 0 : index
    %c0_26 = arith.constant 0 : index
    %c0_27 = arith.constant 0 : index
    %26 = vector.load %arg10[%c0_25, %c0_26, %c0_27] : memref<18x18x128xbf16, #tpu.memory_space<vmem>>, vector<16x16x128xbf16>
    %c0_28 = arith.constant 0 : index
    %c1_29 = arith.constant 1 : index
    %c0_30 = arith.constant 0 : index
    %27 = vector.load %arg10[%c0_28, %c1_29, %c0_30] : memref<18x18x128xbf16, #tpu.memory_space<vmem>>, vector<16x16x128xbf16>
    %c0_31 = arith.constant 0 : index
    %c2 = arith.constant 2 : index
    %c0_32 = arith.constant 0 : index
    %28 = vector.load %arg10[%c0_31, %c2, %c0_32] : memref<18x18x128xbf16, #tpu.memory_space<vmem>>, vector<16x16x128xbf16>
    %29 = tpu.concatenate %26, %27, %28 in 2 : vector<16x16x128xbf16>, vector<16x16x128xbf16>, vector<16x16x128xbf16> -> vector<16x16x384xbf16>
    %30 = vector.shape_cast %29 : vector<16x16x384xbf16> to vector<256x384xbf16>
    %c0_33 = arith.constant 0 : index
    %c0_34 = arith.constant 0 : index
    %c0_35 = arith.constant 0 : index
    %31 = vector.load %arg5[%c0_33, %c0_34, %c0_35] : memref<3x384x128xbf16, #tpu.memory_space<vmem>>, vector<1x384x128xbf16>
    %32 = vector.shape_cast %31 : vector<1x384x128xbf16> to vector<384x128xbf16>
    %cst_36 = arith.constant dense<0.000000e+00> : vector<256x128xf32>
    %33 = tpu.matmul %30, %32, %cst_36 {dimension_numbers = #tpu.dot_dimension_numbers<[1], [0], [0], [1], [0, 0, 1, 1], [], []>} : vector<256x384xbf16>, vector<384x128xbf16>, vector<256x128xf32> -> vector<256x128xf32>
    %c1_37 = arith.constant 1 : index
    %c0_38 = arith.constant 0 : index
    %c0_39 = arith.constant 0 : index
    %34 = vector.load %arg10[%c1_37, %c0_38, %c0_39] : memref<18x18x128xbf16, #tpu.memory_space<vmem>>, vector<16x16x128xbf16>
    %c1_40 = arith.constant 1 : index
    %c1_41 = arith.constant 1 : index
    %c0_42 = arith.constant 0 : index
    %35 = vector.load %arg10[%c1_40, %c1_41, %c0_42] : memref<18x18x128xbf16, #tpu.memory_space<vmem>>, vector<16x16x128xbf16>
    %c1_43 = arith.constant 1 : index
    %c2_44 = arith.constant 2 : index
    %c0_45 = arith.constant 0 : index
    %36 = vector.load %arg10[%c1_43, %c2_44, %c0_45] : memref<18x18x128xbf16, #tpu.memory_space<vmem>>, vector<16x16x128xbf16>
    %37 = tpu.concatenate %34, %35, %36 in 2 : vector<16x16x128xbf16>, vector<16x16x128xbf16>, vector<16x16x128xbf16> -> vector<16x16x384xbf16>
    %38 = vector.shape_cast %37 : vector<16x16x384xbf16> to vector<256x384xbf16>
    %c1_46 = arith.constant 1 : index
    %c0_47 = arith.constant 0 : index
    %c0_48 = arith.constant 0 : index
    %39 = vector.load %arg5[%c1_46, %c0_47, %c0_48] : memref<3x384x128xbf16, #tpu.memory_space<vmem>>, vector<1x384x128xbf16>
    %40 = vector.shape_cast %39 : vector<1x384x128xbf16> to vector<384x128xbf16>
    %cst_49 = arith.constant dense<0.000000e+00> : vector<256x128xf32>
    %41 = tpu.matmul %38, %40, %cst_49 {dimension_numbers = #tpu.dot_dimension_numbers<[1], [0], [0], [1], [0, 0, 1, 1], [], []>} : vector<256x384xbf16>, vector<384x128xbf16>, vector<256x128xf32> -> vector<256x128xf32>
    %42 = arith.addf %33, %41 : vector<256x128xf32>
    %c2_50 = arith.constant 2 : index
    %c0_51 = arith.constant 0 : index
    %c0_52 = arith.constant 0 : index
    %43 = vector.load %arg10[%c2_50, %c0_51, %c0_52] : memref<18x18x128xbf16, #tpu.memory_space<vmem>>, vector<16x16x128xbf16>
    %c2_53 = arith.constant 2 : index
    %c1_54 = arith.constant 1 : index
    %c0_55 = arith.constant 0 : index
    %44 = vector.load %arg10[%c2_53, %c1_54, %c0_55] : memref<18x18x128xbf16, #tpu.memory_space<vmem>>, vector<16x16x128xbf16>
    %c2_56 = arith.constant 2 : index
    %c2_57 = arith.constant 2 : index
    %c0_58 = arith.constant 0 : index
    %45 = vector.load %arg10[%c2_56, %c2_57, %c0_58] : memref<18x18x128xbf16, #tpu.memory_space<vmem>>, vector<16x16x128xbf16>
    %46 = tpu.concatenate %43, %44, %45 in 2 : vector<16x16x128xbf16>, vector<16x16x128xbf16>, vector<16x16x128xbf16> -> vector<16x16x384xbf16>
    %47 = vector.shape_cast %46 : vector<16x16x384xbf16> to vector<256x384xbf16>
    %c2_59 = arith.constant 2 : index
    %c0_60 = arith.constant 0 : index
    %c0_61 = arith.constant 0 : index
    %48 = vector.load %arg5[%c2_59, %c0_60, %c0_61] : memref<3x384x128xbf16, #tpu.memory_space<vmem>>, vector<1x384x128xbf16>
    %49 = vector.shape_cast %48 : vector<1x384x128xbf16> to vector<384x128xbf16>
    %cst_62 = arith.constant dense<0.000000e+00> : vector<256x128xf32>
    %50 = tpu.matmul %47, %49, %cst_62 {dimension_numbers = #tpu.dot_dimension_numbers<[1], [0], [0], [1], [0, 0, 1, 1], [], []>} : vector<256x384xbf16>, vector<384x128xbf16>, vector<256x128xf32> -> vector<256x128xf32>
    %51 = arith.addf %42, %50 : vector<256x128xf32>
    %c2_63 = arith.constant 2 : index
    %c0_64 = arith.constant 0 : index
    %52 = vector.load %arg8[%c2_63, %c0_64] : memref<5x128xf32, #tpu.memory_space<vmem>>, vector<1x128xf32>
    %53 = vector.broadcast %52 : vector<1x128xf32> to vector<256x128xf32>
    %54 = arith.addf %51, %53 : vector<256x128xf32>
    %cst_65 = arith.constant 0.000000e+00 : f32
    %55 = vector.broadcast %cst_65 : f32 to vector<256x128xf32>
    %56 = arith.maximumf %54, %55 : vector<256x128xf32>
    %57 = arith.truncf %56 : vector<256x128xf32> to vector<256x128xbf16>
    %58 = vector.shape_cast %57 : vector<256x128xbf16> to vector<128x256xbf16>
    %59 = vector.shape_cast %58 : vector<128x256xbf16> to vector<8x2x8x256xbf16>
    %60 = vector.extract_strided_slice %59 {offsets = [0, 0, 0, 0], sizes = [8, 1, 8, 256], strides = [1, 1, 1, 1]} : vector<8x2x8x256xbf16> to vector<8x1x8x256xbf16>
    %61 = vector.shape_cast %60 : vector<8x1x8x256xbf16> to vector<8x8x256xbf16>
    %62 = vector.shape_cast %61 : vector<8x8x256xbf16> to vector<64x256xbf16>
    %c0_66 = arith.constant 0 : index
    %c0_67 = arith.constant 0 : index
    %c0_68 = arith.constant 0 : index
    %63 = vector.load %arg6[%c0_66, %c0_67, %c0_68] : memref<2x256x128xbf16, #tpu.memory_space<vmem>>, vector<1x256x128xbf16>
    %64 = vector.shape_cast %63 : vector<1x256x128xbf16> to vector<256x128xbf16>
    %cst_69 = arith.constant dense<0.000000e+00> : vector<64x128xf32>
    %65 = tpu.matmul %62, %64, %cst_69 {dimension_numbers = #tpu.dot_dimension_numbers<[1], [0], [0], [1], [0, 0, 1, 1], [], []>} : vector<64x256xbf16>, vector<256x128xbf16>, vector<64x128xf32> -> vector<64x128xf32>
    %66 = vector.extract_strided_slice %59 {offsets = [0, 1, 0, 0], sizes = [8, 1, 8, 256], strides = [1, 1, 1, 1]} : vector<8x2x8x256xbf16> to vector<8x1x8x256xbf16>
    %67 = vector.shape_cast %66 : vector<8x1x8x256xbf16> to vector<8x8x256xbf16>
    %68 = vector.shape_cast %67 : vector<8x8x256xbf16> to vector<64x256xbf16>
    %c1_70 = arith.constant 1 : index
    %c0_71 = arith.constant 0 : index
    %c0_72 = arith.constant 0 : index
    %69 = vector.load %arg6[%c1_70, %c0_71, %c0_72] : memref<2x256x128xbf16, #tpu.memory_space<vmem>>, vector<1x256x128xbf16>
    %70 = vector.shape_cast %69 : vector<1x256x128xbf16> to vector<256x128xbf16>
    %cst_73 = arith.constant dense<0.000000e+00> : vector<64x128xf32>
    %71 = tpu.matmul %68, %70, %cst_73 {dimension_numbers = #tpu.dot_dimension_numbers<[1], [0], [0], [1], [0, 0, 1, 1], [], []>} : vector<64x256xbf16>, vector<256x128xbf16>, vector<64x128xf32> -> vector<64x128xf32>
    %72 = arith.addf %65, %71 : vector<64x128xf32>
    %c3 = arith.constant 3 : index
    %c0_74 = arith.constant 0 : index
    %73 = vector.load %arg8[%c3, %c0_74] : memref<5x128xf32, #tpu.memory_space<vmem>>, vector<1x128xf32>
    %74 = vector.broadcast %73 : vector<1x128xf32> to vector<64x128xf32>
    %75 = arith.addf %72, %74 : vector<64x128xf32>
    %cst_75 = arith.constant 0.000000e+00 : f32
    %76 = vector.broadcast %cst_75 : f32 to vector<64x128xf32>
    %77 = arith.maximumf %75, %76 : vector<64x128xf32>
    %78 = arith.addf %8, %77 : vector<64x128xf32>
    %cst_76 = arith.constant 5.000000e-01 : f32
    %79 = vector.broadcast %cst_76 : f32 to vector<64x128xf32>
    %80 = arith.mulf %78, %79 : vector<64x128xf32>
    %81 = arith.truncf %80 : vector<64x128xf32> to vector<64x128xbf16>
    %82 = vector.shape_cast %81 : vector<64x128xbf16> to vector<32x256xbf16>
    %83 = vector.shape_cast %82 : vector<32x256xbf16> to vector<4x2x4x256xbf16>
    %84 = vector.extract_strided_slice %83 {offsets = [0, 0, 0, 0], sizes = [4, 1, 4, 256], strides = [1, 1, 1, 1]} : vector<4x2x4x256xbf16> to vector<4x1x4x256xbf16>
    %85 = vector.shape_cast %84 : vector<4x1x4x256xbf16> to vector<4x4x256xbf16>
    %86 = vector.shape_cast %85 : vector<4x4x256xbf16> to vector<16x256xbf16>
    %c0_77 = arith.constant 0 : index
    %c0_78 = arith.constant 0 : index
    %c0_79 = arith.constant 0 : index
    %87 = vector.load %arg7[%c0_77, %c0_78, %c0_79] : memref<2x256x128xbf16, #tpu.memory_space<vmem>>, vector<1x256x128xbf16>
    %88 = vector.shape_cast %87 : vector<1x256x128xbf16> to vector<256x128xbf16>
    %cst_80 = arith.constant dense<0.000000e+00> : vector<16x128xf32>
    %89 = tpu.matmul %86, %88, %cst_80 {dimension_numbers = #tpu.dot_dimension_numbers<[1], [0], [0], [1], [0, 0, 1, 1], [], []>} : vector<16x256xbf16>, vector<256x128xbf16>, vector<16x128xf32> -> vector<16x128xf32>
    %90 = vector.extract_strided_slice %83 {offsets = [0, 1, 0, 0], sizes = [4, 1, 4, 256], strides = [1, 1, 1, 1]} : vector<4x2x4x256xbf16> to vector<4x1x4x256xbf16>
    %91 = vector.shape_cast %90 : vector<4x1x4x256xbf16> to vector<4x4x256xbf16>
    %92 = vector.shape_cast %91 : vector<4x4x256xbf16> to vector<16x256xbf16>
    %c1_81 = arith.constant 1 : index
    %c0_82 = arith.constant 0 : index
    %c0_83 = arith.constant 0 : index
    %93 = vector.load %arg7[%c1_81, %c0_82, %c0_83] : memref<2x256x128xbf16, #tpu.memory_space<vmem>>, vector<1x256x128xbf16>
    %94 = vector.shape_cast %93 : vector<1x256x128xbf16> to vector<256x128xbf16>
    %cst_84 = arith.constant dense<0.000000e+00> : vector<16x128xf32>
    %95 = tpu.matmul %92, %94, %cst_84 {dimension_numbers = #tpu.dot_dimension_numbers<[1], [0], [0], [1], [0, 0, 1, 1], [], []>} : vector<16x256xbf16>, vector<256x128xbf16>, vector<16x128xf32> -> vector<16x128xf32>
    %96 = arith.addf %89, %95 : vector<16x128xf32>
    %c4 = arith.constant 4 : index
    %c0_85 = arith.constant 0 : index
    %97 = vector.load %arg8[%c4, %c0_85] : memref<5x128xf32, #tpu.memory_space<vmem>>, vector<1x128xf32>
    %98 = vector.broadcast %97 : vector<1x128xf32> to vector<16x128xf32>
    %99 = arith.addf %96, %98 : vector<16x128xf32>
    %cst_86 = arith.constant 0.000000e+00 : f32
    %100 = vector.broadcast %cst_86 : f32 to vector<16x128xf32>
    %101 = arith.maximumf %99, %100 : vector<16x128xf32>
    %c0_87 = arith.constant 0 : index
    %c0_88 = arith.constant 0 : index
    %c0_89 = arith.constant 0 : index
    %102 = vector.load %arg9[%c0_87, %c0_88, %c0_89] : memref<1x16x128xf32, #tpu.memory_space<vmem>>, vector<1x16x128xf32>
    %103 = vector.shape_cast %102 : vector<1x16x128xf32> to vector<16x128xf32>
    %104 = vector.shape_cast %101 : vector<16x128xf32> to vector<1x16x128xf32>
    tpu.vector_store %arg9[%c0_87, %c0_88, %c0_89], %104 {strides = array<i32>} : memref<1x16x128xf32, #tpu.memory_space<vmem>>, vector<1x16x128xf32>,
    return
  }
  func.func @transform_0(%arg0: i32) -> (i32, i32, i32) {
    %c0_i32 = arith.constant 0 : i32
    %c0_i32_0 = arith.constant 0 : i32
    %c0_i32_1 = arith.constant 0 : i32
    return %arg0, %c0_i32, %c0_i32_0 : i32, i32, i32
  }
  func.func @transform_1(%arg0: i32) -> (i32, i32, i32) {
    %c0_i32 = arith.constant 0 : i32
    %c0_i32_0 = arith.constant 0 : i32
    %c0_i32_1 = arith.constant 0 : i32
    return %arg0, %c0_i32, %c0_i32_0 : i32, i32, i32
  }
  func.func @transform_2(%arg0: i32) -> (i32, i32) {
    %c0_i32 = arith.constant 0 : i32
    %c0_i32_0 = arith.constant 0 : i32
    %c0_i32_1 = arith.constant 0 : i32
    return %c0_i32, %c0_i32_0 : i32, i32
  }
  func.func @transform_3(%arg0: i32) -> (i32, i32) {
    %c0_i32 = arith.constant 0 : i32
    %c0_i32_0 = arith.constant 0 : i32
    %c0_i32_1 = arith.constant 0 : i32
    return %c0_i32, %c0_i32_0 : i32, i32
  }
  func.func @transform_4(%arg0: i32) -> (i32, i32, i32) {
    %c0_i32 = arith.constant 0 : i32
    %c0_i32_0 = arith.constant 0 : i32
    %c0_i32_1 = arith.constant 0 : i32
    %c0_i32_2 = arith.constant 0 : i32
    return %c0_i32, %c0_i32_0, %c0_i32_1 : i32, i32, i32
  }
  func.func @transform_5(%arg0: i32) -> (i32, i32, i32) {
    %c0_i32 = arith.constant 0 : i32
    %c0_i32_0 = arith.constant 0 : i32
    %c0_i32_1 = arith.constant 0 : i32
    %c0_i32_2 = arith.constant 0 : i32
    return %c0_i32, %c0_i32_0, %c0_i32_1 : i32, i32, i32
  }
  func.func @transform_6(%arg0: i32) -> (i32, i32, i32) {
    %c0_i32 = arith.constant 0 : i32
    %c0_i32_0 = arith.constant 0 : i32
    %c0_i32_1 = arith.constant 0 : i32
    %c0_i32_2 = arith.constant 0 : i32
    return %c0_i32, %c0_i32_0, %c0_i32_1 : i32, i32, i32
  }
  func.func @transform_7(%arg0: i32) -> (i32, i32) {
    %c0_i32 = arith.constant 0 : i32
    %c0_i32_0 = arith.constant 0 : i32
    %c0_i32_1 = arith.constant 0 : i32
    return %c0_i32, %c0_i32_0 : i32, i32
  }
  func.func @transform_8(%arg0: i32) -> (i32, i32, i32) {
    %c0_i32 = arith.constant 0 : i32
    %c0_i32_0 = arith.constant 0 : i32
    %c0_i32_1 = arith.constant 0 : i32
    return %arg0, %c0_i32, %c0_i32_0 : i32, i32, i32
  }
}

</mosaic_0001>

<llo_original>
// kernel: receptive_field_forward.1
$region0: #{receptive_field_forward.1}
  #allocation0 [shape = 'u32[]', space=smem, size = 0x4, offset = 0x4, fixed_abs, tag = 'smem constant byte address 0x4 - core index']
  #allocation1 [shape = 'u32[144,128]{1,0:T(1,128)}', space=vmem, size = 0x12000, scoped, tag = 'internal scratch']
  #allocation2 [shape = 'bf16[18,18,128]{2,1,0:T(8,128)(2,1)}', space=vmem, size = 0x1b000, scoped, tag = 'scratch operand']
  %s0 = inlined_call_operand.vmem [shape: bf16[2,64,363], index: 0, kind: input, shape index: {}]
  %s1 = inlined_call_operand.vmem [shape: bf16[2,256,27], index: 1, kind: input, shape index: {}]
  %s2 = inlined_call_operand.vmem [shape: bf16[363,128], index: 2, kind: input, shape index: {}]
  %s3 = inlined_call_operand.vmem [shape: bf16[27,128], index: 3, kind: input, shape index: {}]
  %s4 = inlined_call_operand.vmem [shape: bf16[3,384,128], index: 4, kind: input, shape index: {}]
  %s5 = inlined_call_operand.vmem [shape: bf16[2,256,128], index: 5, kind: input, shape index: {}]
  %s6 = inlined_call_operand.vmem [shape: bf16[2,256,128], index: 6, kind: input, shape index: {}]
  %s7 = inlined_call_operand.vmem [shape: f32[5,128], index: 7, kind: input, shape index: {}]
  %s8 = inlined_call_operand.hbm [shape: f32[2,16,128], index: 8, kind: output, shape index: {}]
  %s9 = sld [smem:[#allocation0]]
  $region65: #{receptive_field_forward.1} parent=0
    _
  %s11 = ssub.s32 1, %s9
  %s12 = scalar_select 0, %s11, %s9
  $region1: #{receptive_field_forward.1} parent=0
    #allocation3 [shape = 'u8[16384]{0}', space=vmem, size = 0x4000, scoped, tag = 'output window, operand 0']
    #allocation4 [shape = 's32[2]{0}', space=sflag, size = 0x8, scoped, tag = 'scoped memory for receptive_field_forward.1']
    %13 = vsyncpa [#allocation4], 0
    %s14 = scalar_lea.sflag [#allocation4], 1
    %15 = vsyncpa %s14, 0
    loop: start=0, step=1, limit=4
    $region2: #{receptive_field_forward.1} parent=1 // loop_pre_header
      _
    $region3: #{receptive_field_forward.1} parent=1 // loop_header
      %s17 = sphi 0, %s21
      %p18 = scmp.ge.s32.totalorder %s17, 4
      %s27 = sphi 0, %s29
      %s30 = sphi 0, %s27
      %s31 = sphi 0, %s30
      %s47 = sphi 0, %s31
      %s53 = sphi 0, %s55
      %s56 = sphi 0, %s53
      %s57 = sphi 0, %s56
      %s73 = sphi 0, %s57
      %s77 = sphi 0, %s77
      %s79 = sphi 0, %s77
      %s80 = sphi 0, %s79
      %s94 = sphi 0, %s80
      %s98 = sphi 0, %s98
      %s100 = sphi 0, %s98
      %s101 = sphi 0, %s100
      %s115 = sphi 0, %s101
      %s119 = sphi 0, %s119
      %s121 = sphi 0, %s119
      %s122 = sphi 0, %s121
      %s136 = sphi 0, %s122
      %s140 = sphi 0, %s140
      %s142 = sphi 0, %s140
      %s143 = sphi 0, %s142
      %s157 = sphi 0, %s143
      %s161 = sphi 0, %s161
      %s163 = sphi 0, %s161
      %s164 = sphi 0, %s163
      %s178 = sphi 0, %s164
      %s182 = sphi 0, %s182
      %s184 = sphi 0, %s182
      %s185 = sphi 0, %s184
      %s199 = sphi 0, %s185
      %s205 = sphi 0, %s207
      %s208 = sphi 0, %s205
      %s209 = sphi 0, %s208
      %s225 = sphi 0, %s209
    $region4: #{receptive_field_forward.1} parent=1 // loop_header_branch
      %20 = sbr.rel (%p18) target = $region8
    $region5: #{receptive_field_forward.1} parent=1 // loop_body
      %s22 = ssub.s32 %s17, 1
      %s23 = ssub.s32 %s17, 2
      %s24 = sadd.s32 %s17, 1
      %s25 = ssub.s32 %s17, %s24
      %p26 = scmp.eq.s32.totalorder %s25, 0
      %s28 = sadd.s32 %s27, 1
      %s29 = scalar_select %p26, %s27, %s28
      %p32 = pneg %p26
      %p33 = scmp.eq.s32.totalorder %s17, 1
      %p34 = por %p32, %p33
      %p35 = scmp.ne.s32.totalorder %s27, %s30
      %p36 = scmp.eq.s32.totalorder %s17, 0
      %p37 = por %p35, %p36
      %p38 = scmp.ne.s32.totalorder %s27, %s30
      %p39 = scmp.eq.s32.totalorder %s22, 1
      %p40 = por %p38, %p39
      %p41 = scmp.ne.s32.totalorder %s30, %s31
      %p42 = scmp.eq.s32.totalorder %s22, 0
      %p43 = por %p41, %p42
      %p44 = scmp.ne.s32.totalorder %s30, %s31
      %p45 = scmp.eq.s32.totalorder %s23, 1
      %p46 = por %p44, %p45
      %p48 = scmp.ne.s32.totalorder %s31, %s47
      %p49 = scmp.eq.s32.totalorder %s23, 0
      %p50 = por %p48, %p49
      %s51 = ssub.s32 %s17, %s24
      %p52 = scmp.eq.s32.totalorder %s51, 0
      %s54 = sadd.s32 %s53, 1
      %s55 = scalar_select %p52, %s53, %s54
      %p58 = pneg %p52
      %p59 = scmp.eq.s32.totalorder %s17, 1
      %p60 = por %p58, %p59
      %p61 = scmp.ne.s32.totalorder %s53, %s56
      %p62 = scmp.eq.s32.totalorder %s17, 0
      %p63 = por %p61, %p62
      %p64 = scmp.ne.s32.totalorder %s53, %s56
      %p65 = scmp.eq.s32.totalorder %s22, 1
      %p66 = por %p64, %p65
      %p67 = scmp.ne.s32.totalorder %s56, %s57
      %p68 = scmp.eq.s32.totalorder %s22, 0
      %p69 = por %p67, %p68
      %p70 = scmp.ne.s32.totalorder %s56, %s57
      %p71 = scmp.eq.s32.totalorder %s23, 1
      %p72 = por %p70, %p71
      %p74 = scmp.ne.s32.totalorder %s57, %s73
      %p75 = scmp.eq.s32.totalorder %s23, 0
      %p76 = por %p74, %p75
      %s78 = sadd.s32 %s77, 1
      %p81 = scmp.eq.s32.totalorder %s17, 1
      %p82 = scmp.ne.s32.totalorder %s77, %s79
      %p83 = scmp.eq.s32.totalorder %s17, 0
      %p84 = por %p82, %p83
      %p85 = scmp.ne.s32.totalorder %s77, %s79
      %p86 = scmp.eq.s32.totalorder %s22, 1
      %p87 = por %p85, %p86
      %p88 = scmp.ne.s32.totalorder %s79, %s80
      %p89 = scmp.eq.s32.totalorder %s22, 0
      %p90 = por %p88, %p89
      %p91 = scmp.ne.s32.totalorder %s79, %s80
      %p92 = scmp.eq.s32.totalorder %s23, 1
      %p93 = por %p91, %p92
      %p95 = scmp.ne.s32.totalorder %s80, %s94
      %p96 = scmp.eq.s32.totalorder %s23, 0
      %p97 = por %p95, %p96
      %s99 = sadd.s32 %s98, 1
      %p102 = scmp.eq.s32.totalorder %s17, 1
      %p103 = scmp.ne.s32.totalorder %s98, %s100
      %p104 = scmp.eq.s32.totalorder %s17, 0
      %p105 = por %p103, %p104
      %p106 = scmp.ne.s32.totalorder %s98, %s100
      %p107 = scmp.eq.s32.totalorder %s22, 1
      %p108 = por %p106, %p107
      %p109 = scmp.ne.s32.totalorder %s100, %s101
      %p110 = scmp.eq.s32.totalorder %s22, 0
      %p111 = por %p109, %p110
      %p112 = scmp.ne.s32.totalorder %s100, %s101
      %p113 = scmp.eq.s32.totalorder %s23, 1
      %p114 = por %p112, %p113
      %p116 = scmp.ne.s32.totalorder %s101, %s115
      %p117 = scmp.eq.s32.totalorder %s23, 0
      %p118 = por %p116, %p117
      %s120 = sadd.s32 %s119, 1
      %p123 = scmp.eq.s32.totalorder %s17, 1
      %p124 = scmp.ne.s32.totalorder %s119, %s121
      %p125 = scmp.eq.s32.totalorder %s17, 0
      %p126 = por %p124, %p125
      %p127 = scmp.ne.s32.totalorder %s119, %s121
      %p128 = scmp.eq.s32.totalorder %s22, 1
      %p129 = por %p127, %p128
      %p130 = scmp.ne.s32.totalorder %s121, %s122
      %p131 = scmp.eq.s32.totalorder %s22, 0
      %p132 = por %p130, %p131
      %p133 = scmp.ne.s32.totalorder %s121, %s122
      %p134 = scmp.eq.s32.totalorder %s23, 1
      %p135 = por %p133, %p134
      %p137 = scmp.ne.s32.totalorder %s122, %s136
      %p138 = scmp.eq.s32.totalorder %s23, 0
      %p139 = por %p137, %p138
      %s141 = sadd.s32 %s140, 1
      %p144 = scmp.eq.s32.totalorder %s17, 1
      %p145 = scmp.ne.s32.totalorder %s140, %s142
      %p146 = scmp.eq.s32.totalorder %s17, 0
      %p147 = por %p145, %p146
      %p148 = scmp.ne.s32.totalorder %s140, %s142
      %p149 = scmp.eq.s32.totalorder %s22, 1
      %p150 = por %p148, %p149
      %p151 = scmp.ne.s32.totalorder %s142, %s143
      %p152 = scmp.eq.s32.totalorder %s22, 0
      %p153 = por %p151, %p152
      %p154 = scmp.ne.s32.totalorder %s142, %s143
      %p155 = scmp.eq.s32.totalorder %s23, 1
      %p156 = por %p154, %p155
      %p158 = scmp.ne.s32.totalorder %s143, %s157
      %p159 = scmp.eq.s32.totalorder %s23, 0
      %p160 = por %p158, %p159
      %s162 = sadd.s32 %s161, 1
      %p165 = scmp.eq.s32.totalorder %s17, 1
      %p166 = scmp.ne.s32.totalorder %s161, %s163
      %p167 = scmp.eq.s32.totalorder %s17, 0
      %p168 = por %p166, %p167
      %p169 = scmp.ne.s32.totalorder %s161, %s163
      %p170 = scmp.eq.s32.totalorder %s22, 1
      %p171 = por %p169, %p170
      %p172 = scmp.ne.s32.totalorder %s163, %s164
      %p173 = scmp.eq.s32.totalorder %s22, 0
      %p174 = por %p172, %p173
      %p175 = scmp.ne.s32.totalorder %s163, %s164
      %p176 = scmp.eq.s32.totalorder %s23, 1
      %p177 = por %p175, %p176
      %p179 = scmp.ne.s32.totalorder %s164, %s178
      %p180 = scmp.eq.s32.totalorder %s23, 0
      %p181 = por %p179, %p180
      %s183 = sadd.s32 %s182, 1
      %p186 = scmp.eq.s32.totalorder %s17, 1
      %p187 = scmp.ne.s32.totalorder %s182, %s184
      %p188 = scmp.eq.s32.totalorder %s17, 0
      %p189 = por %p187, %p188
      %p190 = scmp.ne.s32.totalorder %s182, %s184
      %p191 = scmp.eq.s32.totalorder %s22, 1
      %p192 = por %p190, %p191
      %p193 = scmp.ne.s32.totalorder %s184, %s185
      %p194 = scmp.eq.s32.totalorder %s22, 0
      %p195 = por %p193, %p194
      %p196 = scmp.ne.s32.totalorder %s184, %s185
      %p197 = scmp.eq.s32.totalorder %s23, 1
      %p198 = por %p196, %p197
      %p200 = scmp.ne.s32.totalorder %s185, %s199
      %p201 = scmp.eq.s32.totalorder %s23, 0
      %p202 = por %p200, %p201
      %s203 = ssub.s32 %s17, %s24
      %p204 = scmp.eq.s32.totalorder %s203, 0
      %s206 = sadd.s32 %s205, 1
      %s207 = scalar_select %p204, %s205, %s206
      %p210 = pneg %p204
      %p211 = scmp.eq.s32.totalorder %s17, 1
      %p212 = por %p210, %p211
      %p213 = scmp.ne.s32.totalorder %s205, %s208
      %p214 = scmp.eq.s32.totalorder %s17, 0
      %p215 = por %p213, %p214
      %p216 = scmp.ne.s32.totalorder %s205, %s208
      %p217 = scmp.eq.s32.totalorder %s22, 1
      %p218 = por %p216, %p217
      %p219 = scmp.ne.s32.totalorder %s208, %s209
      %p220 = scmp.eq.s32.totalorder %s22, 0
      %p221 = por %p219, %p220
      %p222 = scmp.ne.s32.totalorder %s208, %s209
      %p223 = scmp.eq.s32.totalorder %s23, 1
      %p224 = por %p222, %p223
      %p226 = scmp.ne.s32.totalorder %s209, %s225
      %p227 = scmp.eq.s32.totalorder %s23, 0
      %p228 = por %p226, %p227
      %p229 = scmp.le.s32.totalorder 1, %s17
      %p230 = scmp.lt.s32.totalorder %s17, 3
      %p231 = pnand %p229, %p230
      %p232 = pneg %p231
      // Predicated region
      $region9: #{receptive_field_forward.1} parent=5 // pred_check
        _
      $region10: #{receptive_field_forward.1} parent=5 // pred_check_branch
        %234 = sbr.rel (%p231) target = $region12
      $region11: #{receptive_field_forward.1} parent=5 // pred_region
        %s235 = ssub.s32 %s17, 1
        // Predicated region
        $region13: #{receptive_field_forward.1} parent=11 // pred_check
          %p236 = pneg %p90
        $region14: #{receptive_field_forward.1} parent=11 // pred_check_branch
          %238 = sbr.rel (%p236) target = $region16
        $region15: #{receptive_field_forward.1} parent=11 // pred_region
          _
        $region16: #{receptive_field_forward.1} parent=11 // pred_fallthru
          _
        // Predicated region
        $region17: #{receptive_field_forward.1} parent=11 // pred_check
          %p239 = pneg %p111
        $region18: #{receptive_field_forward.1} parent=11 // pred_check_branch
          %241 = sbr.rel (%p239) target = $region20
        $region19: #{receptive_field_forward.1} parent=11 // pred_region
          _
        $region20: #{receptive_field_forward.1} parent=11 // pred_fallthru
          _
        // Predicated region
        $region21: #{receptive_field_forward.1} parent=11 // pred_check
          %p242 = pneg %p132
        $region22: #{receptive_field_forward.1} parent=11 // pred_check_branch
          %244 = sbr.rel (%p242) target = $region24
        $region23: #{receptive_field_forward.1} parent=11 // pred_region
          _
        $region24: #{receptive_field_forward.1} parent=11 // pred_fallthru
          _
        // Predicated region
        $region25: #{receptive_field_forward.1} parent=11 // pred_check
          %p245 = pneg %p153
        $region26: #{receptive_field_forward.1} parent=11 // pred_check_branch
          %247 = sbr.rel (%p245) target = $region28
        $region27: #{receptive_field_forward.1} parent=11 // pred_region
          _
        $region28: #{receptive_field_forward.1} parent=11 // pred_fallthru
          _
        // Predicated region
        $region29: #{receptive_field_forward.1} parent=11 // pred_check
          %p248 = pneg %p174
        $region30: #{receptive_field_forward.1} parent=11 // pred_check_branch
          %250 = sbr.rel (%p248) target = $region32
        $region31: #{receptive_field_forward.1} parent=11 // pred_region
          _
        $region32: #{receptive_field_forward.1} parent=11 // pred_fallthru
          _
        // Predicated region
        $region33: #{receptive_field_forward.1} parent=11 // pred_check
          %p251 = pneg %p195
        $region34: #{receptive_field_forward.1} parent=11 // pred_check_branch
          %253 = sbr.rel (%p251) target = $region36
        $region35: #{receptive_field_forward.1} parent=11 // pred_region
          _
        $region36: #{receptive_field_forward.1} parent=11 // pred_fallthru
          _
      $region12: #{receptive_field_forward.1} parent=5 // pred_fallthru
        _
      %p254 = scmp.lt.s32.totalorder %s17, 2
      // Predicated region
      $region37: #{receptive_field_forward.1} parent=5 // pred_check
        %p255 = pneg %p254
      $region38: #{receptive_field_forward.1} parent=5 // pred_check_branch
        %257 = sbr.rel (%p255) target = $region40
      $region39: #{receptive_field_forward.1} parent=5 // pred_region
        // Predicated region
        $region41: #{receptive_field_forward.1} parent=39 // pred_check
          %p258 = pneg %p37
        $region42: #{receptive_field_forward.1} parent=39 // pred_check_branch
          %260 = sbr.rel (%p258) target = $region44
        $region43: #{receptive_field_forward.1} parent=39 // pred_region
          %p261 = scmp.lt.s32.totalorder %s17, 1
          %s262 = scalar_select %p261, %s17, 1
          %s263 = smul.addr %s262, 24
          %s264 = smul.addr %s263, 4
          %s265 = scalar_lea.vmem %s0, %s264
        $region44: #{receptive_field_forward.1} parent=39 // pred_fallthru
          _
        // Predicated region
        $region45: #{receptive_field_forward.1} parent=39 // pred_check
          %p266 = pneg %p63
        $region46: #{receptive_field_forward.1} parent=39 // pred_check_branch
          %268 = sbr.rel (%p266) target = $region48
        $region47: #{receptive_field_forward.1} parent=39 // pred_region
          %p269 = scmp.lt.s32.totalorder %s17, 1
          %s270 = scalar_select %p269, %s17, 1
          %s271 = smul.addr %s270, 32
          %s272 = smul.addr %s271, 4
          %s273 = scalar_lea.vmem %s1, %s272
        $region48: #{receptive_field_forward.1} parent=39 // pred_fallthru
          _
      $region40: #{receptive_field_forward.1} parent=5 // pred_fallthru
        _
      %p274 = scmp.le.s32.totalorder 1, %s17
      %p275 = scmp.lt.s32.totalorder %s17, 3
      %p276 = pnand %p274, %p275
      %p277 = pneg %p276
      // Predicated region
      $region49: #{receptive_field_forward.1} parent=5 // pred_check
        _
      $region50: #{receptive_field_forward.1} parent=5 // pred_check_branch
        %279 = sbr.rel (%p276) target = $region52
      $region51: #{receptive_field_forward.1} parent=5 // pred_region
        %s280 = ssub.s32 %s17, 1
        %p281 = scmp.lt.s32.totalorder %s22, 1
        %s282 = scalar_select %p281, %s22, 1
        %s283 = smul.addr %s282, 24
        %s284 = smul.addr %s283, 4
        %s285 = scalar_lea.vmem %s0, %s284
        %p286 = pneg %p43
        %p287 = pneg %p40
        %p288 = scmp.lt.s32.totalorder %s22, 1
        %s289 = scalar_select %p288, %s22, 1
        %s290 = smul.addr %s289, 32
        %s291 = smul.addr %s290, 4
        %s292 = scalar_lea.vmem %s1, %s291
        %p293 = pneg %p69
        %p294 = pneg %p66
        %p295 = pneg %p90
        %p296 = pneg %p87
        %p297 = pneg %p111
        %p298 = pneg %p108
        %p299 = pneg %p132
        %p300 = pneg %p129
        %p301 = pneg %p153
        %p302 = pneg %p150
        %p303 = pneg %p174
        %p304 = pneg %p171
        %p305 = pneg %p195
        %p306 = pneg %p192
        %p307 = pneg %p221
        %p308 = pneg %p218
        %s309 = sand.u32 %s208, 1
        %s310 = scalar_lea.sflag [#allocation4], %s309
        %s311 = sand.u32 %s208, 1
        %s312 = smul.addr %s311, 16
        %s313 = scalar_lea.vmem [#allocation3], %s312
        %p314 = scmp.lt.s32.totalorder %s22, 1
        %s315 = scalar_select %p314, %s22, 1
        %s316 = smul.addr %s315, 24
        %s317 = smul.addr %s316, 4
        %s318 = scalar_lea.vmem %s0, %s317
        %p319 = scmp.lt.s32.totalorder %s22, 1
        %s320 = scalar_select %p319, %s22, 1
        %s321 = smul.addr %s320, 32
        %s322 = smul.addr %s321, 4
        %s323 = scalar_lea.vmem %s1, %s322
        %v325 = vld [vmem:[%s318] sm:$0xff]
        %v326 = vld [vmem:[%s318 + $0x8] sm:$0xf]
        %v327 = vld [vmem:[%s318 + $0xc] sm:$0xff]
        %v328 = vld [vmem:[%s318 + $0x14] sm:$0xf]
        %v329 = vld [vmem:[%s318 + $0x18] sm:$0xff]
        %v330 = vld [vmem:[%s318 + $0x20] sm:$0xf]
        %v331 = vld [vmem:[%s318 + $0x24] sm:$0xff]
        %v332 = vld [vmem:[%s318 + $0x2c] sm:$0xf]
        %v333 = vld [vmem:[%s318 + $0x30] sm:$0xff]
        %v334 = vld [vmem:[%s318 + $0x38] sm:$0xf]
        %v335 = vld [vmem:[%s318 + $0x3c] sm:$0xff]
        %v336 = vld [vmem:[%s318 + $0x44] sm:$0xf]
        %v337 = vld [vmem:[%s318 + $0x48] sm:$0xff]
        %v338 = vld [vmem:[%s318 + $0x50] sm:$0xf]
        %v339 = vld [vmem:[%s318 + $0x54] sm:$0xff]
        %v340 = vld [vmem:[%s318 + $0x5c] sm:$0xf]
        %v341 = vld [vmem:[%s2] sm:$0xf]
        %v342 = vld [vmem:[%s2 + $0x4] sm:$0xf]
        %v343 = vld [vmem:[%s2 + $0x8] sm:$0xf]
        %v344 = vld [vmem:[%s2 + $0xc] sm:$0xf]
        %v345 = vld [vmem:[%s2 + $0x10] sm:$0xf]
        %v346 = vld [vmem:[%s2 + $0x14] sm:$0xf]
        %v347 = vld [vmem:[%s2 + $0x18] sm:$0xf]
        %v348 = vld [vmem:[%s2 + $0x1c] sm:$0xf]
        %v349 = vld [vmem:[%s2 + $0x20] sm:$0xf]
        %v350 = vld [vmem:[%s2 + $0x24] sm:$0xf]
        %v351 = vld [vmem:[%s2 + $0x28] sm:$0xf]
        %v352 = vld [vmem:[%s2 + $0x2c] sm:$0xf]
        %v353 = vld [vmem:[%s2 + $0x30] sm:$0xf]
        %v354 = vld [vmem:[%s2 + $0x34] sm:$0xf]
        %v355 = vld [vmem:[%s2 + $0x38] sm:$0xf]
        %v356 = vld [vmem:[%s2 + $0x3c] sm:$0xf]
        %v357 = vld [vmem:[%s2 + $0x40] sm:$0xf]
        %v358 = vld [vmem:[%s2 + $0x44] sm:$0xf]
        %v359 = vld [vmem:[%s2 + $0x48] sm:$0xf]
        %v360 = vld [vmem:[%s2 + $0x4c] sm:$0xf]
        %v361 = vld [vmem:[%s2 + $0x50] sm:$0xf]
        %v362 = vld [vmem:[%s2 + $0x54] sm:$0xf]
        %v363 = vld [vmem:[%s2 + $0x58] sm:$0xf]
        %v364 = vld [vmem:[%s2 + $0x5c] sm:$0xf]
        %v365 = vld [vmem:[%s2 + $0x60] sm:$0xf]
        %v366 = vld [vmem:[%s2 + $0x64] sm:$0xf]
        %v367 = vld [vmem:[%s2 + $0x68] sm:$0xf]
        %v368 = vld [vmem:[%s2 + $0x6c] sm:$0xf]
        %v369 = vld [vmem:[%s2 + $0x70] sm:$0xf]
        %v370 = vld [vmem:[%s2 + $0x74] sm:$0xf]
        %v371 = vld [vmem:[%s2 + $0x78] sm:$0xf]
        %v372 = vld [vmem:[%s2 + $0x7c] sm:$0xf]
        %v373 = vld [vmem:[%s2 + $0x80] sm:$0xf]
        %v374 = vld [vmem:[%s2 + $0x84] sm:$0xf]
        %v375 = vld [vmem:[%s2 + $0x88] sm:$0xf]
        %v376 = vld [vmem:[%s2 + $0x8c] sm:$0xf]
        %v377 = vld [vmem:[%s2 + $0x90] sm:$0xf]
        %v378 = vld [vmem:[%s2 + $0x94] sm:$0xf]
        %v379 = vld [vmem:[%s2 + $0x98] sm:$0xf]
        %v380 = vld [vmem:[%s2 + $0x9c] sm:$0xf]
        %v381 = vld [vmem:[%s2 + $0xa0] sm:$0xf]
        %v382 = vld [vmem:[%s2 + $0xa4] sm:$0xf]
        %v383 = vld [vmem:[%s2 + $0xa8] sm:$0xf]
        %v384 = vld [vmem:[%s2 + $0xac] sm:$0xf]
        %v385 = vld [vmem:[%s2 + $0xb0] sm:$0xf]
        %v386 = vld [vmem:[%s2 + $0xb4] sm:$0x3]
        %v387 = vld [vmem:[%s7] sm:$0x1]
        %v388 = vlaneseq
        %v389 = vshrl.u32 %v388, 7
        %v390 = vsub.s32 0, %v389
        %v391 = vrot.slane %v387, %v390
        %v408 = vunpack.c.l.b16 %v325
        %v409 = vunpack.c.h.b16 %v325
        %v410 = vunpack.c.l.b16 %v326
        %v411 = vunpack.c.l.b16 %v327
        %v412 = vunpack.c.h.b16 %v327
        %v413 = vunpack.c.l.b16 %v328
        %v414 = vunpack.c.l.b16 %v329
        %v415 = vunpack.c.h.b16 %v329
        %v416 = vunpack.c.l.b16 %v330
        %v417 = vunpack.c.l.b16 %v331
        %v418 = vunpack.c.h.b16 %v331
        %v419 = vunpack.c.l.b16 %v332
        %v420 = vunpack.c.l.b16 %v333
        %v421 = vunpack.c.h.b16 %v333
        %v422 = vunpack.c.l.b16 %v334
        %v423 = vunpack.c.l.b16 %v335
        %v424 = vunpack.c.h.b16 %v335
        %v425 = vunpack.c.l.b16 %v336
        %v426 = vunpack.c.l.b16 %v337
        %v427 = vunpack.c.h.b16 %v337
        %v428 = vunpack.c.l.b16 %v338
        %v429 = vunpack.c.l.b16 %v339
        %v430 = vunpack.c.h.b16 %v339
        %v431 = vunpack.c.l.b16 %v340
        %v432 = vpack.c.b16 %v411, %v408
        %v433 = vpack.c.b16 %v412, %v409
        %v434 = vpack.c.b16 %v413, %v410
        %v435 = vpack.c.b16 %v417, %v414
        %v436 = vpack.c.b16 %v418, %v415
        %v437 = vpack.c.b16 %v419, %v416
        %v438 = vpack.c.b16 %v423, %v420
        %v439 = vpack.c.b16 %v424, %v421
        %v440 = vpack.c.b16 %v425, %v422
        %v441 = vpack.c.b16 %v429, %v426
        %v442 = vpack.c.b16 %v430, %v427
        %v443 = vpack.c.b16 %v431, %v428
        %v498 = vunpack.c.l.b16 %v341
        %v499 = vunpack.c.l.b16 %v342
        %v500 = vunpack.c.l.b16 %v343
        %v501 = vunpack.c.l.b16 %v344
        %v502 = vunpack.c.l.b16 %v345
        %v503 = vunpack.c.l.b16 %v346
        %v504 = vunpack.c.l.b16 %v347
        %v505 = vunpack.c.l.b16 %v348
        %v506 = vunpack.c.l.b16 %v349
        %v507 = vunpack.c.l.b16 %v350
        %v508 = vunpack.c.l.b16 %v351
        %v509 = vunpack.c.l.b16 %v352
        %v510 = vunpack.c.l.b16 %v353
        %v511 = vunpack.c.l.b16 %v354
        %v512 = vunpack.c.l.b16 %v355
        %v513 = vunpack.c.l.b16 %v356
        %v514 = vunpack.c.l.b16 %v357
        %v515 = vunpack.c.l.b16 %v358
        %v516 = vunpack.c.l.b16 %v359
        %v517 = vunpack.c.l.b16 %v360
        %v518 = vunpack.c.l.b16 %v361
        %v519 = vunpack.c.l.b16 %v362
        %v520 = vunpack.c.l.b16 %v363
        %v521 = vunpack.c.l.b16 %v364
        %v522 = vunpack.c.l.b16 %v365
        %v523 = vunpack.c.l.b16 %v366
        %v524 = vunpack.c.l.b16 %v367
        %v525 = vunpack.c.l.b16 %v368
        %v526 = vunpack.c.l.b16 %v369
        %v527 = vunpack.c.l.b16 %v370
        %v528 = vunpack.c.l.b16 %v371
        %v529 = vunpack.c.l.b16 %v372
        %v530 = vunpack.c.l.b16 %v373
        %v531 = vunpack.c.l.b16 %v374
        %v532 = vunpack.c.l.b16 %v375
        %v533 = vunpack.c.l.b16 %v376
        %v534 = vunpack.c.l.b16 %v377
        %v535 = vunpack.c.l.b16 %v378
        %v536 = vunpack.c.l.b16 %v379
        %v537 = vunpack.c.l.b16 %v380
        %v538 = vunpack.c.l.b16 %v381
        %v539 = vunpack.c.l.b16 %v382
        %v540 = vunpack.c.l.b16 %v383
        %v541 = vunpack.c.l.b16 %v384
        %v542 = vunpack.c.l.b16 %v385
        %v543 = vunpack.c.l.b16 %v386
        %v544 = vpack.c.b16 %v499, %v498
        %v545 = vpack.c.b16 %v501, %v500
        %v546 = vpack.c.b16 %v503, %v502
        %v547 = vpack.c.b16 %v505, %v504
        %v548 = vpack.c.b16 %v507, %v506
        %v549 = vpack.c.b16 %v509, %v508
        %v550 = vpack.c.b16 %v511, %v510
        %v551 = vpack.c.b16 %v513, %v512
        %v552 = vpack.c.b16 %v515, %v514
        %v553 = vpack.c.b16 %v517, %v516
        %v554 = vpack.c.b16 %v519, %v518
        %v555 = vpack.c.b16 %v521, %v520
        %v556 = vpack.c.b16 %v523, %v522
        %v557 = vpack.c.b16 %v525, %v524
        %v558 = vpack.c.b16 %v527, %v526
        %v559 = vpack.c.b16 %v529, %v528
        %v560 = vpack.c.b16 %v531, %v530
        %v561 = vpack.c.b16 %v533, %v532
        %v562 = vpack.c.b16 %v535, %v534
        %v563 = vpack.c.b16 %v537, %v536
        %v564 = vpack.c.b16 %v539, %v538
        %v565 = vpack.c.b16 %v541, %v540
        %v566 = vpack.c.b16 %v543, %v542
        %vm589 = vcmask 875520
        %v591 = vsel %vm589, %v434, 0
        %v594 = vsel %vm589, %v437, 0
        %v597 = vsel %vm589, %v440, 0
        %v600 = vsel %vm589, %v443, 0
        %vm602 = vcmask 1044480
        %vm603 = vcmask 1045504
        %v604 = vsel %vm602, 4294967295, 65535
        %v605 = vsel %vm603, %v604, 0
        %v607 = vand.u32 %v566, %v605
        %609 = vmatprep.subr.bf16.mxu0 0
        %610 = vmatpush1.bf16.msra.mxu0 %v551
        %611 = vmatprep.subr.bf16.mxu0 0
        %612 = vmatpush1.bf16.msra.mxu0 %v550
        %613 = vmatprep.subr.bf16.mxu0 0
        %614 = vmatpush1.bf16.msra.mxu0 %v549
        %615 = vmatprep.subr.bf16.mxu0 0
        %616 = vmatpush1.bf16.msra.mxu0 %v548
        %617 = vmatprep.subr.bf16.mxu0 0
        %618 = vmatpush1.bf16.msra.mxu0 %v547
        %619 = vmatprep.subr.bf16.mxu0 0
        %620 = vmatpush1.bf16.msra.mxu0 %v546
        %621 = vmatprep.subr.bf16.mxu0 0
        %622 = vmatpush1.bf16.msra.mxu0 %v545
        %623 = vmatprep.subr.bf16.mxu0 0
        %624 = vmatpush1.bf16.msra.mxu0 %v544
        %625 = vmatprep.subr.bf16.mxu0 0
        %626 = vmatpush2.bf16.msra.mxu0 %v559
        %627 = vmatprep.subr.bf16.mxu0 0
        %628 = vmatpush2.bf16.msra.mxu0 %v558
        %629 = vmatprep.subr.bf16.mxu0 0
        %630 = vmatpush2.bf16.msra.mxu0 %v557
        %631 = vmatprep.subr.bf16.mxu0 0
        %632 = vmatpush2.bf16.msra.mxu0 %v556
        %633 = vmatprep.subr.bf16.mxu0 0
        %634 = vmatpush2.bf16.msra.mxu0 %v555
        %635 = vmatprep.subr.bf16.mxu0 0
        %636 = vmatpush2.bf16.msra.mxu0 %v554
        %637 = vmatprep.subr.bf16.mxu0 0
        %638 = vmatpush2.bf16.msra.mxu0 %v553
        %639 = vmatprep.subr.bf16.mxu0 0
        %640 = vmatpush2.bf16.msra.mxu0 %v552
        %641 = vmatprep.mubr.bf16.mxu0 %v433
        %642 = vmatmul.mubr.bf16.gmra.mxu0 %v432
        %v643 = vpop.f32.mrf.mxu0
        %v644 = vadd.f32 %v391, %v643
        %v645 = vpop.f32.mrf.mxu0
        %v646 = vpop.f32.mrf.mxu0
        %v647 = vadd.f32 %v391, %v646
        %v648 = vpop.f32.mrf.mxu0
        %649 = vmatprep.mubr.bf16.mxu0 %v436
        %650 = vmatmul.mubr.bf16.gmra.mxu0 %v435
        %v651 = vpop.f32.mrf.mxu0
        %v652 = vadd.f32 %v391, %v651
        %v653 = vpop.f32.mrf.mxu0
        %v654 = vpop.f32.mrf.mxu0
        %v655 = vadd.f32 %v391, %v654
        %v656 = vpop.f32.mrf.mxu0
        %657 = vmatprep.mubr.bf16.mxu0 %v439
        %658 = vmatmul.mubr.bf16.gmra.mxu0 %v438
        %v659 = vpop.f32.mrf.mxu0
        %v660 = vadd.f32 %v391, %v659
        %v661 = vpop.f32.mrf.mxu0
        %v662 = vpop.f32.mrf.mxu0
        %v663 = vadd.f32 %v391, %v662
        %v664 = vpop.f32.mrf.mxu0
        %665 = vmatprep.mubr.bf16.mxu0 %v442
        %666 = vmatmul.mubr.bf16.gmra.mxu0 %v441
        %v667 = vpop.f32.mrf.mxu0
        %v668 = vadd.f32 %v391, %v667
        %v669 = vpop.f32.mrf.mxu0
        %v670 = vpop.f32.mrf.mxu0
        %v671 = vadd.f32 %v391, %v670
        %v672 = vpop.f32.mrf.mxu0
        %673 = vdwg.mxu0
        %674 = vmatprep.subr.bf16.mxu0 0
        %675 = vmatpush1.bf16.msra.mxu0 0
        %676 = vmatprep.subr.bf16.mxu0 0
        %677 = vmatpush1.bf16.msra.mxu0 %v607
        %678 = vmatprep.subr.bf16.mxu0 0
        %679 = vmatpush1.bf16.msra.mxu0 %v565
        %680 = vmatprep.subr.bf16.mxu0 0
        %681 = vmatpush1.bf16.msra.mxu0 %v564
        %682 = vmatprep.subr.bf16.mxu0 0
        %683 = vmatpush1.bf16.msra.mxu0 %v563
        %684 = vmatprep.subr.bf16.mxu0 0
        %685 = vmatpush1.bf16.msra.mxu0 %v562
        %686 = vmatprep.subr.bf16.mxu0 0
        %687 = vmatpush1.bf16.msra.mxu0 %v561
        %688 = vmatprep.subr.bf16.mxu0 0
        %689 = vmatpush1.bf16.msra.mxu0 %v560
        %690 = vmatprep.subr.bf16.mxu0 0
        %691 = vmatpush2.bf16.msra.mxu0 0
        %692 = vmatprep.subr.bf16.mxu0 0
        %693 = vmatpush2.bf16.msra.mxu0 0
        %694 = vmatprep.subr.bf16.mxu0 0
        %695 = vmatpush2.bf16.msra.mxu0 0
        %696 = vmatprep.subr.bf16.mxu0 0
        %697 = vmatpush2.bf16.msra.mxu0 0
        %698 = vmatprep.subr.bf16.mxu0 0
        %699 = vmatpush2.bf16.msra.mxu0 0
        %700 = vmatprep.subr.bf16.mxu0 0
        %701 = vmatpush2.bf16.msra.mxu0 0
        %702 = vmatprep.subr.bf16.mxu0 0
        %703 = vmatpush2.bf16.msra.mxu0 0
        %704 = vmatprep.subr.bf16.mxu0 0
        %705 = vmatpush2.bf16.msra.mxu0 0
        %706 = vmatprep.mubr.bf16.mxu0 0
        %707 = vmatmul.mubr.bf16.gmra.mxu0 %v591
        %v708 = vpop.f32.mrf.mxu0
        %v709 = vadd.f32 %v644, %v708
        %v710 = vpop.f32.mrf.mxu0
        %v711 = vpop.f32.mrf.mxu0
        %v712 = vadd.f32 %v647, %v711
        %v713 = vpop.f32.mrf.mxu0
        %714 = vmatprep.mubr.bf16.mxu0 0
        %715 = vmatmul.mubr.bf16.gmra.mxu0 %v594
        %v716 = vpop.f32.mrf.mxu0
        %v717 = vadd.f32 %v652, %v716
        %v718 = vpop.f32.mrf.mxu0
        %v719 = vpop.f32.mrf.mxu0
        %v720 = vadd.f32 %v655, %v719
        %v721 = vpop.f32.mrf.mxu0
        %722 = vmatprep.mubr.bf16.mxu0 0
        %723 = vmatmul.mubr.bf16.gmra.mxu0 %v597
        %v724 = vpop.f32.mrf.mxu0
        %v725 = vadd.f32 %v660, %v724
        %v726 = vpop.f32.mrf.mxu0
        %v727 = vpop.f32.mrf.mxu0
        %v728 = vadd.f32 %v663, %v727
        %v729 = vpop.f32.mrf.mxu0
        %730 = vmatprep.mubr.bf16.mxu0 0
        %731 = vmatmul.mubr.bf16.gmra.mxu0 %v600
        %v732 = vpop.f32.mrf.mxu0
        %v733 = vadd.f32 %v668, %v732
        %v734 = vpop.f32.mrf.mxu0
        %v735 = vpop.f32.mrf.mxu0
        %v736 = vadd.f32 %v671, %v735
        %v737 = vpop.f32.mrf.mxu0
        %738 = vdwg.mxu0
        %v739 = vmax.f32 %v709, 0.0
        %v740 = vmax.f32 %v712, 0.0
        %v741 = vmax.f32 %v717, 0.0
        %v742 = vmax.f32 %v720, 0.0
        %v743 = vmax.f32 %v725, 0.0
        %v744 = vmax.f32 %v728, 0.0
        %v745 = vmax.f32 %v733, 0.0
        %v746 = vmax.f32 %v736, 0.0
        %v747 = vld [vmem:[%s323] sm:$0xf]
        %v748 = vld [vmem:[%s323 + $0x4] sm:$0xf]
        %v749 = vld [vmem:[%s323 + $0x8] sm:$0xf]
        %v750 = vld [vmem:[%s323 + $0xc] sm:$0xf]
        %v751 = vld [vmem:[%s323 + $0x10] sm:$0xf]
        %v752 = vld [vmem:[%s323 + $0x14] sm:$0xf]
        %v753 = vld [vmem:[%s323 + $0x18] sm:$0xf]
        %v754 = vld [vmem:[%s323 + $0x1c] sm:$0xf]
        %v755 = vld [vmem:[%s323 + $0x20] sm:$0xf]
        %v756 = vld [vmem:[%s323 + $0x24] sm:$0xf]
        %v757 = vld [vmem:[%s323 + $0x28] sm:$0xf]
        %v758 = vld [vmem:[%s323 + $0x2c] sm:$0xf]
        %v759 = vld [vmem:[%s323 + $0x30] sm:$0xf]
        %v760 = vld [vmem:[%s323 + $0x34] sm:$0xf]
        %v761 = vld [vmem:[%s323 + $0x38] sm:$0xf]
        %v762 = vld [vmem:[%s323 + $0x3c] sm:$0xf]
        %v763 = vld [vmem:[%s323 + $0x40] sm:$0xf]
        %v764 = vld [vmem:[%s323 + $0x44] sm:$0xf]
        %v765 = vld [vmem:[%s323 + $0x48] sm:$0xf]
        %v766 = vld [vmem:[%s323 + $0x4c] sm:$0xf]
        %v767 = vld [vmem:[%s323 + $0x50] sm:$0xf]
        %v768 = vld [vmem:[%s323 + $0x54] sm:$0xf]
        %v769 = vld [vmem:[%s323 + $0x58] sm:$0xf]
        %v770 = vld [vmem:[%s323 + $0x5c] sm:$0xf]
        %v771 = vld [vmem:[%s323 + $0x60] sm:$0xf]
        %v772 = vld [vmem:[%s323 + $0x64] sm:$0xf]
        %v773 = vld [vmem:[%s323 + $0x68] sm:$0xf]
        %v774 = vld [vmem:[%s323 + $0x6c] sm:$0xf]
        %v775 = vld [vmem:[%s323 + $0x70] sm:$0xf]
        %v776 = vld [vmem:[%s323 + $0x74] sm:$0xf]
        %v777 = vld [vmem:[%s323 + $0x78] sm:$0xf]
        %v778 = vld [vmem:[%s323 + $0x7c] sm:$0xf]
        %v779 = vld [vmem:[%s3] sm:$0xf]
        %v780 = vld [vmem:[%s3 + $0x4] sm:$0xf]
        %v781 = vld [vmem:[%s3 + $0x8] sm:$0xf]
        %v782 = vld [vmem:[%s3 + $0xc] sm:$0x3]
        %v783 = vld [vmem:[%s7 + $0x1] sm:$0x1]
        %v784 = vlaneseq
        %v785 = vshrl.u32 %v784, 7
        %v786 = vsub.s32 0, %v785
        %v787 = vrot.slane %v783, %v786
        %v820 = vunpack.c.l.b16 %v747
        %v821 = vunpack.c.l.b16 %v748
        %v822 = vunpack.c.l.b16 %v749
        %v823 = vunpack.c.l.b16 %v750
        %v824 = vunpack.c.l.b16 %v751
        %v825 = vunpack.c.l.b16 %v752
        %v826 = vunpack.c.l.b16 %v753
        %v827 = vunpack.c.l.b16 %v754
        %v828 = vunpack.c.l.b16 %v755
        %v829 = vunpack.c.l.b16 %v756
        %v830 = vunpack.c.l.b16 %v757
        %v831 = vunpack.c.l.b16 %v758
        %v832 = vunpack.c.l.b16 %v759
        %v833 = vunpack.c.l.b16 %v760
        %v834 = vunpack.c.l.b16 %v761
        %v835 = vunpack.c.l.b16 %v762
        %v836 = vunpack.c.l.b16 %v763
        %v837 = vunpack.c.l.b16 %v764
        %v838 = vunpack.c.l.b16 %v765
        %v839 = vunpack.c.l.b16 %v766
        %v840 = vunpack.c.l.b16 %v767
        %v841 = vunpack.c.l.b16 %v768
        %v842 = vunpack.c.l.b16 %v769
        %v843 = vunpack.c.l.b16 %v770
        %v844 = vunpack.c.l.b16 %v771
        %v845 = vunpack.c.l.b16 %v772
        %v846 = vunpack.c.l.b16 %v773
        %v847 = vunpack.c.l.b16 %v774
        %v848 = vunpack.c.l.b16 %v775
        %v849 = vunpack.c.l.b16 %v776
        %v850 = vunpack.c.l.b16 %v777
        %v851 = vunpack.c.l.b16 %v778
        %v852 = vpack.c.b16 %v821, %v820
        %v853 = vpack.c.b16 %v823, %v822
        %v854 = vpack.c.b16 %v825, %v824
        %v855 = vpack.c.b16 %v827, %v826
        %v856 = vpack.c.b16 %v829, %v828
        %v857 = vpack.c.b16 %v831, %v830
        %v858 = vpack.c.b16 %v833, %v832
        %v859 = vpack.c.b16 %v835, %v834
        %v860 = vpack.c.b16 %v837, %v836
        %v861 = vpack.c.b16 %v839, %v838
        %v862 = vpack.c.b16 %v841, %v840
        %v863 = vpack.c.b16 %v843, %v842
        %v864 = vpack.c.b16 %v845, %v844
        %v865 = vpack.c.b16 %v847, %v846
        %v866 = vpack.c.b16 %v849, %v848
        %v867 = vpack.c.b16 %v851, %v850
        %v872 = vunpack.c.l.b16 %v779
        %v873 = vunpack.c.l.b16 %v780
        %v874 = vunpack.c.l.b16 %v781
        %v875 = vunpack.c.l.b16 %v782
        %v876 = vpack.c.b16 %v873, %v872
        %v877 = vpack.c.b16 %v875, %v874
        %vm879 = vcmask 220160
        %v881 = vsel %vm879, %v852, 0
        %v884 = vsel %vm879, %v853, 0
        %v887 = vsel %vm879, %v854, 0
        %v890 = vsel %vm879, %v855, 0
        %v893 = vsel %vm879, %v856, 0
        %v896 = vsel %vm879, %v857, 0
        %v899 = vsel %vm879, %v858, 0
        %v902 = vsel %vm879, %v859, 0
        %v905 = vsel %vm879, %v860, 0
        %v908 = vsel %vm879, %v861, 0
        %v911 = vsel %vm879, %v862, 0
        %v914 = vsel %vm879, %v863, 0
        %v917 = vsel %vm879, %v864, 0
        %v920 = vsel %vm879, %v865, 0
        %v923 = vsel %vm879, %v866, 0
        %v926 = vsel %vm879, %v867, 0
        %v929 = vand.u32 %v877, %v605
        %931 = vmatprep.subr.bf16.mxu0 0
        %932 = vmatpush1.bf16.msra.mxu0 0
        %933 = vmatprep.subr.bf16.mxu0 0
        %934 = vmatpush1.bf16.msra.mxu0 0
        %935 = vmatprep.subr.bf16.mxu0 0
        %936 = vmatpush1.bf16.msra.mxu0 0
        %937 = vmatprep.subr.bf16.mxu0 0
        %938 = vmatpush1.bf16.msra.mxu0 0
        %939 = vmatprep.subr.bf16.mxu0 0
        %940 = vmatpush1.bf16.msra.mxu0 0
        %941 = vmatprep.subr.bf16.mxu0 0
        %942 = vmatpush1.bf16.msra.mxu0 0
        %943 = vmatprep.subr.bf16.mxu0 0
        %944 = vmatpush1.bf16.msra.mxu0 %v929
        %945 = vmatprep.subr.bf16.mxu0 0
        %946 = vmatpush1.bf16.msra.mxu0 %v876
        %947 = vmatprep.subr.bf16.mxu0 0
        %948 = vmatpush2.bf16.msra.mxu0 0
        %949 = vmatprep.subr.bf16.mxu0 0
        %950 = vmatpush2.bf16.msra.mxu0 0
        %951 = vmatprep.subr.bf16.mxu0 0
        %952 = vmatpush2.bf16.msra.mxu0 0
        %953 = vmatprep.subr.bf16.mxu0 0
        %954 = vmatpush2.bf16.msra.mxu0 0
        %955 = vmatprep.subr.bf16.mxu0 0
        %956 = vmatpush2.bf16.msra.mxu0 0
        %957 = vmatprep.subr.bf16.mxu0 0
        %958 = vmatpush2.bf16.msra.mxu0 0
        %959 = vmatprep.subr.bf16.mxu0 0
        %960 = vmatpush2.bf16.msra.mxu0 0
        %961 = vmatprep.subr.bf16.mxu0 0
        %962 = vmatpush2.bf16.msra.mxu0 0
        %963 = vmatprep.mubr.bf16.mxu0 0
        %964 = vmatmul.mubr.bf16.gmra.mxu0 %v881
        %v965 = vpop.f32.mrf.mxu0
        %v966 = vadd.f32 %v787, %v965
        %v967 = vpop.f32.mrf.mxu0
        %v968 = vpop.f32.mrf.mxu0
        %v969 = vadd.f32 %v787, %v968
        %v970 = vpop.f32.mrf.mxu0
        %971 = vmatprep.mubr.bf16.mxu0 0
        %972 = vmatmul.mubr.bf16.gmra.mxu0 %v884
        %v973 = vpop.f32.mrf.mxu0
        %v974 = vadd.f32 %v787, %v973
        %v975 = vpop.f32.mrf.mxu0
        %v976 = vpop.f32.mrf.mxu0
        %v977 = vadd.f32 %v787, %v976
        %v978 = vpop.f32.mrf.mxu0
        %979 = vmatprep.mubr.bf16.mxu0 0
        %980 = vmatmul.mubr.bf16.gmra.mxu0 %v887
        %v981 = vpop.f32.mrf.mxu0
        %v982 = vadd.f32 %v787, %v981
        %v983 = vpop.f32.mrf.mxu0
        %v984 = vpop.f32.mrf.mxu0
        %v985 = vadd.f32 %v787, %v984
        %v986 = vpop.f32.mrf.mxu0
        %987 = vmatprep.mubr.bf16.mxu0 0
        %988 = vmatmul.mubr.bf16.gmra.mxu0 %v890
        %v989 = vpop.f32.mrf.mxu0
        %v990 = vadd.f32 %v787, %v989
        %v991 = vpop.f32.mrf.mxu0
        %v992 = vpop.f32.mrf.mxu0
        %v993 = vadd.f32 %v787, %v992
        %v994 = vpop.f32.mrf.mxu0
        %995 = vmatprep.mubr.bf16.mxu0 0
        %996 = vmatmul.mubr.bf16.gmra.mxu0 %v893
        %v997 = vpop.f32.mrf.mxu0
        %v998 = vadd.f32 %v787, %v997
        %v999 = vpop.f32.mrf.mxu0
        %v1000 = vpop.f32.mrf.mxu0
        %v1001 = vadd.f32 %v787, %v1000
        %v1002 = vpop.f32.mrf.mxu0
        %1003 = vmatprep.mubr.bf16.mxu0 0
        %1004 = vmatmul.mubr.bf16.gmra.mxu0 %v896
        %v1005 = vpop.f32.mrf.mxu0
        %v1006 = vadd.f32 %v787, %v1005
        %v1007 = vpop.f32.mrf.mxu0
        %v1008 = vpop.f32.mrf.mxu0
        %v1009 = vadd.f32 %v787, %v1008
        %v1010 = vpop.f32.mrf.mxu0
        %1011 = vmatprep.mubr.bf16.mxu0 0
        %1012 = vmatmul.mubr.bf16.gmra.mxu0 %v899
        %v1013 = vpop.f32.mrf.mxu0
        %v1014 = vadd.f32 %v787, %v1013
        %v1015 = vpop.f32.mrf.mxu0
        %v1016 = vpop.f32.mrf.mxu0
        %v1017 = vadd.f32 %v787, %v1016
        %v1018 = vpop.f32.mrf.mxu0
        %1019 = vmatprep.mubr.bf16.mxu0 0
        %1020 = vmatmul.mubr.bf16.gmra.mxu0 %v902
        %v1021 = vpop.f32.mrf.mxu0
        %v1022 = vadd.f32 %v787, %v1021
        %v1023 = vpop.f32.mrf.mxu0
        %v1024 = vpop.f32.mrf.mxu0
        %v1025 = vadd.f32 %v787, %v1024
        %v1026 = vpop.f32.mrf.mxu0
        %1027 = vmatprep.mubr.bf16.mxu0 0
        %1028 = vmatmul.mubr.bf16.gmra.mxu0 %v905
        %v1029 = vpop.f32.mrf.mxu0
        %v1030 = vadd.f32 %v787, %v1029
        %v1031 = vpop.f32.mrf.mxu0
        %v1032 = vpop.f32.mrf.mxu0
        %v1033 = vadd.f32 %v787, %v1032
        %v1034 = vpop.f32.mrf.mxu0
        %1035 = vmatprep.mubr.bf16.mxu0 0
        %1036 = vmatmul.mubr.bf16.gmra.mxu0 %v908
        %v1037 = vpop.f32.mrf.mxu0
        %v1038 = vadd.f32 %v787, %v1037
        %v1039 = vpop.f32.mrf.mxu0
        %v1040 = vpop.f32.mrf.mxu0
        %v1041 = vadd.f32 %v787, %v1040
        %v1042 = vpop.f32.mrf.mxu0
        %1043 = vmatprep.mubr.bf16.mxu0 0
        %1044 = vmatmul.mubr.bf16.gmra.mxu0 %v911
        %v1045 = vpop.f32.mrf.mxu0
        %v1046 = vadd.f32 %v787, %v1045
        %v1047 = vpop.f32.mrf.mxu0
        %v1048 = vpop.f32.mrf.mxu0
        %v1049 = vadd.f32 %v787, %v1048
        %v1050 = vpop.f32.mrf.mxu0
        %1051 = vmatprep.mubr.bf16.mxu0 0
        %1052 = vmatmul.mubr.bf16.gmra.mxu0 %v914
        %v1053 = vpop.f32.mrf.mxu0
        %v1054 = vadd.f32 %v787, %v1053
        %v1055 = vpop.f32.mrf.mxu0
        %v1056 = vpop.f32.mrf.mxu0
        %v1057 = vadd.f32 %v787, %v1056
        %v1058 = vpop.f32.mrf.mxu0
        %1059 = vmatprep.mubr.bf16.mxu0 0
        %1060 = vmatmul.mubr.bf16.gmra.mxu0 %v917
        %v1061 = vpop.f32.mrf.mxu0
        %v1062 = vadd.f32 %v787, %v1061
        %v1063 = vpop.f32.mrf.mxu0
        %v1064 = vpop.f32.mrf.mxu0
        %v1065 = vadd.f32 %v787, %v1064
        %v1066 = vpop.f32.mrf.mxu0
        %1067 = vmatprep.mubr.bf16.mxu0 0
        %1068 = vmatmul.mubr.bf16.gmra.mxu0 %v920
        %v1069 = vpop.f32.mrf.mxu0
        %v1070 = vadd.f32 %v787, %v1069
        %v1071 = vpop.f32.mrf.mxu0
        %v1072 = vpop.f32.mrf.mxu0
        %v1073 = vadd.f32 %v787, %v1072
        %v1074 = vpop.f32.mrf.mxu0
        %1075 = vmatprep.mubr.bf16.mxu0 0
        %1076 = vmatmul.mubr.bf16.gmra.mxu0 %v923
        %v1077 = vpop.f32.mrf.mxu0
        %v1078 = vadd.f32 %v787, %v1077
        %v1079 = vpop.f32.mrf.mxu0
        %v1080 = vpop.f32.mrf.mxu0
        %v1081 = vadd.f32 %v787, %v1080
        %v1082 = vpop.f32.mrf.mxu0
        %1083 = vmatprep.mubr.bf16.mxu0 0
        %1084 = vmatmul.mubr.bf16.gmra.mxu0 %v926
        %v1085 = vpop.f32.mrf.mxu0
        %v1086 = vadd.f32 %v787, %v1085
        %v1087 = vpop.f32.mrf.mxu0
        %v1088 = vpop.f32.mrf.mxu0
        %v1089 = vadd.f32 %v787, %v1088
        %v1090 = vpop.f32.mrf.mxu0
        %1091 = vdwg.mxu0
        %v1092 = vmax.f32 %v966, 0.0
        %v1093 = vmax.f32 %v969, 0.0
        %v1094 = vmax.f32 %v974, 0.0
        %v1095 = vmax.f32 %v977, 0.0
        %v1096 = vmax.f32 %v982, 0.0
        %v1097 = vmax.f32 %v985, 0.0
        %v1098 = vmax.f32 %v990, 0.0
        %v1099 = vmax.f32 %v993, 0.0
        %v1100 = vmax.f32 %v998, 0.0
        %v1101 = vmax.f32 %v1001, 0.0
        %v1102 = vmax.f32 %v1006, 0.0
        %v1103 = vmax.f32 %v1009, 0.0
        %v1104 = vmax.f32 %v1014, 0.0
        %v1105 = vmax.f32 %v1017, 0.0
        %v1106 = vmax.f32 %v1022, 0.0
        %v1107 = vmax.f32 %v1025, 0.0
        %v1108 = vmax.f32 %v1030, 0.0
        %v1109 = vmax.f32 %v1033, 0.0
        %v1110 = vmax.f32 %v1038, 0.0
        %v1111 = vmax.f32 %v1041, 0.0
        %v1112 = vmax.f32 %v1046, 0.0
        %v1113 = vmax.f32 %v1049, 0.0
        %v1114 = vmax.f32 %v1054, 0.0
        %v1115 = vmax.f32 %v1057, 0.0
        %v1116 = vmax.f32 %v1062, 0.0
        %v1117 = vmax.f32 %v1065, 0.0
        %v1118 = vmax.f32 %v1070, 0.0
        %v1119 = vmax.f32 %v1073, 0.0
        %v1120 = vmax.f32 %v1078, 0.0
        %v1121 = vmax.f32 %v1081, 0.0
        %v1122 = vmax.f32 %v1086, 0.0
        %v1123 = vmax.f32 %v1089, 0.0
        %v1124 = vpack.c.bf16 %v1093, %v1092
        %v1125 = vpack.c.bf16 %v1095, %v1094
        %v1126 = vpack.c.bf16 %v1097, %v1096
        %v1127 = vpack.c.bf16 %v1099, %v1098
        %v1128 = vpack.c.bf16 %v1101, %v1100
        %v1129 = vpack.c.bf16 %v1103, %v1102
        %v1130 = vpack.c.bf16 %v1105, %v1104
        %v1131 = vpack.c.bf16 %v1107, %v1106
        %v1132 = vpack.c.bf16 %v1109, %v1108
        %v1133 = vpack.c.bf16 %v1111, %v1110
        %v1134 = vpack.c.bf16 %v1113, %v1112
        %v1135 = vpack.c.bf16 %v1115, %v1114
        %v1136 = vpack.c.bf16 %v1117, %v1116
        %v1137 = vpack.c.bf16 %v1119, %v1118
        %v1138 = vpack.c.bf16 %v1121, %v1120
        %v1139 = vpack.c.bf16 %v1123, %v1122
        %1140 = vst [vmem:[#allocation2] sm:$0xf] 0
        %1141 = vst [vmem:[#allocation2 + $0x4] sm:$0xf] 0
        %1142 = vst [vmem:[#allocation2 + $0x8] sm:$0x1] 0
        %s1143 = scalar_lea.vmem [#allocation2], 204
        %1144 = vst [vmem:[%s1143] sm:$0xf] 0
        %1145 = vst [vmem:[%s1143 + $0x4] sm:$0xf] 0
        %1146 = vst [vmem:[%s1143 + $0x8] sm:$0x1] 0
        %v1148 = vshrl.u32 %v1124, 16
        %v1150 = vrot.slane %v1148, 7
        %v1151 = vshll.u32 %v1124, 16
        %v1153 = vor.u32 %v1150, %v1151
        %v1155 = vshrl.u32 %v1125, 16
        %v1157 = vrot.slane %v1155, 7
        %v1158 = vshll.u32 %v1125, 16
        %v1160 = vor.u32 %v1157, %v1158
        %v1162 = vshrl.u32 %v1126, 16
        %v1164 = vrot.slane %v1162, 7
        %v1165 = vshll.u32 %v1126, 16
        %v1167 = vor.u32 %v1164, %v1165
        %v1169 = vshrl.u32 %v1127, 16
        %v1171 = vrot.slane %v1169, 7
        %v1172 = vshll.u32 %v1127, 16
        %v1174 = vor.u32 %v1171, %v1172
        %v1176 = vshrl.u32 %v1128, 16
        %v1178 = vrot.slane %v1176, 7
        %v1179 = vshll.u32 %v1128, 16
        %v1181 = vor.u32 %v1178, %v1179
        %v1183 = vshrl.u32 %v1129, 16
        %v1185 = vrot.slane %v1183, 7
        %v1186 = vshll.u32 %v1129, 16
        %v1188 = vor.u32 %v1185, %v1186
        %v1190 = vshrl.u32 %v1130, 16
        %v1192 = vrot.slane %v1190, 7
        %v1193 = vshll.u32 %v1130, 16
        %v1195 = vor.u32 %v1192, %v1193
        %v1197 = vshrl.u32 %v1131, 16
        %v1199 = vrot.slane %v1197, 7
        %v1200 = vshll.u32 %v1131, 16
        %v1202 = vor.u32 %v1199, %v1200
        %v1204 = vshrl.u32 %v1132, 16
        %v1206 = vrot.slane %v1204, 7
        %v1207 = vshll.u32 %v1132, 16
        %v1209 = vor.u32 %v1206, %v1207
        %v1211 = vshrl.u32 %v1133, 16
        %v1213 = vrot.slane %v1211, 7
        %v1214 = vshll.u32 %v1133, 16
        %v1216 = vor.u32 %v1213, %v1214
        %v1218 = vshrl.u32 %v1134, 16
        %v1220 = vrot.slane %v1218, 7
        %v1221 = vshll.u32 %v1134, 16
        %v1223 = vor.u32 %v1220, %v1221
        %v1225 = vshrl.u32 %v1135, 16
        %v1227 = vrot.slane %v1225, 7
        %v1228 = vshll.u32 %v1135, 16
        %v1230 = vor.u32 %v1227, %v1228
        %v1232 = vshrl.u32 %v1136, 16
        %v1234 = vrot.slane %v1232, 7
        %v1235 = vshll.u32 %v1136, 16
        %v1237 = vor.u32 %v1234, %v1235
        %v1239 = vshrl.u32 %v1137, 16
        %v1241 = vrot.slane %v1239, 7
        %v1242 = vshll.u32 %v1137, 16
        %v1244 = vor.u32 %v1241, %v1242
        %v1246 = vshrl.u32 %v1138, 16
        %v1248 = vrot.slane %v1246, 7
        %v1249 = vshll.u32 %v1138, 16
        %v1251 = vor.u32 %v1248, %v1249
        %v1253 = vshrl.u32 %v1139, 16
        %v1255 = vrot.slane %v1253, 7
        %v1256 = vshll.u32 %v1139, 16
        %v1258 = vor.u32 %v1255, %v1256
        %vm1291 = vcmask 1040384
        %vm1292 = vsmask.f32 256
        %vm1293 = vmand %vm1291, %vm1292
        %v1294 = vsel %vm1293, 0, %v1153
        %v1295 = vsel %vm1293, 0, %v1160
        %v1296 = vsel %vm1293, 0, %v1167
        %v1297 = vsel %vm1293, 0, %v1174
        %v1298 = vsel %vm1293, 0, %v1181
        %v1299 = vsel %vm1293, 0, %v1188
        %v1300 = vsel %vm1293, 0, %v1195
        %v1301 = vsel %vm1293, 0, %v1202
        %v1302 = vsel %vm1293, 0, %v1209
        %v1303 = vsel %vm1293, 0, %v1216
        %v1304 = vsel %vm1293, 0, %v1223
        %v1305 = vsel %vm1293, 0, %v1230
        %v1306 = vsel %vm1293, 0, %v1237
        %v1307 = vsel %vm1293, 0, %v1244
        %v1308 = vsel %vm1293, 0, %v1251
        %v1309 = vsel %vm1293, 0, %v1258
        %v1310 = vsel %vm1293, %v1150, 0
        %v1311 = vsel %vm1293, %v1157, 0
        %v1312 = vsel %vm1293, %v1164, 0
        %v1313 = vsel %vm1293, %v1171, 0
        %v1314 = vsel %vm1293, %v1178, 0
        %v1315 = vsel %vm1293, %v1185, 0
        %v1316 = vsel %vm1293, %v1192, 0
        %v1317 = vsel %vm1293, %v1199, 0
        %v1318 = vsel %vm1293, %v1206, 0
        %v1319 = vsel %vm1293, %v1213, 0
        %v1320 = vsel %vm1293, %v1220, 0
        %v1321 = vsel %vm1293, %v1227, 0
        %v1322 = vsel %vm1293, %v1234, 0
        %v1323 = vsel %vm1293, %v1241, 0
        %v1324 = vsel %vm1293, %v1248, 0
        %v1325 = vsel %vm1293, %v1255, 0
        %v1358 = vunpack.c.l.b16 %v1294
        %v1359 = vunpack.c.h.b16 %v1294
        %v1360 = vunpack.c.l.b16 %v1310
        %v1361 = vunpack.c.l.b16 %v1295
        %v1362 = vunpack.c.h.b16 %v1295
        %v1363 = vunpack.c.l.b16 %v1311
        %v1364 = vunpack.c.l.b16 %v1296
        %v1365 = vunpack.c.h.b16 %v1296
        %v1366 = vunpack.c.l.b16 %v1312
        %v1367 = vunpack.c.l.b16 %v1297
        %v1368 = vunpack.c.h.b16 %v1297
        %v1369 = vunpack.c.l.b16 %v1313
        %v1370 = vunpack.c.l.b16 %v1298
        %v1371 = vunpack.c.h.b16 %v1298
        %v1372 = vunpack.c.l.b16 %v1314
        %v1373 = vunpack.c.l.b16 %v1299
        %v1374 = vunpack.c.h.b16 %v1299
        %v1375 = vunpack.c.l.b16 %v1315
        %v1376 = vunpack.c.l.b16 %v1300
        %v1377 = vunpack.c.h.b16 %v1300
        %v1378 = vunpack.c.l.b16 %v1316
        %v1379 = vunpack.c.l.b16 %v1301
        %v1380 = vunpack.c.h.b16 %v1301
        %v1381 = vunpack.c.l.b16 %v1317
        %v1382 = vunpack.c.l.b16 %v1302
        %v1383 = vunpack.c.h.b16 %v1302
        %v1384 = vunpack.c.l.b16 %v1318
        %v1385 = vunpack.c.l.b16 %v1303
        %v1386 = vunpack.c.h.b16 %v1303
        %v1387 = vunpack.c.l.b16 %v1319
        %v1388 = vunpack.c.l.b16 %v1304
        %v1389 = vunpack.c.h.b16 %v1304
        %v1390 = vunpack.c.l.b16 %v1320
        %v1391 = vunpack.c.l.b16 %v1305
        %v1392 = vunpack.c.h.b16 %v1305
        %v1393 = vunpack.c.l.b16 %v1321
        %v1394 = vunpack.c.l.b16 %v1306
        %v1395 = vunpack.c.h.b16 %v1306
        %v1396 = vunpack.c.l.b16 %v1322
        %v1397 = vunpack.c.l.b16 %v1307
        %v1398 = vunpack.c.h.b16 %v1307
        %v1399 = vunpack.c.l.b16 %v1323
        %v1400 = vunpack.c.l.b16 %v1308
        %v1401 = vunpack.c.h.b16 %v1308
        %v1402 = vunpack.c.l.b16 %v1324
        %v1403 = vunpack.c.l.b16 %v1309
        %v1404 = vunpack.c.h.b16 %v1309
        %v1405 = vunpack.c.l.b16 %v1325
        %v1406 = vpack.c.b16 %v1358, %v1358
        %v1407 = vpack.c.b16 %v1359, %v1359
        %v1408 = vpack.c.b16 %v1360, %v1360
        %v1409 = vpack.c.b16 %v1361, %v1361
        %v1410 = vpack.c.b16 %v1362, %v1362
        %v1411 = vpack.c.b16 %v1363, %v1363
        %v1412 = vpack.c.b16 %v1364, %v1364
        %v1413 = vpack.c.b16 %v1365, %v1365
        %v1414 = vpack.c.b16 %v1366, %v1366
        %v1415 = vpack.c.b16 %v1367, %v1367
        %v1416 = vpack.c.b16 %v1368, %v1368
        %v1417 = vpack.c.b16 %v1369, %v1369
        %v1418 = vpack.c.b16 %v1370, %v1370
        %v1419 = vpack.c.b16 %v1371, %v1371
        %v1420 = vpack.c.b16 %v1372, %v1372
        %v1421 = vpack.c.b16 %v1373, %v1373
        %v1422 = vpack.c.b16 %v1374, %v1374
        %v1423 = vpack.c.b16 %v1375, %v1375
        %v1424 = vpack.c.b16 %v1376, %v1376
        %v1425 = vpack.c.b16 %v1377, %v1377
        %v1426 = vpack.c.b16 %v1378, %v1378
        %v1427 = vpack.c.b16 %v1379, %v1379
        %v1428 = vpack.c.b16 %v1380, %v1380
        %v1429 = vpack.c.b16 %v1381, %v1381
        %v1430 = vpack.c.b16 %v1382, %v1382
        %v1431 = vpack.c.b16 %v1383, %v1383
        %v1432 = vpack.c.b16 %v1384, %v1384
        %v1433 = vpack.c.b16 %v1385, %v1385
        %v1434 = vpack.c.b16 %v1386, %v1386
        %v1435 = vpack.c.b16 %v1387, %v1387
        %v1436 = vpack.c.b16 %v1388, %v1388
        %v1437 = vpack.c.b16 %v1389, %v1389
        %v1438 = vpack.c.b16 %v1390, %v1390
        %v1439 = vpack.c.b16 %v1391, %v1391
        %v1440 = vpack.c.b16 %v1392, %v1392
        %v1441 = vpack.c.b16 %v1393, %v1393
        %v1442 = vpack.c.b16 %v1394, %v1394
        %v1443 = vpack.c.b16 %v1395, %v1395
        %v1444 = vpack.c.b16 %v1396, %v1396
        %v1445 = vpack.c.b16 %v1397, %v1397
        %v1446 = vpack.c.b16 %v1398, %v1398
        %v1447 = vpack.c.b16 %v1399, %v1399
        %v1448 = vpack.c.b16 %v1400, %v1400
        %v1449 = vpack.c.b16 %v1401, %v1401
        %v1450 = vpack.c.b16 %v1402, %v1402
        %v1451 = vpack.c.b16 %v1403, %v1403
        %v1452 = vpack.c.b16 %v1404, %v1404
        %v1453 = vpack.c.b16 %v1405, %v1405
        %s1502 = scalar_lea.vmem [#allocation2], 12
        %1503 = vst [vmem:[%s1502] sm:$0xf] %v1406
        %1504 = vst [vmem:[%s1502 + $0x4] sm:$0xf] %v1407
        %1505 = vst [vmem:[%s1502 + $0x8] sm:$0x1] %v1408
        %1506 = vst [vmem:[%s1502 + $0xc] sm:$0xf] %v1409
        %1507 = vst [vmem:[%s1502 + $0x10] sm:$0xf] %v1410
        %1508 = vst [vmem:[%s1502 + $0x14] sm:$0x1] %v1411
        %1509 = vst [vmem:[%s1502 + $0x18] sm:$0xf] %v1412
        %1510 = vst [vmem:[%s1502 + $0x1c] sm:$0xf] %v1413
        %1511 = vst [vmem:[%s1502 + $0x20] sm:$0x1] %v1414
        %1512 = vst [vmem:[%s1502 + $0x24] sm:$0xf] %v1415
        %1513 = vst [vmem:[%s1502 + $0x28] sm:$0xf] %v1416
        %1514 = vst [vmem:[%s1502 + $0x2c] sm:$0x1] %v1417
        %1515 = vst [vmem:[%s1502 + $0x30] sm:$0xf] %v1418
        %1516 = vst [vmem:[%s1502 + $0x34] sm:$0xf] %v1419
        %1517 = vst [vmem:[%s1502 + $0x38] sm:$0x1] %v1420
        %1518 = vst [vmem:[%s1502 + $0x3c] sm:$0xf] %v1421
        %1519 = vst [vmem:[%s1502 + $0x40] sm:$0xf] %v1422
        %1520 = vst [vmem:[%s1502 + $0x44] sm:$0x1] %v1423
        %1521 = vst [vmem:[%s1502 + $0x48] sm:$0xf] %v1424
        %1522 = vst [vmem:[%s1502 + $0x4c] sm:$0xf] %v1425
        %1523 = vst [vmem:[%s1502 + $0x50] sm:$0x1] %v1426
        %1524 = vst [vmem:[%s1502 + $0x54] sm:$0xf] %v1427
        %1525 = vst [vmem:[%s1502 + $0x58] sm:$0xf] %v1428
        %1526 = vst [vmem:[%s1502 + $0x5c] sm:$0x1] %v1429
        %1527 = vst [vmem:[%s1502 + $0x60] sm:$0xf] %v1430
        %1528 = vst [vmem:[%s1502 + $0x64] sm:$0xf] %v1431
        %1529 = vst [vmem:[%s1502 + $0x68] sm:$0x1] %v1432
        %1530 = vst [vmem:[%s1502 + $0x6c] sm:$0xf] %v1433
        %1531 = vst [vmem:[%s1502 + $0x70] sm:$0xf] %v1434
        %1532 = vst [vmem:[%s1502 + $0x74] sm:$0x1] %v1435
        %1533 = vst [vmem:[%s1502 + $0x78] sm:$0xf] %v1436
        %1534 = vst [vmem:[%s1502 + $0x7c] sm:$0xf] %v1437
        %1535 = vst [vmem:[%s1502 + $0x80] sm:$0x1] %v1438
        %1536 = vst [vmem:[%s1502 + $0x84] sm:$0xf] %v1439
        %1537 = vst [vmem:[%s1502 + $0x88] sm:$0xf] %v1440
        %1538 = vst [vmem:[%s1502 + $0x8c] sm:$0x1] %v1441
        %1539 = vst [vmem:[%s1502 + $0x90] sm:$0xf] %v1442
        %1540 = vst [vmem:[%s1502 + $0x94] sm:$0xf] %v1443
        %1541 = vst [vmem:[%s1502 + $0x98] sm:$0x1] %v1444
        %1542 = vst [vmem:[%s1502 + $0x9c] sm:$0xf] %v1445
        %1543 = vst [vmem:[%s1502 + $0xa0] sm:$0xf] %v1446
        %1544 = vst [vmem:[%s1502 + $0xa4] sm:$0x1] %v1447
        %1545 = vst [vmem:[%s1502 + $0xa8] sm:$0xf] %v1448
        %1546 = vst [vmem:[%s1502 + $0xac] sm:$0xf] %v1449
        %1547 = vst [vmem:[%s1502 + $0xb0] sm:$0x1] %v1450
        %1548 = vst [vmem:[%s1502 + $0xb4] sm:$0xf] %v1451
        %1549 = vst [vmem:[%s1502 + $0xb8] sm:$0xf] %v1452
        %1550 = vst [vmem:[%s1502 + $0xbc] sm:$0x1] %v1453
        %v1551 = vld [vmem:[#allocation2] sm:$0xf]
        %v1552 = vld [vmem:[#allocation2 + $0x4] sm:$0xf]
        %v1553 = vld [vmem:[#allocation2 + $0xc] sm:$0xf]
        %v1554 = vld [vmem:[#allocation2 + $0x10] sm:$0xf]
        %v1555 = vld [vmem:[#allocation2 + $0x18] sm:$0xf]
        %v1556 = vld [vmem:[#allocation2 + $0x1c] sm:$0xf]
        %v1557 = vld [vmem:[#allocation2 + $0x24] sm:$0xf]
        %v1558 = vld [vmem:[#allocation2 + $0x28] sm:$0xf]
        %v1559 = vld [vmem:[#allocation2 + $0x30] sm:$0xf]
        %v1560 = vld [vmem:[#allocation2 + $0x34] sm:$0xf]
        %v1561 = vld [vmem:[#allocation2 + $0x3c] sm:$0xf]
        %v1562 = vld [vmem:[#allocation2 + $0x40] sm:$0xf]
        %v1563 = vld [vmem:[#allocation2 + $0x48] sm:$0xf]
        %v1564 = vld [vmem:[#allocation2 + $0x4c] sm:$0xf]
        %v1565 = vld [vmem:[#allocation2 + $0x54] sm:$0xf]
        %v1566 = vld [vmem:[#allocation2 + $0x58] sm:$0xf]
        %v1567 = vld [vmem:[#allocation2 + $0x60] sm:$0xf]
        %v1568 = vld [vmem:[#allocation2 + $0x64] sm:$0xf]
        %v1569 = vld [vmem:[#allocation2 + $0x6c] sm:$0xf]
        %v1570 = vld [vmem:[#allocation2 + $0x70] sm:$0xf]
        %v1571 = vld [vmem:[#allocation2 + $0x78] sm:$0xf]
        %v1572 = vld [vmem:[#allocation2 + $0x7c] sm:$0xf]
        %v1573 = vld [vmem:[#allocation2 + $0x84] sm:$0xf]
        %v1574 = vld [vmem:[#allocation2 + $0x88] sm:$0xf]
        %v1575 = vld [vmem:[#allocation2 + $0x90] sm:$0xf]
        %v1576 = vld [vmem:[#allocation2 + $0x94] sm:$0xf]
        %v1577 = vld [vmem:[#allocation2 + $0x9c] sm:$0xf]
        %v1578 = vld [vmem:[#allocation2 + $0xa0] sm:$0xf]
        %v1579 = vld [vmem:[#allocation2 + $0xa8] sm:$0xf]
        %v1580 = vld [vmem:[#allocation2 + $0xac] sm:$0xf]
        %v1581 = vld [vmem:[#allocation2 + $0xb4] sm:$0xf]
        %v1582 = vld [vmem:[#allocation2 + $0xb8] sm:$0xf]
        %v1583 = vld [vmem:[#allocation2 + $0x8] sm:$0x1]
        %v1584 = vld [vmem:[#allocation2 + $0x14] sm:$0x1]
        %v1585 = vld [vmem:[#allocation2 + $0x20] sm:$0x1]
        %v1586 = vld [vmem:[#allocation2 + $0x2c] sm:$0x1]
        %v1587 = vld [vmem:[#allocation2 + $0x38] sm:$0x1]
        %v1588 = vld [vmem:[#allocation2 + $0x44] sm:$0x1]
        %v1589 = vld [vmem:[#allocation2 + $0x50] sm:$0x1]
        %v1590 = vld [vmem:[#allocation2 + $0x5c] sm:$0x1]
        %v1591 = vld [vmem:[#allocation2 + $0x68] sm:$0x1]
        %v1592 = vld [vmem:[#allocation2 + $0x74] sm:$0x1]
        %v1593 = vld [vmem:[#allocation2 + $0x80] sm:$0x1]
        %v1594 = vld [vmem:[#allocation2 + $0x8c] sm:$0x1]
        %v1595 = vld [vmem:[#allocation2 + $0x98] sm:$0x1]
        %v1596 = vld [vmem:[#allocation2 + $0xa4] sm:$0x1]
        %v1597 = vld [vmem:[#allocation2 + $0xb0] sm:$0x1]
        %v1598 = vld [vmem:[#allocation2 + $0xbc] sm:$0x1]
        %v1599 = vld [vmem:[#allocation2] sm:$0xe]
        %v1600 = vld [vmem:[#allocation2 + $0xc] sm:$0xe]
        %v1601 = vld [vmem:[#allocation2 + $0x18] sm:$0xe]
        %v1602 = vld [vmem:[#allocation2 + $0x24] sm:$0xe]
        %v1603 = vld [vmem:[#allocation2 + $0x30] sm:$0xe]
        %v1604 = vld [vmem:[#allocation2 + $0x3c] sm:$0xe]
        %v1605 = vld [vmem:[#allocation2 + $0x48] sm:$0xe]
        %v1606 = vld [vmem:[#allocation2 + $0x54] sm:$0xe]
        %v1607 = vld [vmem:[#allocation2 + $0x60] sm:$0xe]
        %v1608 = vld [vmem:[#allocation2 + $0x6c] sm:$0xe]
        %v1609 = vld [vmem:[#allocation2 + $0x78] sm:$0xe]
        %v1610 = vld [vmem:[#allocation2 + $0x84] sm:$0xe]
        %v1611 = vld [vmem:[#allocation2 + $0x90] sm:$0xe]
        %v1612 = vld [vmem:[#allocation2 + $0x9c] sm:$0xe]
        %v1613 = vld [vmem:[#allocation2 + $0xa8] sm:$0xe]
        %v1614 = vld [vmem:[#allocation2 + $0xb4] sm:$0xe]
        %v1647 = vunpack.c.l.b16 %v1551
        %v1648 = vunpack.c.l.b16 %v1552
        %v1649 = vunpack.c.l.b16 %v1553
        %v1650 = vunpack.c.l.b16 %v1554
        %v1651 = vunpack.c.l.b16 %v1555
        %v1652 = vunpack.c.l.b16 %v1556
        %v1653 = vunpack.c.l.b16 %v1557
        %v1654 = vunpack.c.l.b16 %v1558
        %v1655 = vunpack.c.l.b16 %v1559
        %v1656 = vunpack.c.l.b16 %v1560
        %v1657 = vunpack.c.l.b16 %v1561
        %v1658 = vunpack.c.l.b16 %v1562
        %v1659 = vunpack.c.l.b16 %v1563
        %v1660 = vunpack.c.l.b16 %v1564
        %v1661 = vunpack.c.l.b16 %v1565
        %v1662 = vunpack.c.l.b16 %v1566
        %v1663 = vunpack.c.l.b16 %v1567
        %v1664 = vunpack.c.l.b16 %v1568
        %v1665 = vunpack.c.l.b16 %v1569
        %v1666 = vunpack.c.l.b16 %v1570
        %v1667 = vunpack.c.l.b16 %v1571
        %v1668 = vunpack.c.l.b16 %v1572
        %v1669 = vunpack.c.l.b16 %v1573
        %v1670 = vunpack.c.l.b16 %v1574
        %v1671 = vunpack.c.l.b16 %v1575
        %v1672 = vunpack.c.l.b16 %v1576
        %v1673 = vunpack.c.l.b16 %v1577
        %v1674 = vunpack.c.l.b16 %v1578
        %v1675 = vunpack.c.l.b16 %v1579
        %v1676 = vunpack.c.l.b16 %v1580
        %v1677 = vunpack.c.l.b16 %v1581
        %v1678 = vunpack.c.l.b16 %v1582
        %v1679 = vpack.c.b16 %v1648, %v1647
        %v1680 = vpack.c.b16 %v1650, %v1649
        %v1681 = vpack.c.b16 %v1652, %v1651
        %v1682 = vpack.c.b16 %v1654, %v1653
        %v1683 = vpack.c.b16 %v1656, %v1655
        %v1684 = vpack.c.b16 %v1658, %v1657
        %v1685 = vpack.c.b16 %v1660, %v1659
        %v1686 = vpack.c.b16 %v1662, %v1661
        %v1687 = vpack.c.b16 %v1664, %v1663
        %v1688 = vpack.c.b16 %v1666, %v1665
        %v1689 = vpack.c.b16 %v1668, %v1667
        %v1690 = vpack.c.b16 %v1670, %v1669
        %v1691 = vpack.c.b16 %v1672, %v1671
        %v1692 = vpack.c.b16 %v1674, %v1673
        %v1693 = vpack.c.b16 %v1676, %v1675
        %v1694 = vpack.c.b16 %v1678, %v1677
        %v1727 = vunpack.c.l.b16 %v1583
        %v1728 = vunpack.c.l.b16 %v1584
        %v1729 = vunpack.c.l.b16 %v1585
        %v1730 = vunpack.c.l.b16 %v1586
        %v1731 = vunpack.c.l.b16 %v1587
        %v1732 = vunpack.c.l.b16 %v1588
        %v1733 = vunpack.c.l.b16 %v1589
        %v1734 = vunpack.c.l.b16 %v1590
        %v1735 = vunpack.c.l.b16 %v1591
        %v1736 = vunpack.c.l.b16 %v1592
        %v1737 = vunpack.c.l.b16 %v1593
        %v1738 = vunpack.c.l.b16 %v1594
        %v1739 = vunpack.c.l.b16 %v1595
        %v1740 = vunpack.c.l.b16 %v1596
        %v1741 = vunpack.c.l.b16 %v1597
        %v1742 = vunpack.c.l.b16 %v1598
        %v1743 = vpack.c.b16 %v1727, %v1727
        %v1744 = vpack.c.b16 %v1728, %v1728
        %v1745 = vpack.c.b16 %v1729, %v1729
        %v1746 = vpack.c.b16 %v1730, %v1730
        %v1747 = vpack.c.b16 %v1731, %v1731
        %v1748 = vpack.c.b16 %v1732, %v1732
        %v1749 = vpack.c.b16 %v1733, %v1733
        %v1750 = vpack.c.b16 %v1734, %v1734
        %v1751 = vpack.c.b16 %v1735, %v1735
        %v1752 = vpack.c.b16 %v1736, %v1736
        %v1753 = vpack.c.b16 %v1737, %v1737
        %v1754 = vpack.c.b16 %v1738, %v1738
        %v1755 = vpack.c.b16 %v1739, %v1739
        %v1756 = vpack.c.b16 %v1740, %v1740
        %v1757 = vpack.c.b16 %v1741, %v1741
        %v1758 = vpack.c.b16 %v1742, %v1742
        %vm1759 = vsmask.f32 7424
        %v1761 = vshrl.u32 %v1679, 16
        %v1763 = vshll.u32 %v1679, 16
        %v1765 = vrot.slane %v1763, 1
        %v1766 = vor.u32 %v1761, %v1765
        %v1768 = vshll.u32 %v1743, 16
        %v1770 = vrot.slane %v1768, 1
        %v1771 = vsel %vm1759, %v1766, %v1770
        %v1773 = vshrl.u32 %v1680, 16
        %v1775 = vshll.u32 %v1680, 16
        %v1777 = vrot.slane %v1775, 1
        %v1778 = vor.u32 %v1773, %v1777
        %v1780 = vshll.u32 %v1744, 16
        %v1782 = vrot.slane %v1780, 1
        %v1783 = vsel %vm1759, %v1778, %v1782
        %v1785 = vshrl.u32 %v1681, 16
        %v1787 = vshll.u32 %v1681, 16
        %v1789 = vrot.slane %v1787, 1
        %v1790 = vor.u32 %v1785, %v1789
        %v1792 = vshll.u32 %v1745, 16
        %v1794 = vrot.slane %v1792, 1
        %v1795 = vsel %vm1759, %v1790, %v1794
        %v1797 = vshrl.u32 %v1682, 16
        %v1799 = vshll.u32 %v1682, 16
        %v1801 = vrot.slane %v1799, 1
        %v1802 = vor.u32 %v1797, %v1801
        %v1804 = vshll.u32 %v1746, 16
        %v1806 = vrot.slane %v1804, 1
        %v1807 = vsel %vm1759, %v1802, %v1806
        %v1809 = vshrl.u32 %v1683, 16
        %v1811 = vshll.u32 %v1683, 16
        %v1813 = vrot.slane %v1811, 1
        %v1814 = vor.u32 %v1809, %v1813
        %v1816 = vshll.u32 %v1747, 16
        %v1818 = vrot.slane %v1816, 1
        %v1819 = vsel %vm1759, %v1814, %v1818
        %v1821 = vshrl.u32 %v1684, 16
        %v1823 = vshll.u32 %v1684, 16
        %v1825 = vrot.slane %v1823, 1
        %v1826 = vor.u32 %v1821, %v1825
        %v1828 = vshll.u32 %v1748, 16
        %v1830 = vrot.slane %v1828, 1
        %v1831 = vsel %vm1759, %v1826, %v1830
        %v1833 = vshrl.u32 %v1685, 16
        %v1835 = vshll.u32 %v1685, 16
        %v1837 = vrot.slane %v1835, 1
        %v1838 = vor.u32 %v1833, %v1837
        %v1840 = vshll.u32 %v1749, 16
        %v1842 = vrot.slane %v1840, 1
        %v1843 = vsel %vm1759, %v1838, %v1842
        %v1845 = vshrl.u32 %v1686, 16
        %v1847 = vshll.u32 %v1686, 16
        %v1849 = vrot.slane %v1847, 1
        %v1850 = vor.u32 %v1845, %v1849
        %v1852 = vshll.u32 %v1750, 16
        %v1854 = vrot.slane %v1852, 1
        %v1855 = vsel %vm1759, %v1850, %v1854
        %v1857 = vshrl.u32 %v1687, 16
        %v1859 = vshll.u32 %v1687, 16
        %v1861 = vrot.slane %v1859, 1
        %v1862 = vor.u32 %v1857, %v1861
        %v1864 = vshll.u32 %v1751, 16
        %v1866 = vrot.slane %v1864, 1
        %v1867 = vsel %vm1759, %v1862, %v1866
        %v1869 = vshrl.u32 %v1688, 16
        %v1871 = vshll.u32 %v1688, 16
        %v1873 = vrot.slane %v1871, 1
        %v1874 = vor.u32 %v1869, %v1873
        %v1876 = vshll.u32 %v1752, 16
        %v1878 = vrot.slane %v1876, 1
        %v1879 = vsel %vm1759, %v1874, %v1878
        %v1881 = vshrl.u32 %v1689, 16
        %v1883 = vshll.u32 %v1689, 16
        %v1885 = vrot.slane %v1883, 1
        %v1886 = vor.u32 %v1881, %v1885
        %v1888 = vshll.u32 %v1753, 16
        %v1890 = vrot.slane %v1888, 1
        %v1891 = vsel %vm1759, %v1886, %v1890
        %v1893 = vshrl.u32 %v1690, 16
        %v1895 = vshll.u32 %v1690, 16
        %v1897 = vrot.slane %v1895, 1
        %v1898 = vor.u32 %v1893, %v1897
        %v1900 = vshll.u32 %v1754, 16
        %v1902 = vrot.slane %v1900, 1
        %v1903 = vsel %vm1759, %v1898, %v1902
        %v1905 = vshrl.u32 %v1691, 16
        %v1907 = vshll.u32 %v1691, 16
        %v1909 = vrot.slane %v1907, 1
        %v1910 = vor.u32 %v1905, %v1909
        %v1912 = vshll.u32 %v1755, 16
        %v1914 = vrot.slane %v1912, 1
        %v1915 = vsel %vm1759, %v1910, %v1914
        %v1917 = vshrl.u32 %v1692, 16
        %v1919 = vshll.u32 %v1692, 16
        %v1921 = vrot.slane %v1919, 1
        %v1922 = vor.u32 %v1917, %v1921
        %v1924 = vshll.u32 %v1756, 16
        %v1926 = vrot.slane %v1924, 1
        %v1927 = vsel %vm1759, %v1922, %v1926
        %v1929 = vshrl.u32 %v1693, 16
        %v1931 = vshll.u32 %v1693, 16
        %v1933 = vrot.slane %v1931, 1
        %v1934 = vor.u32 %v1929, %v1933
        %v1936 = vshll.u32 %v1757, 16
        %v1938 = vrot.slane %v1936, 1
        %v1939 = vsel %vm1759, %v1934, %v1938
        %v1941 = vshrl.u32 %v1694, 16
        %v1943 = vshll.u32 %v1694, 16
        %v1945 = vrot.slane %v1943, 1
        %v1946 = vor.u32 %v1941, %v1945
        %v1948 = vshll.u32 %v1758, 16
        %v1950 = vrot.slane %v1948, 1
        %v1951 = vsel %vm1759, %v1946, %v1950
        %v1984 = vunpack.c.l.b16 %v1599
        %v1985 = vunpack.c.l.b16 %v1600
        %v1986 = vunpack.c.l.b16 %v1601
        %v1987 = vunpack.c.l.b16 %v1602
        %v1988 = vunpack.c.l.b16 %v1603
        %v1989 = vunpack.c.l.b16 %v1604
        %v1990 = vunpack.c.l.b16 %v1605
        %v1991 = vunpack.c.l.b16 %v1606
        %v1992 = vunpack.c.l.b16 %v1607
        %v1993 = vunpack.c.l.b16 %v1608
        %v1994 = vunpack.c.l.b16 %v1609
        %v1995 = vunpack.c.l.b16 %v1610
        %v1996 = vunpack.c.l.b16 %v1611
        %v1997 = vunpack.c.l.b16 %v1612
        %v1998 = vunpack.c.l.b16 %v1613
        %v1999 = vunpack.c.l.b16 %v1614
        %v2000 = vpack.c.b16 %v1648, %v1984
        %v2001 = vpack.c.b16 %v1650, %v1985
        %v2002 = vpack.c.b16 %v1652, %v1986
        %v2003 = vpack.c.b16 %v1654, %v1987
        %v2004 = vpack.c.b16 %v1656, %v1988
        %v2005 = vpack.c.b16 %v1658, %v1989
        %v2006 = vpack.c.b16 %v1660, %v1990
        %v2007 = vpack.c.b16 %v1662, %v1991
        %v2008 = vpack.c.b16 %v1664, %v1992
        %v2009 = vpack.c.b16 %v1666, %v1993
        %v2010 = vpack.c.b16 %v1668, %v1994
        %v2011 = vpack.c.b16 %v1670, %v1995
        %v2012 = vpack.c.b16 %v1672, %v1996
        %v2013 = vpack.c.b16 %v1674, %v1997
        %v2014 = vpack.c.b16 %v1676, %v1998
        %v2015 = vpack.c.b16 %v1678, %v1999
        %vm2016 = vcmask 1046528
        %v2017 = vrot.slane %v2000, 1
        %v2018 = vrot.slane %v1743, 1
        %v2019 = vsel %vm2016, %v2017, %v2018
        %v2020 = vrot.slane %v2001, 1
        %v2021 = vrot.slane %v1744, 1
        %v2022 = vsel %vm2016, %v2020, %v2021
        %v2023 = vrot.slane %v2002, 1
        %v2024 = vrot.slane %v1745, 1
        %v2025 = vsel %vm2016, %v2023, %v2024
        %v2026 = vrot.slane %v2003, 1
        %v2027 = vrot.slane %v1746, 1
        %v2028 = vsel %vm2016, %v2026, %v2027
        %v2029 = vrot.slane %v2004, 1
        %v2030 = vrot.slane %v1747, 1
        %v2031 = vsel %vm2016, %v2029, %v2030
        %v2032 = vrot.slane %v2005, 1
        %v2033 = vrot.slane %v1748, 1
        %v2034 = vsel %vm2016, %v2032, %v2033
        %v2035 = vrot.slane %v2006, 1
        %v2036 = vrot.slane %v1749, 1
        %v2037 = vsel %vm2016, %v2035, %v2036
        %v2038 = vrot.slane %v2007, 1
        %v2039 = vrot.slane %v1750, 1
        %v2040 = vsel %vm2016, %v2038, %v2039
        %v2041 = vrot.slane %v2008, 1
        %v2042 = vrot.slane %v1751, 1
        %v2043 = vsel %vm2016, %v2041, %v2042
        %v2044 = vrot.slane %v2009, 1
        %v2045 = vrot.slane %v1752, 1
        %v2046 = vsel %vm2016, %v2044, %v2045
        %v2047 = vrot.slane %v2010, 1
        %v2048 = vrot.slane %v1753, 1
        %v2049 = vsel %vm2016, %v2047, %v2048
        %v2050 = vrot.slane %v2011, 1
        %v2051 = vrot.slane %v1754, 1
        %v2052 = vsel %vm2016, %v2050, %v2051
        %v2053 = vrot.slane %v2012, 1
        %v2054 = vrot.slane %v1755, 1
        %v2055 = vsel %vm2016, %v2053, %v2054
        %v2056 = vrot.slane %v2013, 1
        %v2057 = vrot.slane %v1756, 1
        %v2058 = vsel %vm2016, %v2056, %v2057
        %v2059 = vrot.slane %v2014, 1
        %v2060 = vrot.slane %v1757, 1
        %v2061 = vsel %vm2016, %v2059, %v2060
        %v2062 = vrot.slane %v2015, 1
        %v2063 = vrot.slane %v1758, 1
        %v2064 = vsel %vm2016, %v2062, %v2063
        %v2081 = vld [vmem:[%s4] sm:$0xf]
        %v2082 = vld [vmem:[%s4 + $0x4] sm:$0xf]
        %v2083 = vld [vmem:[%s4 + $0x8] sm:$0xf]
        %v2084 = vld [vmem:[%s4 + $0xc] sm:$0xf]
        %v2085 = vld [vmem:[%s4 + $0x10] sm:$0xf]
        %v2086 = vld [vmem:[%s4 + $0x14] sm:$0xf]
        %v2087 = vld [vmem:[%s4 + $0x18] sm:$0xf]
        %v2088 = vld [vmem:[%s4 + $0x1c] sm:$0xf]
        %v2089 = vld [vmem:[%s4 + $0x20] sm:$0xf]
        %v2090 = vld [vmem:[%s4 + $0x24] sm:$0xf]
        %v2091 = vld [vmem:[%s4 + $0x28] sm:$0xf]
        %v2092 = vld [vmem:[%s4 + $0x2c] sm:$0xf]
        %v2093 = vld [vmem:[%s4 + $0x30] sm:$0xf]
        %v2094 = vld [vmem:[%s4 + $0x34] sm:$0xf]
        %v2095 = vld [vmem:[%s4 + $0x38] sm:$0xf]
        %v2096 = vld [vmem:[%s4 + $0x3c] sm:$0xf]
        %v2097 = vld [vmem:[%s4 + $0x40] sm:$0xf]
        %v2098 = vld [vmem:[%s4 + $0x44] sm:$0xf]
        %v2099 = vld [vmem:[%s4 + $0x48] sm:$0xf]
        %v2100 = vld [vmem:[%s4 + $0x4c] sm:$0xf]
        %v2101 = vld [vmem:[%s4 + $0x50] sm:$0xf]
        %v2102 = vld [vmem:[%s4 + $0x54] sm:$0xf]
        %v2103 = vld [vmem:[%s4 + $0x58] sm:$0xf]
        %v2104 = vld [vmem:[%s4 + $0x5c] sm:$0xf]
        %v2105 = vld [vmem:[%s4 + $0x60] sm:$0xf]
        %v2106 = vld [vmem:[%s4 + $0x64] sm:$0xf]
        %v2107 = vld [vmem:[%s4 + $0x68] sm:$0xf]
        %v2108 = vld [vmem:[%s4 + $0x6c] sm:$0xf]
        %v2109 = vld [vmem:[%s4 + $0x70] sm:$0xf]
        %v2110 = vld [vmem:[%s4 + $0x74] sm:$0xf]
        %v2111 = vld [vmem:[%s4 + $0x78] sm:$0xf]
        %v2112 = vld [vmem:[%s4 + $0x7c] sm:$0xf]
        %v2113 = vld [vmem:[%s4 + $0x80] sm:$0xf]
        %v2114 = vld [vmem:[%s4 + $0x84] sm:$0xf]
        %v2115 = vld [vmem:[%s4 + $0x88] sm:$0xf]
        %v2116 = vld [vmem:[%s4 + $0x8c] sm:$0xf]
        %v2117 = vld [vmem:[%s4 + $0x90] sm:$0xf]
        %v2118 = vld [vmem:[%s4 + $0x94] sm:$0xf]
        %v2119 = vld [vmem:[%s4 + $0x98] sm:$0xf]
        %v2120 = vld [vmem:[%s4 + $0x9c] sm:$0xf]
        %v2121 = vld [vmem:[%s4 + $0xa0] sm:$0xf]
        %v2122 = vld [vmem:[%s4 + $0xa4] sm:$0xf]
        %v2123 = vld [vmem:[%s4 + $0xa8] sm:$0xf]
        %v2124 = vld [vmem:[%s4 + $0xac] sm:$0xf]
        %v2125 = vld [vmem:[%s4 + $0xb0] sm:$0xf]
        %v2126 = vld [vmem:[%s4 + $0xb4] sm:$0xf]
        %v2127 = vld [vmem:[%s4 + $0xb8] sm:$0xf]
        %v2128 = vld [vmem:[%s4 + $0xbc] sm:$0xf]
        %v2129 = vld [vmem:[%s1502] sm:$0xf]
        %v2130 = vld [vmem:[%s1502 + $0x4] sm:$0xf]
        %v2131 = vld [vmem:[%s1502 + $0xc] sm:$0xf]
        %v2132 = vld [vmem:[%s1502 + $0x10] sm:$0xf]
        %v2133 = vld [vmem:[%s1502 + $0x18] sm:$0xf]
        %v2134 = vld [vmem:[%s1502 + $0x1c] sm:$0xf]
        %v2135 = vld [vmem:[%s1502 + $0x24] sm:$0xf]
        %v2136 = vld [vmem:[%s1502 + $0x28] sm:$0xf]
        %v2137 = vld [vmem:[%s1502 + $0x30] sm:$0xf]
        %v2138 = vld [vmem:[%s1502 + $0x34] sm:$0xf]
        %v2139 = vld [vmem:[%s1502 + $0x3c] sm:$0xf]
        %v2140 = vld [vmem:[%s1502 + $0x40] sm:$0xf]
        %v2141 = vld [vmem:[%s1502 + $0x48] sm:$0xf]
        %v2142 = vld [vmem:[%s1502 + $0x4c] sm:$0xf]
        %v2143 = vld [vmem:[%s1502 + $0x54] sm:$0xf]
        %v2144 = vld [vmem:[%s1502 + $0x58] sm:$0xf]
        %v2145 = vld [vmem:[%s1502 + $0x60] sm:$0xf]
        %v2146 = vld [vmem:[%s1502 + $0x64] sm:$0xf]
        %v2147 = vld [vmem:[%s1502 + $0x6c] sm:$0xf]
        %v2148 = vld [vmem:[%s1502 + $0x70] sm:$0xf]
        %v2149 = vld [vmem:[%s1502 + $0x78] sm:$0xf]
        %v2150 = vld [vmem:[%s1502 + $0x7c] sm:$0xf]
        %v2151 = vld [vmem:[%s1502 + $0x84] sm:$0xf]
        %v2152 = vld [vmem:[%s1502 + $0x88] sm:$0xf]
        %v2153 = vld [vmem:[%s1502 + $0x90] sm:$0xf]
        %v2154 = vld [vmem:[%s1502 + $0x94] sm:$0xf]
        %v2155 = vld [vmem:[%s1502 + $0x9c] sm:$0xf]
        %v2156 = vld [vmem:[%s1502 + $0xa0] sm:$0xf]
        %v2157 = vld [vmem:[%s1502 + $0xa8] sm:$0xf]
        %v2158 = vld [vmem:[%s1502 + $0xac] sm:$0xf]
        %v2159 = vld [vmem:[%s1502 + $0xb4] sm:$0xf]
        %v2160 = vld [vmem:[%s1502 + $0xb8] sm:$0xf]
        %v2161 = vld [vmem:[%s1502 + $0x8] sm:$0x1]
        %v2162 = vld [vmem:[%s1502 + $0x14] sm:$0x1]
        %v2163 = vld [vmem:[%s1502 + $0x20] sm:$0x1]
        %v2164 = vld [vmem:[%s1502 + $0x2c] sm:$0x1]
        %v2165 = vld [vmem:[%s1502 + $0x38] sm:$0x1]
        %v2166 = vld [vmem:[%s1502 + $0x44] sm:$0x1]
        %v2167 = vld [vmem:[%s1502 + $0x50] sm:$0x1]
        %v2168 = vld [vmem:[%s1502 + $0x5c] sm:$0x1]
        %v2169 = vld [vmem:[%s1502 + $0x68] sm:$0x1]
        %v2170 = vld [vmem:[%s1502 + $0x74] sm:$0x1]
        %v2171 = vld [vmem:[%s1502 + $0x80] sm:$0x1]
        %v2172 = vld [vmem:[%s1502 + $0x8c] sm:$0x1]
        %v2173 = vld [vmem:[%s1502 + $0x98] sm:$0x1]
        %v2174 = vld [vmem:[%s1502 + $0xa4] sm:$0x1]
        %v2175 = vld [vmem:[%s1502 + $0xb0] sm:$0x1]
        %v2176 = vld [vmem:[%s1502 + $0xbc] sm:$0x1]
        %v2177 = vld [vmem:[%s1502] sm:$0xe]
        %v2178 = vld [vmem:[%s1502 + $0xc] sm:$0xe]
        %v2179 = vld [vmem:[%s1502 + $0x18] sm:$0xe]
        %v2180 = vld [vmem:[%s1502 + $0x24] sm:$0xe]
        %v2181 = vld [vmem:[%s1502 + $0x30] sm:$0xe]
        %v2182 = vld [vmem:[%s1502 + $0x3c] sm:$0xe]
        %v2183 = vld [vmem:[%s1502 + $0x48] sm:$0xe]
        %v2184 = vld [vmem:[%s1502 + $0x54] sm:$0xe]
        %v2185 = vld [vmem:[%s1502 + $0x60] sm:$0xe]
        %v2186 = vld [vmem:[%s1502 + $0x6c] sm:$0xe]
        %v2187 = vld [vmem:[%s1502 + $0x78] sm:$0xe]
        %v2188 = vld [vmem:[%s1502 + $0x84] sm:$0xe]
        %v2189 = vld [vmem:[%s1502 + $0x90] sm:$0xe]
        %v2190 = vld [vmem:[%s1502 + $0x9c] sm:$0xe]
        %v2191 = vld [vmem:[%s1502 + $0xa8] sm:$0xe]
        %v2192 = vld [vmem:[%s1502 + $0xb4] sm:$0xe]
        %v2225 = vunpack.c.l.b16 %v2129
        %v2226 = vunpack.c.l.b16 %v2130
        %v2227 = vunpack.c.l.b16 %v2131
        %v2228 = vunpack.c.l.b16 %v2132
        %v2229 = vunpack.c.l.b16 %v2133
        %v2230 = vunpack.c.l.b16 %v2134
        %v2231 = vunpack.c.l.b16 %v2135
        %v2232 = vunpack.c.l.b16 %v2136
        %v2233 = vunpack.c.l.b16 %v2137
        %v2234 = vunpack.c.l.b16 %v2138
        %v2235 = vunpack.c.l.b16 %v2139
        %v2236 = vunpack.c.l.b16 %v2140
        %v2237 = vunpack.c.l.b16 %v2141
        %v2238 = vunpack.c.l.b16 %v2142
        %v2239 = vunpack.c.l.b16 %v2143
        %v2240 = vunpack.c.l.b16 %v2144
        %v2241 = vunpack.c.l.b16 %v2145
        %v2242 = vunpack.c.l.b16 %v2146
        %v2243 = vunpack.c.l.b16 %v2147
        %v2244 = vunpack.c.l.b16 %v2148
        %v2245 = vunpack.c.l.b16 %v2149
        %v2246 = vunpack.c.l.b16 %v2150
        %v2247 = vunpack.c.l.b16 %v2151
        %v2248 = vunpack.c.l.b16 %v2152
        %v2249 = vunpack.c.l.b16 %v2153
        %v2250 = vunpack.c.l.b16 %v2154
        %v2251 = vunpack.c.l.b16 %v2155
        %v2252 = vunpack.c.l.b16 %v2156
        %v2253 = vunpack.c.l.b16 %v2157
        %v2254 = vunpack.c.l.b16 %v2158
        %v2255 = vunpack.c.l.b16 %v2159
        %v2256 = vunpack.c.l.b16 %v2160
        %v2257 = vpack.c.b16 %v2226, %v2225
        %v2258 = vpack.c.b16 %v2228, %v2227
        %v2259 = vpack.c.b16 %v2230, %v2229
        %v2260 = vpack.c.b16 %v2232, %v2231
        %v2261 = vpack.c.b16 %v2234, %v2233
        %v2262 = vpack.c.b16 %v2236, %v2235
        %v2263 = vpack.c.b16 %v2238, %v2237
        %v2264 = vpack.c.b16 %v2240, %v2239
        %v2265 = vpack.c.b16 %v2242, %v2241
        %v2266 = vpack.c.b16 %v2244, %v2243
        %v2267 = vpack.c.b16 %v2246, %v2245
        %v2268 = vpack.c.b16 %v2248, %v2247
        %v2269 = vpack.c.b16 %v2250, %v2249
        %v2270 = vpack.c.b16 %v2252, %v2251
        %v2271 = vpack.c.b16 %v2254, %v2253
        %v2272 = vpack.c.b16 %v2256, %v2255
        %v2305 = vunpack.c.l.b16 %v2161
        %v2306 = vunpack.c.l.b16 %v2162
        %v2307 = vunpack.c.l.b16 %v2163
        %v2308 = vunpack.c.l.b16 %v2164
        %v2309 = vunpack.c.l.b16 %v2165
        %v2310 = vunpack.c.l.b16 %v2166
        %v2311 = vunpack.c.l.b16 %v2167
        %v2312 = vunpack.c.l.b16 %v2168
        %v2313 = vunpack.c.l.b16 %v2169
        %v2314 = vunpack.c.l.b16 %v2170
        %v2315 = vunpack.c.l.b16 %v2171
        %v2316 = vunpack.c.l.b16 %v2172
        %v2317 = vunpack.c.l.b16 %v2173
        %v2318 = vunpack.c.l.b16 %v2174
        %v2319 = vunpack.c.l.b16 %v2175
        %v2320 = vunpack.c.l.b16 %v2176
        %v2321 = vpack.c.b16 %v2305, %v2305
        %v2322 = vpack.c.b16 %v2306, %v2306
        %v2323 = vpack.c.b16 %v2307, %v2307
        %v2324 = vpack.c.b16 %v2308, %v2308
        %v2325 = vpack.c.b16 %v2309, %v2309
        %v2326 = vpack.c.b16 %v2310, %v2310
        %v2327 = vpack.c.b16 %v2311, %v2311
        %v2328 = vpack.c.b16 %v2312, %v2312
        %v2329 = vpack.c.b16 %v2313, %v2313
        %v2330 = vpack.c.b16 %v2314, %v2314
        %v2331 = vpack.c.b16 %v2315, %v2315
        %v2332 = vpack.c.b16 %v2316, %v2316
        %v2333 = vpack.c.b16 %v2317, %v2317
        %v2334 = vpack.c.b16 %v2318, %v2318
        %v2335 = vpack.c.b16 %v2319, %v2319
        %v2336 = vpack.c.b16 %v2320, %v2320
        %v2338 = vshrl.u32 %v2257, 16
        %v2340 = vshll.u32 %v2257, 16
        %v2342 = vrot.slane %v2340, 1
        %v2343 = vor.u32 %v2338, %v2342
        %v2345 = vshll.u32 %v2321, 16
        %v2347 = vrot.slane %v2345, 1
        %v2348 = vsel %vm1759, %v2343, %v2347
        %v2350 = vshrl.u32 %v2258, 16
        %v2352 = vshll.u32 %v2258, 16
        %v2354 = vrot.slane %v2352, 1
        %v2355 = vor.u32 %v2350, %v2354
        %v2357 = vshll.u32 %v2322, 16
        %v2359 = vrot.slane %v2357, 1
        %v2360 = vsel %vm1759, %v2355, %v2359
        %v2362 = vshrl.u32 %v2259, 16
        %v2364 = vshll.u32 %v2259, 16
        %v2366 = vrot.slane %v2364, 1
        %v2367 = vor.u32 %v2362, %v2366
        %v2369 = vshll.u32 %v2323, 16
        %v2371 = vrot.slane %v2369, 1
        %v2372 = vsel %vm1759, %v2367, %v2371
        %v2374 = vshrl.u32 %v2260, 16
        %v2376 = vshll.u32 %v2260, 16
        %v2378 = vrot.slane %v2376, 1
        %v2379 = vor.u32 %v2374, %v2378
        %v2381 = vshll.u32 %v2324, 16
        %v2383 = vrot.slane %v2381, 1
        %v2384 = vsel %vm1759, %v2379, %v2383
        %v2386 = vshrl.u32 %v2261, 16
        %v2388 = vshll.u32 %v2261, 16
        %v2390 = vrot.slane %v2388, 1
        %v2391 = vor.u32 %v2386, %v2390
        %v2393 = vshll.u32 %v2325, 16
        %v2395 = vrot.slane %v2393, 1
        %v2396 = vsel %vm1759, %v2391, %v2395
        %v2398 = vshrl.u32 %v2262, 16
        %v2400 = vshll.u32 %v2262, 16
        %v2402 = vrot.slane %v2400, 1
        %v2403 = vor.u32 %v2398, %v2402
        %v2405 = vshll.u32 %v2326, 16
        %v2407 = vrot.slane %v2405, 1
        %v2408 = vsel %vm1759, %v2403, %v2407
        %v2410 = vshrl.u32 %v2263, 16
        %v2412 = vshll.u32 %v2263, 16
        %v2414 = vrot.slane %v2412, 1
        %v2415 = vor.u32 %v2410, %v2414
        %v2417 = vshll.u32 %v2327, 16
        %v2419 = vrot.slane %v2417, 1
        %v2420 = vsel %vm1759, %v2415, %v2419
        %v2422 = vshrl.u32 %v2264, 16
        %v2424 = vshll.u32 %v2264, 16
        %v2426 = vrot.slane %v2424, 1
        %v2427 = vor.u32 %v2422, %v2426
        %v2429 = vshll.u32 %v2328, 16
        %v2431 = vrot.slane %v2429, 1
        %v2432 = vsel %vm1759, %v2427, %v2431
        %v2434 = vshrl.u32 %v2265, 16
        %v2436 = vshll.u32 %v2265, 16
        %v2438 = vrot.slane %v2436, 1
        %v2439 = vor.u32 %v2434, %v2438
        %v2441 = vshll.u32 %v2329, 16
        %v2443 = vrot.slane %v2441, 1
        %v2444 = vsel %vm1759, %v2439, %v2443
        %v2446 = vshrl.u32 %v2266, 16
        %v2448 = vshll.u32 %v2266, 16
        %v2450 = vrot.slane %v2448, 1
        %v2451 = vor.u32 %v2446, %v2450
        %v2453 = vshll.u32 %v2330, 16
        %v2455 = vrot.slane %v2453, 1
        %v2456 = vsel %vm1759, %v2451, %v2455
        %v2458 = vshrl.u32 %v2267, 16
        %v2460 = vshll.u32 %v2267, 16
        %v2462 = vrot.slane %v2460, 1
        %v2463 = vor.u32 %v2458, %v2462
        %v2465 = vshll.u32 %v2331, 16
        %v2467 = vrot.slane %v2465, 1
        %v2468 = vsel %vm1759, %v2463, %v2467
        %v2470 = vshrl.u32 %v2268, 16
        %v2472 = vshll.u32 %v2268, 16
        %v2474 = vrot.slane %v2472, 1
        %v2475 = vor.u32 %v2470, %v2474
        %v2477 = vshll.u32 %v2332, 16
        %v2479 = vrot.slane %v2477, 1
        %v2480 = vsel %vm1759, %v2475, %v2479
        %v2482 = vshrl.u32 %v2269, 16
        %v2484 = vshll.u32 %v2269, 16
        %v2486 = vrot.slane %v2484, 1
        %v2487 = vor.u32 %v2482, %v2486
        %v2489 = vshll.u32 %v2333, 16
        %v2491 = vrot.slane %v2489, 1
        %v2492 = vsel %vm1759, %v2487, %v2491
        %v2494 = vshrl.u32 %v2270, 16
        %v2496 = vshll.u32 %v2270, 16
        %v2498 = vrot.slane %v2496, 1
        %v2499 = vor.u32 %v2494, %v2498
        %v2501 = vshll.u32 %v2334, 16
        %v2503 = vrot.slane %v2501, 1
        %v2504 = vsel %vm1759, %v2499, %v2503
        %v2506 = vshrl.u32 %v2271, 16
        %v2508 = vshll.u32 %v2271, 16
        %v2510 = vrot.slane %v2508, 1
        %v2511 = vor.u32 %v2506, %v2510
        %v2513 = vshll.u32 %v2335, 16
        %v2515 = vrot.slane %v2513, 1
        %v2516 = vsel %vm1759, %v2511, %v2515
        %v2518 = vshrl.u32 %v2272, 16
        %v2520 = vshll.u32 %v2272, 16
        %v2522 = vrot.slane %v2520, 1
        %v2523 = vor.u32 %v2518, %v2522
        %v2525 = vshll.u32 %v2336, 16
        %v2527 = vrot.slane %v2525, 1
        %v2528 = vsel %vm1759, %v2523, %v2527
        %v2561 = vunpack.c.l.b16 %v2177
        %v2562 = vunpack.c.l.b16 %v2178
        %v2563 = vunpack.c.l.b16 %v2179
        %v2564 = vunpack.c.l.b16 %v2180
        %v2565 = vunpack.c.l.b16 %v2181
        %v2566 = vunpack.c.l.b16 %v2182
        %v2567 = vunpack.c.l.b16 %v2183
        %v2568 = vunpack.c.l.b16 %v2184
        %v2569 = vunpack.c.l.b16 %v2185
        %v2570 = vunpack.c.l.b16 %v2186
        %v2571 = vunpack.c.l.b16 %v2187
        %v2572 = vunpack.c.l.b16 %v2188
        %v2573 = vunpack.c.l.b16 %v2189
        %v2574 = vunpack.c.l.b16 %v2190
        %v2575 = vunpack.c.l.b16 %v2191
        %v2576 = vunpack.c.l.b16 %v2192
        %v2577 = vpack.c.b16 %v2226, %v2561
        %v2578 = vpack.c.b16 %v2228, %v2562
        %v2579 = vpack.c.b16 %v2230, %v2563
        %v2580 = vpack.c.b16 %v2232, %v2564
        %v2581 = vpack.c.b16 %v2234, %v2565
        %v2582 = vpack.c.b16 %v2236, %v2566
        %v2583 = vpack.c.b16 %v2238, %v2567
        %v2584 = vpack.c.b16 %v2240, %v2568
        %v2585 = vpack.c.b16 %v2242, %v2569
        %v2586 = vpack.c.b16 %v2244, %v2570
        %v2587 = vpack.c.b16 %v2246, %v2571
        %v2588 = vpack.c.b16 %v2248, %v2572
        %v2589 = vpack.c.b16 %v2250, %v2573
        %v2590 = vpack.c.b16 %v2252, %v2574
        %v2591 = vpack.c.b16 %v2254, %v2575
        %v2592 = vpack.c.b16 %v2256, %v2576
        %v2593 = vrot.slane %v2577, 1
        %v2594 = vrot.slane %v2321, 1
        %v2595 = vsel %vm2016, %v2593, %v2594
        %v2596 = vrot.slane %v2578, 1
        %v2597 = vrot.slane %v2322, 1
        %v2598 = vsel %vm2016, %v2596, %v2597
        %v2599 = vrot.slane %v2579, 1
        %v2600 = vrot.slane %v2323, 1
        %v2601 = vsel %vm2016, %v2599, %v2600
        %v2602 = vrot.slane %v2580, 1
        %v2603 = vrot.slane %v2324, 1
        %v2604 = vsel %vm2016, %v2602, %v2603
        %v2605 = vrot.slane %v2581, 1
        %v2606 = vrot.slane %v2325, 1
        %v2607 = vsel %vm2016, %v2605, %v2606
        %v2608 = vrot.slane %v2582, 1
        %v2609 = vrot.slane %v2326, 1
        %v2610 = vsel %vm2016, %v2608, %v2609
        %v2611 = vrot.slane %v2583, 1
        %v2612 = vrot.slane %v2327, 1
        %v2613 = vsel %vm2016, %v2611, %v2612
        %v2614 = vrot.slane %v2584, 1
        %v2615 = vrot.slane %v2328, 1
        %v2616 = vsel %vm2016, %v2614, %v2615
        %v2617 = vrot.slane %v2585, 1
        %v2618 = vrot.slane %v2329, 1
        %v2619 = vsel %vm2016, %v2617, %v2618
        %v2620 = vrot.slane %v2586, 1
        %v2621 = vrot.slane %v2330, 1
        %v2622 = vsel %vm2016, %v2620, %v2621
        %v2623 = vrot.slane %v2587, 1
        %v2624 = vrot.slane %v2331, 1
        %v2625 = vsel %vm2016, %v2623, %v2624
        %v2626 = vrot.slane %v2588, 1
        %v2627 = vrot.slane %v2332, 1
        %v2628 = vsel %vm2016, %v2626, %v2627
        %v2629 = vrot.slane %v2589, 1
        %v2630 = vrot.slane %v2333, 1
        %v2631 = vsel %vm2016, %v2629, %v2630
        %v2632 = vrot.slane %v2590, 1
        %v2633 = vrot.slane %v2334, 1
        %v2634 = vsel %vm2016, %v2632, %v2633
        %v2635 = vrot.slane %v2591, 1
        %v2636 = vrot.slane %v2335, 1
        %v2637 = vsel %vm2016, %v2635, %v2636
        %v2638 = vrot.slane %v2592, 1
        %v2639 = vrot.slane %v2336, 1
        %v2640 = vsel %vm2016, %v2638, %v2639
        %s2657 = scalar_lea.vmem %s4, 192
        %v2658 = vld [vmem:[%s2657] sm:$0xf]
        %v2659 = vld [vmem:[%s2657 + $0x4] sm:$0xf]
        %v2660 = vld [vmem:[%s2657 + $0x8] sm:$0xf]
        %v2661 = vld [vmem:[%s2657 + $0xc] sm:$0xf]
        %v2662 = vld [vmem:[%s2657 + $0x10] sm:$0xf]
        %v2663 = vld [vmem:[%s2657 + $0x14] sm:$0xf]
        %v2664 = vld [vmem:[%s2657 + $0x18] sm:$0xf]
        %v2665 = vld [vmem:[%s2657 + $0x1c] sm:$0xf]
        %v2666 = vld [vmem:[%s2657 + $0x20] sm:$0xf]
        %v2667 = vld [vmem:[%s2657 + $0x24] sm:$0xf]
        %v2668 = vld [vmem:[%s2657 + $0x28] sm:$0xf]
        %v2669 = vld [vmem:[%s2657 + $0x2c] sm:$0xf]
        %v2670 = vld [vmem:[%s2657 + $0x30] sm:$0xf]
        %v2671 = vld [vmem:[%s2657 + $0x34] sm:$0xf]
        %v2672 = vld [vmem:[%s2657 + $0x38] sm:$0xf]
        %v2673 = vld [vmem:[%s2657 + $0x3c] sm:$0xf]
        %v2674 = vld [vmem:[%s2657 + $0x40] sm:$0xf]
        %v2675 = vld [vmem:[%s2657 + $0x44] sm:$0xf]
        %v2676 = vld [vmem:[%s2657 + $0x48] sm:$0xf]
        %v2677 = vld [vmem:[%s2657 + $0x4c] sm:$0xf]
        %v2678 = vld [vmem:[%s2657 + $0x50] sm:$0xf]
        %v2679 = vld [vmem:[%s2657 + $0x54] sm:$0xf]
        %v2680 = vld [vmem:[%s2657 + $0x58] sm:$0xf]
        %v2681 = vld [vmem:[%s2657 + $0x5c] sm:$0xf]
        %v2682 = vld [vmem:[%s2657 + $0x60] sm:$0xf]
        %v2683 = vld [vmem:[%s2657 + $0x64] sm:$0xf]
        %v2684 = vld [vmem:[%s2657 + $0x68] sm:$0xf]
        %v2685 = vld [vmem:[%s2657 + $0x6c] sm:$0xf]
        %v2686 = vld [vmem:[%s2657 + $0x70] sm:$0xf]
        %v2687 = vld [vmem:[%s2657 + $0x74] sm:$0xf]
        %v2688 = vld [vmem:[%s2657 + $0x78] sm:$0xf]
        %v2689 = vld [vmem:[%s2657 + $0x7c] sm:$0xf]
        %v2690 = vld [vmem:[%s2657 + $0x80] sm:$0xf]
        %v2691 = vld [vmem:[%s2657 + $0x84] sm:$0xf]
        %v2692 = vld [vmem:[%s2657 + $0x88] sm:$0xf]
        %v2693 = vld [vmem:[%s2657 + $0x8c] sm:$0xf]
        %v2694 = vld [vmem:[%s2657 + $0x90] sm:$0xf]
        %v2695 = vld [vmem:[%s2657 + $0x94] sm:$0xf]
        %v2696 = vld [vmem:[%s2657 + $0x98] sm:$0xf]
        %v2697 = vld [vmem:[%s2657 + $0x9c] sm:$0xf]
        %v2698 = vld [vmem:[%s2657 + $0xa0] sm:$0xf]
        %v2699 = vld [vmem:[%s2657 + $0xa4] sm:$0xf]
        %v2700 = vld [vmem:[%s2657 + $0xa8] sm:$0xf]
        %v2701 = vld [vmem:[%s2657 + $0xac] sm:$0xf]
        %v2702 = vld [vmem:[%s2657 + $0xb0] sm:$0xf]
        %v2703 = vld [vmem:[%s2657 + $0xb4] sm:$0xf]
        %v2704 = vld [vmem:[%s2657 + $0xb8] sm:$0xf]
        %v2705 = vld [vmem:[%s2657 + $0xbc] sm:$0xf]
        %v2754 = vunpack.c.l.b16 %v2658
        %v2755 = vunpack.c.l.b16 %v2659
        %v2756 = vunpack.c.l.b16 %v2660
        %v2757 = vunpack.c.l.b16 %v2661
        %v2758 = vunpack.c.l.b16 %v2662
        %v2759 = vunpack.c.l.b16 %v2663
        %v2760 = vunpack.c.l.b16 %v2664
        %v2761 = vunpack.c.l.b16 %v2665
        %v2762 = vunpack.c.l.b16 %v2666
        %v2763 = vunpack.c.l.b16 %v2667
        %v2764 = vunpack.c.l.b16 %v2668
        %v2765 = vunpack.c.l.b16 %v2669
        %v2766 = vunpack.c.l.b16 %v2670
        %v2767 = vunpack.c.l.b16 %v2671
        %v2768 = vunpack.c.l.b16 %v2672
        %v2769 = vunpack.c.l.b16 %v2673
        %v2770 = vunpack.c.l.b16 %v2674
        %v2771 = vunpack.c.l.b16 %v2675
        %v2772 = vunpack.c.l.b16 %v2676
        %v2773 = vunpack.c.l.b16 %v2677
        %v2774 = vunpack.c.l.b16 %v2678
        %v2775 = vunpack.c.l.b16 %v2679
        %v2776 = vunpack.c.l.b16 %v2680
        %v2777 = vunpack.c.l.b16 %v2681
        %v2778 = vunpack.c.l.b16 %v2682
        %v2779 = vunpack.c.l.b16 %v2683
        %v2780 = vunpack.c.l.b16 %v2684
        %v2781 = vunpack.c.l.b16 %v2685
        %v2782 = vunpack.c.l.b16 %v2686
        %v2783 = vunpack.c.l.b16 %v2687
        %v2784 = vunpack.c.l.b16 %v2688
        %v2785 = vunpack.c.l.b16 %v2689
        %v2786 = vunpack.c.l.b16 %v2690
        %v2787 = vunpack.c.l.b16 %v2691
        %v2788 = vunpack.c.l.b16 %v2692
        %v2789 = vunpack.c.l.b16 %v2693
        %v2790 = vunpack.c.l.b16 %v2694
        %v2791 = vunpack.c.l.b16 %v2695
        %v2792 = vunpack.c.l.b16 %v2696
        %v2793 = vunpack.c.l.b16 %v2697
        %v2794 = vunpack.c.l.b16 %v2698
        %v2795 = vunpack.c.l.b16 %v2699
        %v2796 = vunpack.c.l.b16 %v2700
        %v2797 = vunpack.c.l.b16 %v2701
        %v2798 = vunpack.c.l.b16 %v2702
        %v2799 = vunpack.c.l.b16 %v2703
        %v2800 = vunpack.c.l.b16 %v2704
        %v2801 = vunpack.c.l.b16 %v2705
        %v2802 = vpack.c.b16 %v2755, %v2754
        %v2803 = vpack.c.b16 %v2757, %v2756
        %v2804 = vpack.c.b16 %v2759, %v2758
        %v2805 = vpack.c.b16 %v2761, %v2760
        %v2806 = vpack.c.b16 %v2763, %v2762
        %v2807 = vpack.c.b16 %v2765, %v2764
        %v2808 = vpack.c.b16 %v2767, %v2766
        %v2809 = vpack.c.b16 %v2769, %v2768
        %v2810 = vpack.c.b16 %v2771, %v2770
        %v2811 = vpack.c.b16 %v2773, %v2772
        %v2812 = vpack.c.b16 %v2775, %v2774
        %v2813 = vpack.c.b16 %v2777, %v2776
        %v2814 = vpack.c.b16 %v2779, %v2778
        %v2815 = vpack.c.b16 %v2781, %v2780
        %v2816 = vpack.c.b16 %v2783, %v2782
        %v2817 = vpack.c.b16 %v2785, %v2784
        %v2818 = vpack.c.b16 %v2787, %v2786
        %v2819 = vpack.c.b16 %v2789, %v2788
        %v2820 = vpack.c.b16 %v2791, %v2790
        %v2821 = vpack.c.b16 %v2793, %v2792
        %v2822 = vpack.c.b16 %v2795, %v2794
        %v2823 = vpack.c.b16 %v2797, %v2796
        %v2824 = vpack.c.b16 %v2799, %v2798
        %v2825 = vpack.c.b16 %v2801, %v2800
        %2850 = vmatprep.subr.bf16.mxu0 0
        %2851 = vmatpush1.bf16.msra.mxu0 %v2809
        %2852 = vmatprep.subr.bf16.mxu0 0
        %2853 = vmatpush1.bf16.msra.mxu0 %v2808
        %2854 = vmatprep.subr.bf16.mxu0 0
        %2855 = vmatpush1.bf16.msra.mxu0 %v2807
        %2856 = vmatprep.subr.bf16.mxu0 0
        %2857 = vmatpush1.bf16.msra.mxu0 %v2806
        %2858 = vmatprep.subr.bf16.mxu0 0
        %2859 = vmatpush1.bf16.msra.mxu0 %v2805
        %2860 = vmatprep.subr.bf16.mxu0 0
        %2861 = vmatpush1.bf16.msra.mxu0 %v2804
        %2862 = vmatprep.subr.bf16.mxu0 0
        %2863 = vmatpush1.bf16.msra.mxu0 %v2803
        %2864 = vmatprep.subr.bf16.mxu0 0
        %2865 = vmatpush1.bf16.msra.mxu0 %v2802
        %2866 = vmatprep.subr.bf16.mxu0 0
        %2867 = vmatpush2.bf16.msra.mxu0 %v2817
        %2868 = vmatprep.subr.bf16.mxu0 0
        %2869 = vmatpush2.bf16.msra.mxu0 %v2816
        %2870 = vmatprep.subr.bf16.mxu0 0
        %2871 = vmatpush2.bf16.msra.mxu0 %v2815
        %2872 = vmatprep.subr.bf16.mxu0 0
        %2873 = vmatpush2.bf16.msra.mxu0 %v2814
        %2874 = vmatprep.subr.bf16.mxu0 0
        %2875 = vmatpush2.bf16.msra.mxu0 %v2813
        %2876 = vmatprep.subr.bf16.mxu0 0
        %2877 = vmatpush2.bf16.msra.mxu0 %v2812
        %2878 = vmatprep.subr.bf16.mxu0 0
        %2879 = vmatpush2.bf16.msra.mxu0 %v2811
        %2880 = vmatprep.subr.bf16.mxu0 0
        %2881 = vmatpush2.bf16.msra.mxu0 %v2810
        %2882 = vmatprep.mubr.bf16.mxu0 %v2348
        %2883 = vmatmul.mubr.bf16.gmra.mxu0 %v2257
        %v2884 = vpop.f32.mrf.mxu0
        %v2885 = vadd.f32 0.0, %v2884
        %v2886 = vpop.f32.mrf.mxu0
        %v2887 = vpop.f32.mrf.mxu0
        %v2888 = vadd.f32 0.0, %v2887
        %v2889 = vpop.f32.mrf.mxu0
        %2890 = vmatprep.mubr.bf16.mxu0 %v2360
        %2891 = vmatmul.mubr.bf16.gmra.mxu0 %v2258
        %v2892 = vpop.f32.mrf.mxu0
        %v2893 = vadd.f32 0.0, %v2892
        %v2894 = vpop.f32.mrf.mxu0
        %v2895 = vpop.f32.mrf.mxu0
        %v2896 = vadd.f32 0.0, %v2895
        %v2897 = vpop.f32.mrf.mxu0
        %2898 = vmatprep.mubr.bf16.mxu0 %v2372
        %2899 = vmatmul.mubr.bf16.gmra.mxu0 %v2259
        %v2900 = vpop.f32.mrf.mxu0
        %v2901 = vadd.f32 0.0, %v2900
        %v2902 = vpop.f32.mrf.mxu0
        %v2903 = vpop.f32.mrf.mxu0
        %v2904 = vadd.f32 0.0, %v2903
        %v2905 = vpop.f32.mrf.mxu0
        %2906 = vmatprep.mubr.bf16.mxu0 %v2384
        %2907 = vmatmul.mubr.bf16.gmra.mxu0 %v2260
        %v2908 = vpop.f32.mrf.mxu0
        %v2909 = vadd.f32 0.0, %v2908
        %v2910 = vpop.f32.mrf.mxu0
        %v2911 = vpop.f32.mrf.mxu0
        %v2912 = vadd.f32 0.0, %v2911
        %v2913 = vpop.f32.mrf.mxu0
        %2914 = vmatprep.mubr.bf16.mxu0 %v2396
        %2915 = vmatmul.mubr.bf16.gmra.mxu0 %v2261
        %v2916 = vpop.f32.mrf.mxu0
        %v2917 = vadd.f32 0.0, %v2916
        %v2918 = vpop.f32.mrf.mxu0
        %v2919 = vpop.f32.mrf.mxu0
        %v2920 = vadd.f32 0.0, %v2919
        %v2921 = vpop.f32.mrf.mxu0
        %2922 = vmatprep.mubr.bf16.mxu0 %v2408
        %2923 = vmatmul.mubr.bf16.gmra.mxu0 %v2262
        %v2924 = vpop.f32.mrf.mxu0
        %v2925 = vadd.f32 0.0, %v2924
        %v2926 = vpop.f32.mrf.mxu0
        %v2927 = vpop.f32.mrf.mxu0
        %v2928 = vadd.f32 0.0, %v2927
        %v2929 = vpop.f32.mrf.mxu0
        %2930 = vmatprep.mubr.bf16.mxu0 %v2420
        %2931 = vmatmul.mubr.bf16.gmra.mxu0 %v2263
        %v2932 = vpop.f32.mrf.mxu0
        %v2933 = vadd.f32 0.0, %v2932
        %v2934 = vpop.f32.mrf.mxu0
        %v2935 = vpop.f32.mrf.mxu0
        %v2936 = vadd.f32 0.0, %v2935
        %v2937 = vpop.f32.mrf.mxu0
        %2938 = vmatprep.mubr.bf16.mxu0 %v2432
        %2939 = vmatmul.mubr.bf16.gmra.mxu0 %v2264
        %v2940 = vpop.f32.mrf.mxu0
        %v2941 = vadd.f32 0.0, %v2940
        %v2942 = vpop.f32.mrf.mxu0
        %v2943 = vpop.f32.mrf.mxu0
        %v2944 = vadd.f32 0.0, %v2943
        %v2945 = vpop.f32.mrf.mxu0
        %2946 = vmatprep.mubr.bf16.mxu0 %v2444
        %2947 = vmatmul.mubr.bf16.gmra.mxu0 %v2265
        %v2948 = vpop.f32.mrf.mxu0
        %v2949 = vadd.f32 0.0, %v2948
        %v2950 = vpop.f32.mrf.mxu0
        %v2951 = vpop.f32.mrf.mxu0
        %v2952 = vadd.f32 0.0, %v2951
        %v2953 = vpop.f32.mrf.mxu0
        %2954 = vmatprep.mubr.bf16.mxu0 %v2456
        %2955 = vmatmul.mubr.bf16.gmra.mxu0 %v2266
        %v2956 = vpop.f32.mrf.mxu0
        %v2957 = vadd.f32 0.0, %v2956
        %v2958 = vpop.f32.mrf.mxu0
        %v2959 = vpop.f32.mrf.mxu0
        %v2960 = vadd.f32 0.0, %v2959
        %v2961 = vpop.f32.mrf.mxu0
        %2962 = vmatprep.mubr.bf16.mxu0 %v2468
        %2963 = vmatmul.mubr.bf16.gmra.mxu0 %v2267
        %v2964 = vpop.f32.mrf.mxu0
        %v2965 = vadd.f32 0.0, %v2964
        %v2966 = vpop.f32.mrf.mxu0
        %v2967 = vpop.f32.mrf.mxu0
        %v2968 = vadd.f32 0.0, %v2967
        %v2969 = vpop.f32.mrf.mxu0
        %2970 = vmatprep.mubr.bf16.mxu0 %v2480
        %2971 = vmatmul.mubr.bf16.gmra.mxu0 %v2268
        %v2972 = vpop.f32.mrf.mxu0
        %v2973 = vadd.f32 0.0, %v2972
        %v2974 = vpop.f32.mrf.mxu0
        %v2975 = vpop.f32.mrf.mxu0
        %v2976 = vadd.f32 0.0, %v2975
        %v2977 = vpop.f32.mrf.mxu0
        %2978 = vmatprep.mubr.bf16.mxu0 %v2492
        %2979 = vmatmul.mubr.bf16.gmra.mxu0 %v2269
        %v2980 = vpop.f32.mrf.mxu0
        %v2981 = vadd.f32 0.0, %v2980
        %v2982 = vpop.f32.mrf.mxu0
        %v2983 = vpop.f32.mrf.mxu0
        %v2984 = vadd.f32 0.0, %v2983
        %v2985 = vpop.f32.mrf.mxu0
        %2986 = vmatprep.mubr.bf16.mxu0 %v2504
        %2987 = vmatmul.mubr.bf16.gmra.mxu0 %v2270
        %v2988 = vpop.f32.mrf.mxu0
        %v2989 = vadd.f32 0.0, %v2988
        %v2990 = vpop.f32.mrf.mxu0
        %v2991 = vpop.f32.mrf.mxu0
        %v2992 = vadd.f32 0.0, %v2991
        %v2993 = vpop.f32.mrf.mxu0
        %2994 = vmatprep.mubr.bf16.mxu0 %v2516
        %2995 = vmatmul.mubr.bf16.gmra.mxu0 %v2271
        %v2996 = vpop.f32.mrf.mxu0
        %v2997 = vadd.f32 0.0, %v2996
        %v2998 = vpop.f32.mrf.mxu0
        %v2999 = vpop.f32.mrf.mxu0
        %v3000 = vadd.f32 0.0, %v2999
        %v3001 = vpop.f32.mrf.mxu0
        %3002 = vmatprep.mubr.bf16.mxu0 %v2528
        %3003 = vmatmul.mubr.bf16.gmra.mxu0 %v2272
        %v3004 = vpop.f32.mrf.mxu0
        %v3005 = vadd.f32 0.0, %v3004
        %v3006 = vpop.f32.mrf.mxu0
        %v3007 = vpop.f32.mrf.mxu0
        %v3008 = vadd.f32 0.0, %v3007
        %v3009 = vpop.f32.mrf.mxu0
        %3010 = vdwg.mxu0
        %3011 = vmatprep.subr.bf16.mxu0 0
        %3012 = vmatpush1.bf16.msra.mxu0 %v2825
        %3013 = vmatprep.subr.bf16.mxu0 0
        %3014 = vmatpush1.bf16.msra.mxu0 %v2824
        %3015 = vmatprep.subr.bf16.mxu0 0
        %3016 = vmatpush1.bf16.msra.mxu0 %v2823
        %3017 = vmatprep.subr.bf16.mxu0 0
        %3018 = vmatpush1.bf16.msra.mxu0 %v2822
        %3019 = vmatprep.subr.bf16.mxu0 0
        %3020 = vmatpush1.bf16.msra.mxu0 %v2821
        %3021 = vmatprep.subr.bf16.mxu0 0
        %3022 = vmatpush1.bf16.msra.mxu0 %v2820
        %3023 = vmatprep.subr.bf16.mxu0 0
        %3024 = vmatpush1.bf16.msra.mxu0 %v2819
        %3025 = vmatprep.subr.bf16.mxu0 0
        %3026 = vmatpush1.bf16.msra.mxu0 %v2818
        %3027 = vmatprep.subr.bf16.mxu0 0
        %3028 = vmatpush2.bf16.msra.mxu0 0
        %3029 = vmatprep.subr.bf16.mxu0 0
        %3030 = vmatpush2.bf16.msra.mxu0 0
        %3031 = vmatprep.subr.bf16.mxu0 0
        %3032 = vmatpush2.bf16.msra.mxu0 0
        %3033 = vmatprep.subr.bf16.mxu0 0
        %3034 = vmatpush2.bf16.msra.mxu0 0
        %3035 = vmatprep.subr.bf16.mxu0 0
        %3036 = vmatpush2.bf16.msra.mxu0 0
        %3037 = vmatprep.subr.bf16.mxu0 0
        %3038 = vmatpush2.bf16.msra.mxu0 0
        %3039 = vmatprep.subr.bf16.mxu0 0
        %3040 = vmatpush2.bf16.msra.mxu0 0
        %3041 = vmatprep.subr.bf16.mxu0 0
        %3042 = vmatpush2.bf16.msra.mxu0 0
        %3043 = vmatprep.mubr.bf16.mxu0 0
        %3044 = vmatmul.mubr.bf16.gmra.mxu0 %v2595
        %v3045 = vpop.f32.mrf.mxu0
        %v3046 = vadd.f32 %v2885, %v3045
        %v3047 = vpop.f32.mrf.mxu0
        %v3048 = vpop.f32.mrf.mxu0
        %v3049 = vadd.f32 %v2888, %v3048
        %v3050 = vpop.f32.mrf.mxu0
        %3051 = vmatprep.mubr.bf16.mxu0 0
        %3052 = vmatmul.mubr.bf16.gmra.mxu0 %v2598
        %v3053 = vpop.f32.mrf.mxu0
        %v3054 = vadd.f32 %v2893, %v3053
        %v3055 = vpop.f32.mrf.mxu0
        %v3056 = vpop.f32.mrf.mxu0
        %v3057 = vadd.f32 %v2896, %v3056
        %v3058 = vpop.f32.mrf.mxu0
        %3059 = vmatprep.mubr.bf16.mxu0 0
        %3060 = vmatmul.mubr.bf16.gmra.mxu0 %v2601
        %v3061 = vpop.f32.mrf.mxu0
        %v3062 = vadd.f32 %v2901, %v3061
        %v3063 = vpop.f32.mrf.mxu0
        %v3064 = vpop.f32.mrf.mxu0
        %v3065 = vadd.f32 %v2904, %v3064
        %v3066 = vpop.f32.mrf.mxu0
        %3067 = vmatprep.mubr.bf16.mxu0 0
        %3068 = vmatmul.mubr.bf16.gmra.mxu0 %v2604
        %v3069 = vpop.f32.mrf.mxu0
        %v3070 = vadd.f32 %v2909, %v3069
        %v3071 = vpop.f32.mrf.mxu0
        %v3072 = vpop.f32.mrf.mxu0
        %v3073 = vadd.f32 %v2912, %v3072
        %v3074 = vpop.f32.mrf.mxu0
        %3075 = vmatprep.mubr.bf16.mxu0 0
        %3076 = vmatmul.mubr.bf16.gmra.mxu0 %v2607
        %v3077 = vpop.f32.mrf.mxu0
        %v3078 = vadd.f32 %v2917, %v3077
        %v3079 = vpop.f32.mrf.mxu0
        %v3080 = vpop.f32.mrf.mxu0
        %v3081 = vadd.f32 %v2920, %v3080
        %v3082 = vpop.f32.mrf.mxu0
        %3083 = vmatprep.mubr.bf16.mxu0 0
        %3084 = vmatmul.mubr.bf16.gmra.mxu0 %v2610
        %v3085 = vpop.f32.mrf.mxu0
        %v3086 = vadd.f32 %v2925, %v3085
        %v3087 = vpop.f32.mrf.mxu0
        %v3088 = vpop.f32.mrf.mxu0
        %v3089 = vadd.f32 %v2928, %v3088
        %v3090 = vpop.f32.mrf.mxu0
        %3091 = vmatprep.mubr.bf16.mxu0 0
        %3092 = vmatmul.mubr.bf16.gmra.mxu0 %v2613
        %v3093 = vpop.f32.mrf.mxu0
        %v3094 = vadd.f32 %v2933, %v3093
        %v3095 = vpop.f32.mrf.mxu0
        %v3096 = vpop.f32.mrf.mxu0
        %v3097 = vadd.f32 %v2936, %v3096
        %v3098 = vpop.f32.mrf.mxu0
        %3099 = vmatprep.mubr.bf16.mxu0 0
        %3100 = vmatmul.mubr.bf16.gmra.mxu0 %v2616
        %v3101 = vpop.f32.mrf.mxu0
        %v3102 = vadd.f32 %v2941, %v3101
        %v3103 = vpop.f32.mrf.mxu0
        %v3104 = vpop.f32.mrf.mxu0
        %v3105 = vadd.f32 %v2944, %v3104
        %v3106 = vpop.f32.mrf.mxu0
        %3107 = vmatprep.mubr.bf16.mxu0 0
        %3108 = vmatmul.mubr.bf16.gmra.mxu0 %v2619
        %v3109 = vpop.f32.mrf.mxu0
        %v3110 = vadd.f32 %v2949, %v3109
        %v3111 = vpop.f32.mrf.mxu0
        %v3112 = vpop.f32.mrf.mxu0
        %v3113 = vadd.f32 %v2952, %v3112
        %v3114 = vpop.f32.mrf.mxu0
        %3115 = vmatprep.mubr.bf16.mxu0 0
        %3116 = vmatmul.mubr.bf16.gmra.mxu0 %v2622
        %v3117 = vpop.f32.mrf.mxu0
        %v3118 = vadd.f32 %v2957, %v3117
        %v3119 = vpop.f32.mrf.mxu0
        %v3120 = vpop.f32.mrf.mxu0
        %v3121 = vadd.f32 %v2960, %v3120
        %v3122 = vpop.f32.mrf.mxu0
        %3123 = vmatprep.mubr.bf16.mxu0 0
        %3124 = vmatmul.mubr.bf16.gmra.mxu0 %v2625
        %v3125 = vpop.f32.mrf.mxu0
        %v3126 = vadd.f32 %v2965, %v3125
        %v3127 = vpop.f32.mrf.mxu0
        %v3128 = vpop.f32.mrf.mxu0
        %v3129 = vadd.f32 %v2968, %v3128
        %v3130 = vpop.f32.mrf.mxu0
        %3131 = vmatprep.mubr.bf16.mxu0 0
        %3132 = vmatmul.mubr.bf16.gmra.mxu0 %v2628
        %v3133 = vpop.f32.mrf.mxu0
        %v3134 = vadd.f32 %v2973, %v3133
        %v3135 = vpop.f32.mrf.mxu0
        %v3136 = vpop.f32.mrf.mxu0
        %v3137 = vadd.f32 %v2976, %v3136
        %v3138 = vpop.f32.mrf.mxu0
        %3139 = vmatprep.mubr.bf16.mxu0 0
        %3140 = vmatmul.mubr.bf16.gmra.mxu0 %v2631
        %v3141 = vpop.f32.mrf.mxu0
        %v3142 = vadd.f32 %v2981, %v3141
        %v3143 = vpop.f32.mrf.mxu0
        %v3144 = vpop.f32.mrf.mxu0
        %v3145 = vadd.f32 %v2984, %v3144
        %v3146 = vpop.f32.mrf.mxu0
        %3147 = vmatprep.mubr.bf16.mxu0 0
        %3148 = vmatmul.mubr.bf16.gmra.mxu0 %v2634
        %v3149 = vpop.f32.mrf.mxu0
        %v3150 = vadd.f32 %v2989, %v3149
        %v3151 = vpop.f32.mrf.mxu0
        %v3152 = vpop.f32.mrf.mxu0
        %v3153 = vadd.f32 %v2992, %v3152
        %v3154 = vpop.f32.mrf.mxu0
        %3155 = vmatprep.mubr.bf16.mxu0 0
        %3156 = vmatmul.mubr.bf16.gmra.mxu0 %v2637
        %v3157 = vpop.f32.mrf.mxu0
        %v3158 = vadd.f32 %v2997, %v3157
        %v3159 = vpop.f32.mrf.mxu0
        %v3160 = vpop.f32.mrf.mxu0
        %v3161 = vadd.f32 %v3000, %v3160
        %v3162 = vpop.f32.mrf.mxu0
        %3163 = vmatprep.mubr.bf16.mxu0 0
        %3164 = vmatmul.mubr.bf16.gmra.mxu0 %v2640
        %v3165 = vpop.f32.mrf.mxu0
        %v3166 = vadd.f32 %v3005, %v3165
        %v3167 = vpop.f32.mrf.mxu0
        %v3168 = vpop.f32.mrf.mxu0
        %v3169 = vadd.f32 %v3008, %v3168
        %v3170 = vpop.f32.mrf.mxu0
        %3171 = vdwg.mxu0
        %v3220 = vunpack.c.l.b16 %v2081
        %v3221 = vunpack.c.l.b16 %v2082
        %v3222 = vunpack.c.l.b16 %v2083
        %v3223 = vunpack.c.l.b16 %v2084
        %v3224 = vunpack.c.l.b16 %v2085
        %v3225 = vunpack.c.l.b16 %v2086
        %v3226 = vunpack.c.l.b16 %v2087
        %v3227 = vunpack.c.l.b16 %v2088
        %v3228 = vunpack.c.l.b16 %v2089
        %v3229 = vunpack.c.l.b16 %v2090
        %v3230 = vunpack.c.l.b16 %v2091
        %v3231 = vunpack.c.l.b16 %v2092
        %v3232 = vunpack.c.l.b16 %v2093
        %v3233 = vunpack.c.l.b16 %v2094
        %v3234 = vunpack.c.l.b16 %v2095
        %v3235 = vunpack.c.l.b16 %v2096
        %v3236 = vunpack.c.l.b16 %v2097
        %v3237 = vunpack.c.l.b16 %v2098
        %v3238 = vunpack.c.l.b16 %v2099
        %v3239 = vunpack.c.l.b16 %v2100
        %v3240 = vunpack.c.l.b16 %v2101
        %v3241 = vunpack.c.l.b16 %v2102
        %v3242 = vunpack.c.l.b16 %v2103
        %v3243 = vunpack.c.l.b16 %v2104
        %v3244 = vunpack.c.l.b16 %v2105
        %v3245 = vunpack.c.l.b16 %v2106
        %v3246 = vunpack.c.l.b16 %v2107
        %v3247 = vunpack.c.l.b16 %v2108
        %v3248 = vunpack.c.l.b16 %v2109
        %v3249 = vunpack.c.l.b16 %v2110
        %v3250 = vunpack.c.l.b16 %v2111
        %v3251 = vunpack.c.l.b16 %v2112
        %v3252 = vunpack.c.l.b16 %v2113
        %v3253 = vunpack.c.l.b16 %v2114
        %v3254 = vunpack.c.l.b16 %v2115
        %v3255 = vunpack.c.l.b16 %v2116
        %v3256 = vunpack.c.l.b16 %v2117
        %v3257 = vunpack.c.l.b16 %v2118
        %v3258 = vunpack.c.l.b16 %v2119
        %v3259 = vunpack.c.l.b16 %v2120
        %v3260 = vunpack.c.l.b16 %v2121
        %v3261 = vunpack.c.l.b16 %v2122
        %v3262 = vunpack.c.l.b16 %v2123
        %v3263 = vunpack.c.l.b16 %v2124
        %v3264 = vunpack.c.l.b16 %v2125
        %v3265 = vunpack.c.l.b16 %v2126
        %v3266 = vunpack.c.l.b16 %v2127
        %v3267 = vunpack.c.l.b16 %v2128
        %v3268 = vpack.c.b16 %v3221, %v3220
        %v3269 = vpack.c.b16 %v3223, %v3222
        %v3270 = vpack.c.b16 %v3225, %v3224
        %v3271 = vpack.c.b16 %v3227, %v3226
        %v3272 = vpack.c.b16 %v3229, %v3228
        %v3273 = vpack.c.b16 %v3231, %v3230
        %v3274 = vpack.c.b16 %v3233, %v3232
        %v3275 = vpack.c.b16 %v3235, %v3234
        %v3276 = vpack.c.b16 %v3237, %v3236
        %v3277 = vpack.c.b16 %v3239, %v3238
        %v3278 = vpack.c.b16 %v3241, %v3240
        %v3279 = vpack.c.b16 %v3243, %v3242
        %v3280 = vpack.c.b16 %v3245, %v3244
        %v3281 = vpack.c.b16 %v3247, %v3246
        %v3282 = vpack.c.b16 %v3249, %v3248
        %v3283 = vpack.c.b16 %v3251, %v3250
        %v3284 = vpack.c.b16 %v3253, %v3252
        %v3285 = vpack.c.b16 %v3255, %v3254
        %v3286 = vpack.c.b16 %v3257, %v3256
        %v3287 = vpack.c.b16 %v3259, %v3258
        %v3288 = vpack.c.b16 %v3261, %v3260
        %v3289 = vpack.c.b16 %v3263, %v3262
        %v3290 = vpack.c.b16 %v3265, %v3264
        %v3291 = vpack.c.b16 %v3267, %v3266
        %3316 = vmatprep.subr.bf16.mxu0 0
        %3317 = vmatpush1.bf16.msra.mxu0 %v3275
        %3318 = vmatprep.subr.bf16.mxu0 0
        %3319 = vmatpush1.bf16.msra.mxu0 %v3274
        %3320 = vmatprep.subr.bf16.mxu0 0
        %3321 = vmatpush1.bf16.msra.mxu0 %v3273
        %3322 = vmatprep.subr.bf16.mxu0 0
        %3323 = vmatpush1.bf16.msra.mxu0 %v3272
        %3324 = vmatprep.subr.bf16.mxu0 0
        %3325 = vmatpush1.bf16.msra.mxu0 %v3271
        %3326 = vmatprep.subr.bf16.mxu0 0
        %3327 = vmatpush1.bf16.msra.mxu0 %v3270
        %3328 = vmatprep.subr.bf16.mxu0 0
        %3329 = vmatpush1.bf16.msra.mxu0 %v3269
        %3330 = vmatprep.subr.bf16.mxu0 0
        %3331 = vmatpush1.bf16.msra.mxu0 %v3268
        %3332 = vmatprep.subr.bf16.mxu0 0
        %3333 = vmatpush2.bf16.msra.mxu0 %v3283
        %3334 = vmatprep.subr.bf16.mxu0 0
        %3335 = vmatpush2.bf16.msra.mxu0 %v3282
        %3336 = vmatprep.subr.bf16.mxu0 0
        %3337 = vmatpush2.bf16.msra.mxu0 %v3281
        %3338 = vmatprep.subr.bf16.mxu0 0
        %3339 = vmatpush2.bf16.msra.mxu0 %v3280
        %3340 = vmatprep.subr.bf16.mxu0 0
        %3341 = vmatpush2.bf16.msra.mxu0 %v3279
        %3342 = vmatprep.subr.bf16.mxu0 0
        %3343 = vmatpush2.bf16.msra.mxu0 %v3278
        %3344 = vmatprep.subr.bf16.mxu0 0
        %3345 = vmatpush2.bf16.msra.mxu0 %v3277
        %3346 = vmatprep.subr.bf16.mxu0 0
        %3347 = vmatpush2.bf16.msra.mxu0 %v3276
        %3348 = vmatprep.mubr.bf16.mxu0 %v1771
        %3349 = vmatmul.mubr.bf16.gmra.mxu0 %v1679
        %v3350 = vpop.f32.mrf.mxu0
        %v3351 = vadd.f32 %v3046, %v3350
        %v3352 = vpop.f32.mrf.mxu0
        %v3353 = vpop.f32.mrf.mxu0
        %v3354 = vadd.f32 %v3049, %v3353
        %v3355 = vpop.f32.mrf.mxu0
        %3356 = vmatprep.mubr.bf16.mxu0 %v1783
        %3357 = vmatmul.mubr.bf16.gmra.mxu0 %v1680
        %v3358 = vpop.f32.mrf.mxu0
        %v3359 = vadd.f32 %v3054, %v3358
        %v3360 = vpop.f32.mrf.mxu0
        %v3361 = vpop.f32.mrf.mxu0
        %v3362 = vadd.f32 %v3057, %v3361
        %v3363 = vpop.f32.mrf.mxu0
        %3364 = vmatprep.mubr.bf16.mxu0 %v1795
        %3365 = vmatmul.mubr.bf16.gmra.mxu0 %v1681
        %v3366 = vpop.f32.mrf.mxu0
        %v3367 = vadd.f32 %v3062, %v3366
        %v3368 = vpop.f32.mrf.mxu0
        %v3369 = vpop.f32.mrf.mxu0
        %v3370 = vadd.f32 %v3065, %v3369
        %v3371 = vpop.f32.mrf.mxu0
        %3372 = vmatprep.mubr.bf16.mxu0 %v1807
        %3373 = vmatmul.mubr.bf16.gmra.mxu0 %v1682
        %v3374 = vpop.f32.mrf.mxu0
        %v3375 = vadd.f32 %v3070, %v3374
        %v3376 = vpop.f32.mrf.mxu0
        %v3377 = vpop.f32.mrf.mxu0
        %v3378 = vadd.f32 %v3073, %v3377
        %v3379 = vpop.f32.mrf.mxu0
        %3380 = vmatprep.mubr.bf16.mxu0 %v1819
        %3381 = vmatmul.mubr.bf16.gmra.mxu0 %v1683
        %v3382 = vpop.f32.mrf.mxu0
        %v3383 = vadd.f32 %v3078, %v3382
        %v3384 = vpop.f32.mrf.mxu0
        %v3385 = vpop.f32.mrf.mxu0
        %v3386 = vadd.f32 %v3081, %v3385
        %v3387 = vpop.f32.mrf.mxu0
        %3388 = vmatprep.mubr.bf16.mxu0 %v1831
        %3389 = vmatmul.mubr.bf16.gmra.mxu0 %v1684
        %v3390 = vpop.f32.mrf.mxu0
        %v3391 = vadd.f32 %v3086, %v3390
        %v3392 = vpop.f32.mrf.mxu0
        %v3393 = vpop.f32.mrf.mxu0
        %v3394 = vadd.f32 %v3089, %v3393
        %v3395 = vpop.f32.mrf.mxu0
        %3396 = vmatprep.mubr.bf16.mxu0 %v1843
        %3397 = vmatmul.mubr.bf16.gmra.mxu0 %v1685
        %v3398 = vpop.f32.mrf.mxu0
        %v3399 = vadd.f32 %v3094, %v3398
        %v3400 = vpop.f32.mrf.mxu0
        %v3401 = vpop.f32.mrf.mxu0
        %v3402 = vadd.f32 %v3097, %v3401
        %v3403 = vpop.f32.mrf.mxu0
        %3404 = vmatprep.mubr.bf16.mxu0 %v1855
        %3405 = vmatmul.mubr.bf16.gmra.mxu0 %v1686
        %v3406 = vpop.f32.mrf.mxu0
        %v3407 = vadd.f32 %v3102, %v3406
        %v3408 = vpop.f32.mrf.mxu0
        %v3409 = vpop.f32.mrf.mxu0
        %v3410 = vadd.f32 %v3105, %v3409
        %v3411 = vpop.f32.mrf.mxu0
        %3412 = vmatprep.mubr.bf16.mxu0 %v1867
        %3413 = vmatmul.mubr.bf16.gmra.mxu0 %v1687
        %v3414 = vpop.f32.mrf.mxu0
        %v3415 = vadd.f32 %v3110, %v3414
        %v3416 = vpop.f32.mrf.mxu0
        %v3417 = vpop.f32.mrf.mxu0
        %v3418 = vadd.f32 %v3113, %v3417
        %v3419 = vpop.f32.mrf.mxu0
        %3420 = vmatprep.mubr.bf16.mxu0 %v1879
        %3421 = vmatmul.mubr.bf16.gmra.mxu0 %v1688
        %v3422 = vpop.f32.mrf.mxu0
        %v3423 = vadd.f32 %v3118, %v3422
        %v3424 = vpop.f32.mrf.mxu0
        %v3425 = vpop.f32.mrf.mxu0
        %v3426 = vadd.f32 %v3121, %v3425
        %v3427 = vpop.f32.mrf.mxu0
        %3428 = vmatprep.mubr.bf16.mxu0 %v1891
        %3429 = vmatmul.mubr.bf16.gmra.mxu0 %v1689
        %v3430 = vpop.f32.mrf.mxu0
        %v3431 = vadd.f32 %v3126, %v3430
        %v3432 = vpop.f32.mrf.mxu0
        %v3433 = vpop.f32.mrf.mxu0
        %v3434 = vadd.f32 %v3129, %v3433
        %v3435 = vpop.f32.mrf.mxu0
        %3436 = vmatprep.mubr.bf16.mxu0 %v1903
        %3437 = vmatmul.mubr.bf16.gmra.mxu0 %v1690
        %v3438 = vpop.f32.mrf.mxu0
        %v3439 = vadd.f32 %v3134, %v3438
        %v3440 = vpop.f32.mrf.mxu0
        %v3441 = vpop.f32.mrf.mxu0
        %v3442 = vadd.f32 %v3137, %v3441
        %v3443 = vpop.f32.mrf.mxu0
        %3444 = vmatprep.mubr.bf16.mxu0 %v1915
        %3445 = vmatmul.mubr.bf16.gmra.mxu0 %v1691
        %v3446 = vpop.f32.mrf.mxu0
        %v3447 = vadd.f32 %v3142, %v3446
        %v3448 = vpop.f32.mrf.mxu0
        %v3449 = vpop.f32.mrf.mxu0
        %v3450 = vadd.f32 %v3145, %v3449
        %v3451 = vpop.f32.mrf.mxu0
        %3452 = vmatprep.mubr.bf16.mxu0 %v1927
        %3453 = vmatmul.mubr.bf16.gmra.mxu0 %v1692
        %v3454 = vpop.f32.mrf.mxu0
        %v3455 = vadd.f32 %v3150, %v3454
        %v3456 = vpop.f32.mrf.mxu0
        %v3457 = vpop.f32.mrf.mxu0
        %v3458 = vadd.f32 %v3153, %v3457
        %v3459 = vpop.f32.mrf.mxu0
        %3460 = vmatprep.mubr.bf16.mxu0 %v1939
        %3461 = vmatmul.mubr.bf16.gmra.mxu0 %v1693
        %v3462 = vpop.f32.mrf.mxu0
        %v3463 = vadd.f32 %v3158, %v3462
        %v3464 = vpop.f32.mrf.mxu0
        %v3465 = vpop.f32.mrf.mxu0
        %v3466 = vadd.f32 %v3161, %v3465
        %v3467 = vpop.f32.mrf.mxu0
        %3468 = vmatprep.mubr.bf16.mxu0 %v1951
        %3469 = vmatmul.mubr.bf16.gmra.mxu0 %v1694
        %v3470 = vpop.f32.mrf.mxu0
        %v3471 = vadd.f32 %v3166, %v3470
        %v3472 = vpop.f32.mrf.mxu0
        %v3473 = vpop.f32.mrf.mxu0
        %v3474 = vadd.f32 %v3169, %v3473
        %v3475 = vpop.f32.mrf.mxu0
        %3476 = vdwg.mxu0
        %3477 = vmatprep.subr.bf16.mxu0 0
        %3478 = vmatpush1.bf16.msra.mxu0 %v3291
        %3479 = vmatprep.subr.bf16.mxu0 0
        %3480 = vmatpush1.bf16.msra.mxu0 %v3290
        %3481 = vmatprep.subr.bf16.mxu0 0
        %3482 = vmatpush1.bf16.msra.mxu0 %v3289
        %3483 = vmatprep.subr.bf16.mxu0 0
        %3484 = vmatpush1.bf16.msra.mxu0 %v3288
        %3485 = vmatprep.subr.bf16.mxu0 0
        %3486 = vmatpush1.bf16.msra.mxu0 %v3287
        %3487 = vmatprep.subr.bf16.mxu0 0
        %3488 = vmatpush1.bf16.msra.mxu0 %v3286
        %3489 = vmatprep.subr.bf16.mxu0 0
        %3490 = vmatpush1.bf16.msra.mxu0 %v3285
        %3491 = vmatprep.subr.bf16.mxu0 0
        %3492 = vmatpush1.bf16.msra.mxu0 %v3284
        %3493 = vmatprep.subr.bf16.mxu0 0
        %3494 = vmatpush2.bf16.msra.mxu0 0
        %3495 = vmatprep.subr.bf16.mxu0 0
        %3496 = vmatpush2.bf16.msra.mxu0 0
        %3497 = vmatprep.subr.bf16.mxu0 0
        %3498 = vmatpush2.bf16.msra.mxu0 0
        %3499 = vmatprep.subr.bf16.mxu0 0
        %3500 = vmatpush2.bf16.msra.mxu0 0
        %3501 = vmatprep.subr.bf16.mxu0 0
        %3502 = vmatpush2.bf16.msra.mxu0 0
        %3503 = vmatprep.subr.bf16.mxu0 0
        %3504 = vmatpush2.bf16.msra.mxu0 0
        %3505 = vmatprep.subr.bf16.mxu0 0
        %3506 = vmatpush2.bf16.msra.mxu0 0
        %3507 = vmatprep.subr.bf16.mxu0 0
        %3508 = vmatpush2.bf16.msra.mxu0 0
        %3509 = vmatprep.mubr.bf16.mxu0 0
        %3510 = vmatmul.mubr.bf16.gmra.mxu0 %v2019
        %v3511 = vpop.f32.mrf.mxu0
        %v3512 = vadd.f32 %v3351, %v3511
        %v3513 = vpop.f32.mrf.mxu0
        %v3514 = vpop.f32.mrf.mxu0
        %v3515 = vadd.f32 %v3354, %v3514
        %v3516 = vpop.f32.mrf.mxu0
        %3517 = vmatprep.mubr.bf16.mxu0 0
        %3518 = vmatmul.mubr.bf16.gmra.mxu0 %v2022
        %v3519 = vpop.f32.mrf.mxu0
        %v3520 = vadd.f32 %v3359, %v3519
        %v3521 = vpop.f32.mrf.mxu0
        %v3522 = vpop.f32.mrf.mxu0
        %v3523 = vadd.f32 %v3362, %v3522
        %v3524 = vpop.f32.mrf.mxu0
        %3525 = vmatprep.mubr.bf16.mxu0 0
        %3526 = vmatmul.mubr.bf16.gmra.mxu0 %v2025
        %v3527 = vpop.f32.mrf.mxu0
        %v3528 = vadd.f32 %v3367, %v3527
        %v3529 = vpop.f32.mrf.mxu0
        %v3530 = vpop.f32.mrf.mxu0
        %v3531 = vadd.f32 %v3370, %v3530
        %v3532 = vpop.f32.mrf.mxu0
        %3533 = vmatprep.mubr.bf16.mxu0 0
        %3534 = vmatmul.mubr.bf16.gmra.mxu0 %v2028
        %v3535 = vpop.f32.mrf.mxu0
        %v3536 = vadd.f32 %v3375, %v3535
        %v3537 = vpop.f32.mrf.mxu0
        %v3538 = vpop.f32.mrf.mxu0
        %v3539 = vadd.f32 %v3378, %v3538
        %v3540 = vpop.f32.mrf.mxu0
        %3541 = vmatprep.mubr.bf16.mxu0 0
        %3542 = vmatmul.mubr.bf16.gmra.mxu0 %v2031
        %v3543 = vpop.f32.mrf.mxu0
        %v3544 = vadd.f32 %v3383, %v3543
        %v3545 = vpop.f32.mrf.mxu0
        %v3546 = vpop.f32.mrf.mxu0
        %v3547 = vadd.f32 %v3386, %v3546
        %v3548 = vpop.f32.mrf.mxu0
        %3549 = vmatprep.mubr.bf16.mxu0 0
        %3550 = vmatmul.mubr.bf16.gmra.mxu0 %v2034
        %v3551 = vpop.f32.mrf.mxu0
        %v3552 = vadd.f32 %v3391, %v3551
        %v3553 = vpop.f32.mrf.mxu0
        %v3554 = vpop.f32.mrf.mxu0
        %v3555 = vadd.f32 %v3394, %v3554
        %v3556 = vpop.f32.mrf.mxu0
        %3557 = vmatprep.mubr.bf16.mxu0 0
        %3558 = vmatmul.mubr.bf16.gmra.mxu0 %v2037
        %v3559 = vpop.f32.mrf.mxu0
        %v3560 = vadd.f32 %v3399, %v3559
        %v3561 = vpop.f32.mrf.mxu0
        %v3562 = vpop.f32.mrf.mxu0
        %v3563 = vadd.f32 %v3402, %v3562
        %v3564 = vpop.f32.mrf.mxu0
        %3565 = vmatprep.mubr.bf16.mxu0 0
        %3566 = vmatmul.mubr.bf16.gmra.mxu0 %v2040
        %v3567 = vpop.f32.mrf.mxu0
        %v3568 = vadd.f32 %v3407, %v3567
        %v3569 = vpop.f32.mrf.mxu0
        %v3570 = vpop.f32.mrf.mxu0
        %v3571 = vadd.f32 %v3410, %v3570
        %v3572 = vpop.f32.mrf.mxu0
        %3573 = vmatprep.mubr.bf16.mxu0 0
        %3574 = vmatmul.mubr.bf16.gmra.mxu0 %v2043
        %v3575 = vpop.f32.mrf.mxu0
        %v3576 = vadd.f32 %v3415, %v3575
        %v3577 = vpop.f32.mrf.mxu0
        %v3578 = vpop.f32.mrf.mxu0
        %v3579 = vadd.f32 %v3418, %v3578
        %v3580 = vpop.f32.mrf.mxu0
        %3581 = vmatprep.mubr.bf16.mxu0 0
        %3582 = vmatmul.mubr.bf16.gmra.mxu0 %v2046
        %v3583 = vpop.f32.mrf.mxu0
        %v3584 = vadd.f32 %v3423, %v3583
        %v3585 = vpop.f32.mrf.mxu0
        %v3586 = vpop.f32.mrf.mxu0
        %v3587 = vadd.f32 %v3426, %v3586
        %v3588 = vpop.f32.mrf.mxu0
        %3589 = vmatprep.mubr.bf16.mxu0 0
        %3590 = vmatmul.mubr.bf16.gmra.mxu0 %v2049
        %v3591 = vpop.f32.mrf.mxu0
        %v3592 = vadd.f32 %v3431, %v3591
        %v3593 = vpop.f32.mrf.mxu0
        %v3594 = vpop.f32.mrf.mxu0
        %v3595 = vadd.f32 %v3434, %v3594
        %v3596 = vpop.f32.mrf.mxu0
        %3597 = vmatprep.mubr.bf16.mxu0 0
        %3598 = vmatmul.mubr.bf16.gmra.mxu0 %v2052
        %v3599 = vpop.f32.mrf.mxu0
        %v3600 = vadd.f32 %v3439, %v3599
        %v3601 = vpop.f32.mrf.mxu0
        %v3602 = vpop.f32.mrf.mxu0
        %v3603 = vadd.f32 %v3442, %v3602
        %v3604 = vpop.f32.mrf.mxu0
        %3605 = vmatprep.mubr.bf16.mxu0 0
        %3606 = vmatmul.mubr.bf16.gmra.mxu0 %v2055
        %v3607 = vpop.f32.mrf.mxu0
        %v3608 = vadd.f32 %v3447, %v3607
        %v3609 = vpop.f32.mrf.mxu0
        %v3610 = vpop.f32.mrf.mxu0
        %v3611 = vadd.f32 %v3450, %v3610
        %v3612 = vpop.f32.mrf.mxu0
        %3613 = vmatprep.mubr.bf16.mxu0 0
        %3614 = vmatmul.mubr.bf16.gmra.mxu0 %v2058
        %v3615 = vpop.f32.mrf.mxu0
        %v3616 = vadd.f32 %v3455, %v3615
        %v3617 = vpop.f32.mrf.mxu0
        %v3618 = vpop.f32.mrf.mxu0
        %v3619 = vadd.f32 %v3458, %v3618
        %v3620 = vpop.f32.mrf.mxu0
        %3621 = vmatprep.mubr.bf16.mxu0 0
        %3622 = vmatmul.mubr.bf16.gmra.mxu0 %v2061
        %v3623 = vpop.f32.mrf.mxu0
        %v3624 = vadd.f32 %v3463, %v3623
        %v3625 = vpop.f32.mrf.mxu0
        %v3626 = vpop.f32.mrf.mxu0
        %v3627 = vadd.f32 %v3466, %v3626
        %v3628 = vpop.f32.mrf.mxu0
        %3629 = vmatprep.mubr.bf16.mxu0 0
        %3630 = vmatmul.mubr.bf16.gmra.mxu0 %v2064
        %v3631 = vpop.f32.mrf.mxu0
        %v3632 = vadd.f32 %v3471, %v3631
        %v3633 = vpop.f32.mrf.mxu0
        %v3634 = vpop.f32.mrf.mxu0
        %v3635 = vadd.f32 %v3474, %v3634
        %v3636 = vpop.f32.mrf.mxu0
        %3637 = vdwg.mxu0
        %s3638 = scalar_lea.vmem [#allocation2], 24
        %v3639 = vld [vmem:[%s3638] sm:$0xf]
        %v3640 = vld [vmem:[%s3638 + $0x4] sm:$0xf]
        %v3641 = vld [vmem:[%s3638 + $0xc] sm:$0xf]
        %v3642 = vld [vmem:[%s3638 + $0x10] sm:$0xf]
        %v3643 = vld [vmem:[%s3638 + $0x18] sm:$0xf]
        %v3644 = vld [vmem:[%s3638 + $0x1c] sm:$0xf]
        %v3645 = vld [vmem:[%s3638 + $0x24] sm:$0xf]
        %v3646 = vld [vmem:[%s3638 + $0x28] sm:$0xf]
        %v3647 = vld [vmem:[%s3638 + $0x30] sm:$0xf]
        %v3648 = vld [vmem:[%s3638 + $0x34] sm:$0xf]
        %v3649 = vld [vmem:[%s3638 + $0x3c] sm:$0xf]
        %v3650 = vld [vmem:[%s3638 + $0x40] sm:$0xf]
        %v3651 = vld [vmem:[%s3638 + $0x48] sm:$0xf]
        %v3652 = vld [vmem:[%s3638 + $0x4c] sm:$0xf]
        %v3653 = vld [vmem:[%s3638 + $0x54] sm:$0xf]
        %v3654 = vld [vmem:[%s3638 + $0x58] sm:$0xf]
        %v3655 = vld [vmem:[%s3638 + $0x60] sm:$0xf]
        %v3656 = vld [vmem:[%s3638 + $0x64] sm:$0xf]
        %v3657 = vld [vmem:[%s3638 + $0x6c] sm:$0xf]
        %v3658 = vld [vmem:[%s3638 + $0x70] sm:$0xf]
        %v3659 = vld [vmem:[%s3638 + $0x78] sm:$0xf]
        %v3660 = vld [vmem:[%s3638 + $0x7c] sm:$0xf]
        %v3661 = vld [vmem:[%s3638 + $0x84] sm:$0xf]
        %v3662 = vld [vmem:[%s3638 + $0x88] sm:$0xf]
        %v3663 = vld [vmem:[%s3638 + $0x90] sm:$0xf]
        %v3664 = vld [vmem:[%s3638 + $0x94] sm:$0xf]
        %v3665 = vld [vmem:[%s3638 + $0x9c] sm:$0xf]
        %v3666 = vld [vmem:[%s3638 + $0xa0] sm:$0xf]
        %v3667 = vld [vmem:[%s3638 + $0xa8] sm:$0xf]
        %v3668 = vld [vmem:[%s3638 + $0xac] sm:$0xf]
        %v3669 = vld [vmem:[%s3638 + $0xb4] sm:$0xf]
        %v3670 = vld [vmem:[%s3638 + $0xb8] sm:$0xf]
        %v3671 = vld [vmem:[%s3638 + $0x8] sm:$0x1]
        %v3672 = vld [vmem:[%s3638 + $0x14] sm:$0x1]
        %v3673 = vld [vmem:[%s3638 + $0x20] sm:$0x1]
        %v3674 = vld [vmem:[%s3638 + $0x2c] sm:$0x1]
        %v3675 = vld [vmem:[%s3638 + $0x38] sm:$0x1]
        %v3676 = vld [vmem:[%s3638 + $0x44] sm:$0x1]
        %v3677 = vld [vmem:[%s3638 + $0x50] sm:$0x1]
        %v3678 = vld [vmem:[%s3638 + $0x5c] sm:$0x1]
        %v3679 = vld [vmem:[%s3638 + $0x68] sm:$0x1]
        %v3680 = vld [vmem:[%s3638 + $0x74] sm:$0x1]
        %v3681 = vld [vmem:[%s3638 + $0x80] sm:$0x1]
        %v3682 = vld [vmem:[%s3638 + $0x8c] sm:$0x1]
        %v3683 = vld [vmem:[%s3638 + $0x98] sm:$0x1]
        %v3684 = vld [vmem:[%s3638 + $0xa4] sm:$0x1]
        %v3685 = vld [vmem:[%s3638 + $0xb0] sm:$0x1]
        %v3686 = vld [vmem:[%s3638 + $0xbc] sm:$0x1]
        %v3687 = vld [vmem:[%s3638] sm:$0xe]
        %v3688 = vld [vmem:[%s3638 + $0xc] sm:$0xe]
        %v3689 = vld [vmem:[%s3638 + $0x18] sm:$0xe]
        %v3690 = vld [vmem:[%s3638 + $0x24] sm:$0xe]
        %v3691 = vld [vmem:[%s3638 + $0x30] sm:$0xe]
        %v3692 = vld [vmem:[%s3638 + $0x3c] sm:$0xe]
        %v3693 = vld [vmem:[%s3638 + $0x48] sm:$0xe]
        %v3694 = vld [vmem:[%s3638 + $0x54] sm:$0xe]
        %v3695 = vld [vmem:[%s3638 + $0x60] sm:$0xe]
        %v3696 = vld [vmem:[%s3638 + $0x6c] sm:$0xe]
        %v3697 = vld [vmem:[%s3638 + $0x78] sm:$0xe]
        %v3698 = vld [vmem:[%s3638 + $0x84] sm:$0xe]
        %v3699 = vld [vmem:[%s3638 + $0x90] sm:$0xe]
        %v3700 = vld [vmem:[%s3638 + $0x9c] sm:$0xe]
        %v3701 = vld [vmem:[%s3638 + $0xa8] sm:$0xe]
        %v3702 = vld [vmem:[%s3638 + $0xb4] sm:$0xe]
        %v3735 = vunpack.c.l.b16 %v3639
        %v3736 = vunpack.c.l.b16 %v3640
        %v3737 = vunpack.c.l.b16 %v3641
        %v3738 = vunpack.c.l.b16 %v3642
        %v3739 = vunpack.c.l.b16 %v3643
        %v3740 = vunpack.c.l.b16 %v3644
        %v3741 = vunpack.c.l.b16 %v3645
        %v3742 = vunpack.c.l.b16 %v3646
        %v3743 = vunpack.c.l.b16 %v3647
        %v3744 = vunpack.c.l.b16 %v3648
        %v3745 = vunpack.c.l.b16 %v3649
        %v3746 = vunpack.c.l.b16 %v3650
        %v3747 = vunpack.c.l.b16 %v3651
        %v3748 = vunpack.c.l.b16 %v3652
        %v3749 = vunpack.c.l.b16 %v3653
        %v3750 = vunpack.c.l.b16 %v3654
        %v3751 = vunpack.c.l.b16 %v3655
        %v3752 = vunpack.c.l.b16 %v3656
        %v3753 = vunpack.c.l.b16 %v3657
        %v3754 = vunpack.c.l.b16 %v3658
        %v3755 = vunpack.c.l.b16 %v3659
        %v3756 = vunpack.c.l.b16 %v3660
        %v3757 = vunpack.c.l.b16 %v3661
        %v3758 = vunpack.c.l.b16 %v3662
        %v3759 = vunpack.c.l.b16 %v3663
        %v3760 = vunpack.c.l.b16 %v3664
        %v3761 = vunpack.c.l.b16 %v3665
        %v3762 = vunpack.c.l.b16 %v3666
        %v3763 = vunpack.c.l.b16 %v3667
        %v3764 = vunpack.c.l.b16 %v3668
        %v3765 = vunpack.c.l.b16 %v3669
        %v3766 = vunpack.c.l.b16 %v3670
        %v3767 = vpack.c.b16 %v3736, %v3735
        %v3768 = vpack.c.b16 %v3738, %v3737
        %v3769 = vpack.c.b16 %v3740, %v3739
        %v3770 = vpack.c.b16 %v3742, %v3741
        %v3771 = vpack.c.b16 %v3744, %v3743
        %v3772 = vpack.c.b16 %v3746, %v3745
        %v3773 = vpack.c.b16 %v3748, %v3747
        %v3774 = vpack.c.b16 %v3750, %v3749
        %v3775 = vpack.c.b16 %v3752, %v3751
        %v3776 = vpack.c.b16 %v3754, %v3753
        %v3777 = vpack.c.b16 %v3756, %v3755
        %v3778 = vpack.c.b16 %v3758, %v3757
        %v3779 = vpack.c.b16 %v3760, %v3759
        %v3780 = vpack.c.b16 %v3762, %v3761
        %v3781 = vpack.c.b16 %v3764, %v3763
        %v3782 = vpack.c.b16 %v3766, %v3765
        %v3815 = vunpack.c.l.b16 %v3671
        %v3816 = vunpack.c.l.b16 %v3672
        %v3817 = vunpack.c.l.b16 %v3673
        %v3818 = vunpack.c.l.b16 %v3674
        %v3819 = vunpack.c.l.b16 %v3675
        %v3820 = vunpack.c.l.b16 %v3676
        %v3821 = vunpack.c.l.b16 %v3677
        %v3822 = vunpack.c.l.b16 %v3678
        %v3823 = vunpack.c.l.b16 %v3679
        %v3824 = vunpack.c.l.b16 %v3680
        %v3825 = vunpack.c.l.b16 %v3681
        %v3826 = vunpack.c.l.b16 %v3682
        %v3827 = vunpack.c.l.b16 %v3683
        %v3828 = vunpack.c.l.b16 %v3684
        %v3829 = vunpack.c.l.b16 %v3685
        %v3830 = vunpack.c.l.b16 %v3686
        %v3831 = vpack.c.b16 %v3815, %v3815
        %v3832 = vpack.c.b16 %v3816, %v3816
        %v3833 = vpack.c.b16 %v3817, %v3817
        %v3834 = vpack.c.b16 %v3818, %v3818
        %v3835 = vpack.c.b16 %v3819, %v3819
        %v3836 = vpack.c.b16 %v3820, %v3820
        %v3837 = vpack.c.b16 %v3821, %v3821
        %v3838 = vpack.c.b16 %v3822, %v3822
        %v3839 = vpack.c.b16 %v3823, %v3823
        %v3840 = vpack.c.b16 %v3824, %v3824
        %v3841 = vpack.c.b16 %v3825, %v3825
        %v3842 = vpack.c.b16 %v3826, %v3826
        %v3843 = vpack.c.b16 %v3827, %v3827
        %v3844 = vpack.c.b16 %v3828, %v3828
        %v3845 = vpack.c.b16 %v3829, %v3829
        %v3846 = vpack.c.b16 %v3830, %v3830
        %v3848 = vshrl.u32 %v3767, 16
        %v3850 = vshll.u32 %v3767, 16
        %v3852 = vrot.slane %v3850, 1
        %v3853 = vor.u32 %v3848, %v3852
        %v3855 = vshll.u32 %v3831, 16
        %v3857 = vrot.slane %v3855, 1
        %v3858 = vsel %vm1759, %v3853, %v3857
        %v3860 = vshrl.u32 %v3768, 16
        %v3862 = vshll.u32 %v3768, 16
        %v3864 = vrot.slane %v3862, 1
        %v3865 = vor.u32 %v3860, %v3864
        %v3867 = vshll.u32 %v3832, 16
        %v3869 = vrot.slane %v3867, 1
        %v3870 = vsel %vm1759, %v3865, %v3869
        %v3872 = vshrl.u32 %v3769, 16
        %v3874 = vshll.u32 %v3769, 16
        %v3876 = vrot.slane %v3874, 1
        %v3877 = vor.u32 %v3872, %v3876
        %v3879 = vshll.u32 %v3833, 16
        %v3881 = vrot.slane %v3879, 1
        %v3882 = vsel %vm1759, %v3877, %v3881
        %v3884 = vshrl.u32 %v3770, 16
        %v3886 = vshll.u32 %v3770, 16
        %v3888 = vrot.slane %v3886, 1
        %v3889 = vor.u32 %v3884, %v3888
        %v3891 = vshll.u32 %v3834, 16
        %v3893 = vrot.slane %v3891, 1
        %v3894 = vsel %vm1759, %v3889, %v3893
        %v3896 = vshrl.u32 %v3771, 16
        %v3898 = vshll.u32 %v3771, 16
        %v3900 = vrot.slane %v3898, 1
        %v3901 = vor.u32 %v3896, %v3900
        %v3903 = vshll.u32 %v3835, 16
        %v3905 = vrot.slane %v3903, 1
        %v3906 = vsel %vm1759, %v3901, %v3905
        %v3908 = vshrl.u32 %v3772, 16
        %v3910 = vshll.u32 %v3772, 16
        %v3912 = vrot.slane %v3910, 1
        %v3913 = vor.u32 %v3908, %v3912
        %v3915 = vshll.u32 %v3836, 16
        %v3917 = vrot.slane %v3915, 1
        %v3918 = vsel %vm1759, %v3913, %v3917
        %v3920 = vshrl.u32 %v3773, 16
        %v3922 = vshll.u32 %v3773, 16
        %v3924 = vrot.slane %v3922, 1
        %v3925 = vor.u32 %v3920, %v3924
        %v3927 = vshll.u32 %v3837, 16
        %v3929 = vrot.slane %v3927, 1
        %v3930 = vsel %vm1759, %v3925, %v3929
        %v3932 = vshrl.u32 %v3774, 16
        %v3934 = vshll.u32 %v3774, 16
        %v3936 = vrot.slane %v3934, 1
        %v3937 = vor.u32 %v3932, %v3936
        %v3939 = vshll.u32 %v3838, 16
        %v3941 = vrot.slane %v3939, 1
        %v3942 = vsel %vm1759, %v3937, %v3941
        %v3944 = vshrl.u32 %v3775, 16
        %v3946 = vshll.u32 %v3775, 16
        %v3948 = vrot.slane %v3946, 1
        %v3949 = vor.u32 %v3944, %v3948
        %v3951 = vshll.u32 %v3839, 16
        %v3953 = vrot.slane %v3951, 1
        %v3954 = vsel %vm1759, %v3949, %v3953
        %v3956 = vshrl.u32 %v3776, 16
        %v3958 = vshll.u32 %v3776, 16
        %v3960 = vrot.slane %v3958, 1
        %v3961 = vor.u32 %v3956, %v3960
        %v3963 = vshll.u32 %v3840, 16
        %v3965 = vrot.slane %v3963, 1
        %v3966 = vsel %vm1759, %v3961, %v3965
        %v3968 = vshrl.u32 %v3777, 16
        %v3970 = vshll.u32 %v3777, 16
        %v3972 = vrot.slane %v3970, 1
        %v3973 = vor.u32 %v3968, %v3972
        %v3975 = vshll.u32 %v3841, 16
        %v3977 = vrot.slane %v3975, 1
        %v3978 = vsel %vm1759, %v3973, %v3977
        %v3980 = vshrl.u32 %v3778, 16
        %v3982 = vshll.u32 %v3778, 16
        %v3984 = vrot.slane %v3982, 1
        %v3985 = vor.u32 %v3980, %v3984
        %v3987 = vshll.u32 %v3842, 16
        %v3989 = vrot.slane %v3987, 1
        %v3990 = vsel %vm1759, %v3985, %v3989
        %v3992 = vshrl.u32 %v3779, 16
        %v3994 = vshll.u32 %v3779, 16
        %v3996 = vrot.slane %v3994, 1
        %v3997 = vor.u32 %v3992, %v3996
        %v3999 = vshll.u32 %v3843, 16
        %v4001 = vrot.slane %v3999, 1
        %v4002 = vsel %vm1759, %v3997, %v4001
        %v4004 = vshrl.u32 %v3780, 16
        %v4006 = vshll.u32 %v3780, 16
        %v4008 = vrot.slane %v4006, 1
        %v4009 = vor.u32 %v4004, %v4008
        %v4011 = vshll.u32 %v3844, 16
        %v4013 = vrot.slane %v4011, 1
        %v4014 = vsel %vm1759, %v4009, %v4013
        %v4016 = vshrl.u32 %v3781, 16
        %v4018 = vshll.u32 %v3781, 16
        %v4020 = vrot.slane %v4018, 1
        %v4021 = vor.u32 %v4016, %v4020
        %v4023 = vshll.u32 %v3845, 16
        %v4025 = vrot.slane %v4023, 1
        %v4026 = vsel %vm1759, %v4021, %v4025
        %v4028 = vshrl.u32 %v3782, 16
        %v4030 = vshll.u32 %v3782, 16
        %v4032 = vrot.slane %v4030, 1
        %v4033 = vor.u32 %v4028, %v4032
        %v4035 = vshll.u32 %v3846, 16
        %v4037 = vrot.slane %v4035, 1
        %v4038 = vsel %vm1759, %v4033, %v4037
        %v4071 = vunpack.c.l.b16 %v3687
        %v4072 = vunpack.c.l.b16 %v3688
        %v4073 = vunpack.c.l.b16 %v3689
        %v4074 = vunpack.c.l.b16 %v3690
        %v4075 = vunpack.c.l.b16 %v3691
        %v4076 = vunpack.c.l.b16 %v3692
        %v4077 = vunpack.c.l.b16 %v3693
        %v4078 = vunpack.c.l.b16 %v3694
        %v4079 = vunpack.c.l.b16 %v3695
        %v4080 = vunpack.c.l.b16 %v3696
        %v4081 = vunpack.c.l.b16 %v3697
        %v4082 = vunpack.c.l.b16 %v3698
        %v4083 = vunpack.c.l.b16 %v3699
        %v4084 = vunpack.c.l.b16 %v3700
        %v4085 = vunpack.c.l.b16 %v3701
        %v4086 = vunpack.c.l.b16 %v3702
        %v4087 = vpack.c.b16 %v3736, %v4071
        %v4088 = vpack.c.b16 %v3738, %v4072
        %v4089 = vpack.c.b16 %v3740, %v4073
        %v4090 = vpack.c.b16 %v3742, %v4074
        %v4091 = vpack.c.b16 %v3744, %v4075
        %v4092 = vpack.c.b16 %v3746, %v4076
        %v4093 = vpack.c.b16 %v3748, %v4077
        %v4094 = vpack.c.b16 %v3750, %v4078
        %v4095 = vpack.c.b16 %v3752, %v4079
        %v4096 = vpack.c.b16 %v3754, %v4080
        %v4097 = vpack.c.b16 %v3756, %v4081
        %v4098 = vpack.c.b16 %v3758, %v4082
        %v4099 = vpack.c.b16 %v3760, %v4083
        %v4100 = vpack.c.b16 %v3762, %v4084
        %v4101 = vpack.c.b16 %v3764, %v4085
        %v4102 = vpack.c.b16 %v3766, %v4086
        %v4103 = vrot.slane %v4087, 1
        %v4104 = vrot.slane %v3831, 1
        %v4105 = vsel %vm2016, %v4103, %v4104
        %v4106 = vrot.slane %v4088, 1
        %v4107 = vrot.slane %v3832, 1
        %v4108 = vsel %vm2016, %v4106, %v4107
        %v4109 = vrot.slane %v4089, 1
        %v4110 = vrot.slane %v3833, 1
        %v4111 = vsel %vm2016, %v4109, %v4110
        %v4112 = vrot.slane %v4090, 1
        %v4113 = vrot.slane %v3834, 1
        %v4114 = vsel %vm2016, %v4112, %v4113
        %v4115 = vrot.slane %v4091, 1
        %v4116 = vrot.slane %v3835, 1
        %v4117 = vsel %vm2016, %v4115, %v4116
        %v4118 = vrot.slane %v4092, 1
        %v4119 = vrot.slane %v3836, 1
        %v4120 = vsel %vm2016, %v4118, %v4119
        %v4121 = vrot.slane %v4093, 1
        %v4122 = vrot.slane %v3837, 1
        %v4123 = vsel %vm2016, %v4121, %v4122
        %v4124 = vrot.slane %v4094, 1
        %v4125 = vrot.slane %v3838, 1
        %v4126 = vsel %vm2016, %v4124, %v4125
        %v4127 = vrot.slane %v4095, 1
        %v4128 = vrot.slane %v3839, 1
        %v4129 = vsel %vm2016, %v4127, %v4128
        %v4130 = vrot.slane %v4096, 1
        %v4131 = vrot.slane %v3840, 1
        %v4132 = vsel %vm2016, %v4130, %v4131
        %v4133 = vrot.slane %v4097, 1
        %v4134 = vrot.slane %v3841, 1
        %v4135 = vsel %vm2016, %v4133, %v4134
        %v4136 = vrot.slane %v4098, 1
        %v4137 = vrot.slane %v3842, 1
        %v4138 = vsel %vm2016, %v4136, %v4137
        %v4139 = vrot.slane %v4099, 1
        %v4140 = vrot.slane %v3843, 1
        %v4141 = vsel %vm2016, %v4139, %v4140
        %v4142 = vrot.slane %v4100, 1
        %v4143 = vrot.slane %v3844, 1
        %v4144 = vsel %vm2016, %v4142, %v4143
        %v4145 = vrot.slane %v4101, 1
        %v4146 = vrot.slane %v3845, 1
        %v4147 = vsel %vm2016, %v4145, %v4146
        %v4148 = vrot.slane %v4102, 1
        %v4149 = vrot.slane %v3846, 1
        %v4150 = vsel %vm2016, %v4148, %v4149
        %s4167 = scalar_lea.vmem %s4, 384
        %v4168 = vld [vmem:[%s4167] sm:$0xf]
        %v4169 = vld [vmem:[%s4167 + $0x4] sm:$0xf]
        %v4170 = vld [vmem:[%s4167 + $0x8] sm:$0xf]
        %v4171 = vld [vmem:[%s4167 + $0xc] sm:$0xf]
        %v4172 = vld [vmem:[%s4167 + $0x10] sm:$0xf]
        %v4173 = vld [vmem:[%s4167 + $0x14] sm:$0xf]
        %v4174 = vld [vmem:[%s4167 + $0x18] sm:$0xf]
        %v4175 = vld [vmem:[%s4167 + $0x1c] sm:$0xf]
        %v4176 = vld [vmem:[%s4167 + $0x20] sm:$0xf]
        %v4177 = vld [vmem:[%s4167 + $0x24] sm:$0xf]
        %v4178 = vld [vmem:[%s4167 + $0x28] sm:$0xf]
        %v4179 = vld [vmem:[%s4167 + $0x2c] sm:$0xf]
        %v4180 = vld [vmem:[%s4167 + $0x30] sm:$0xf]
        %v4181 = vld [vmem:[%s4167 + $0x34] sm:$0xf]
        %v4182 = vld [vmem:[%s4167 + $0x38] sm:$0xf]
        %v4183 = vld [vmem:[%s4167 + $0x3c] sm:$0xf]
        %v4184 = vld [vmem:[%s4167 + $0x40] sm:$0xf]
        %v4185 = vld [vmem:[%s4167 + $0x44] sm:$0xf]
        %v4186 = vld [vmem:[%s4167 + $0x48] sm:$0xf]
        %v4187 = vld [vmem:[%s4167 + $0x4c] sm:$0xf]
        %v4188 = vld [vmem:[%s4167 + $0x50] sm:$0xf]
        %v4189 = vld [vmem:[%s4167 + $0x54] sm:$0xf]
        %v4190 = vld [vmem:[%s4167 + $0x58] sm:$0xf]
        %v4191 = vld [vmem:[%s4167 + $0x5c] sm:$0xf]
        %v4192 = vld [vmem:[%s4167 + $0x60] sm:$0xf]
        %v4193 = vld [vmem:[%s4167 + $0x64] sm:$0xf]
        %v4194 = vld [vmem:[%s4167 + $0x68] sm:$0xf]
        %v4195 = vld [vmem:[%s4167 + $0x6c] sm:$0xf]
        %v4196 = vld [vmem:[%s4167 + $0x70] sm:$0xf]
        %v4197 = vld [vmem:[%s4167 + $0x74] sm:$0xf]
        %v4198 = vld [vmem:[%s4167 + $0x78] sm:$0xf]
        %v4199 = vld [vmem:[%s4167 + $0x7c] sm:$0xf]
        %v4200 = vld [vmem:[%s4167 + $0x80] sm:$0xf]
        %v4201 = vld [vmem:[%s4167 + $0x84] sm:$0xf]
        %v4202 = vld [vmem:[%s4167 + $0x88] sm:$0xf]
        %v4203 = vld [vmem:[%s4167 + $0x8c] sm:$0xf]
        %v4204 = vld [vmem:[%s4167 + $0x90] sm:$0xf]
        %v4205 = vld [vmem:[%s4167 + $0x94] sm:$0xf]
        %v4206 = vld [vmem:[%s4167 + $0x98] sm:$0xf]
        %v4207 = vld [vmem:[%s4167 + $0x9c] sm:$0xf]
        %v4208 = vld [vmem:[%s4167 + $0xa0] sm:$0xf]
        %v4209 = vld [vmem:[%s4167 + $0xa4] sm:$0xf]
        %v4210 = vld [vmem:[%s4167 + $0xa8] sm:$0xf]
        %v4211 = vld [vmem:[%s4167 + $0xac] sm:$0xf]
        %v4212 = vld [vmem:[%s4167 + $0xb0] sm:$0xf]
        %v4213 = vld [vmem:[%s4167 + $0xb4] sm:$0xf]
        %v4214 = vld [vmem:[%s4167 + $0xb8] sm:$0xf]
        %v4215 = vld [vmem:[%s4167 + $0xbc] sm:$0xf]
        %v4264 = vunpack.c.l.b16 %v4168
        %v4265 = vunpack.c.l.b16 %v4169
        %v4266 = vunpack.c.l.b16 %v4170
        %v4267 = vunpack.c.l.b16 %v4171
        %v4268 = vunpack.c.l.b16 %v4172
        %v4269 = vunpack.c.l.b16 %v4173
        %v4270 = vunpack.c.l.b16 %v4174
        %v4271 = vunpack.c.l.b16 %v4175
        %v4272 = vunpack.c.l.b16 %v4176
        %v4273 = vunpack.c.l.b16 %v4177
        %v4274 = vunpack.c.l.b16 %v4178
        %v4275 = vunpack.c.l.b16 %v4179
        %v4276 = vunpack.c.l.b16 %v4180
        %v4277 = vunpack.c.l.b16 %v4181
        %v4278 = vunpack.c.l.b16 %v4182
        %v4279 = vunpack.c.l.b16 %v4183
        %v4280 = vunpack.c.l.b16 %v4184
        %v4281 = vunpack.c.l.b16 %v4185
        %v4282 = vunpack.c.l.b16 %v4186
        %v4283 = vunpack.c.l.b16 %v4187
        %v4284 = vunpack.c.l.b16 %v4188
        %v4285 = vunpack.c.l.b16 %v4189
        %v4286 = vunpack.c.l.b16 %v4190
        %v4287 = vunpack.c.l.b16 %v4191
        %v4288 = vunpack.c.l.b16 %v4192
        %v4289 = vunpack.c.l.b16 %v4193
        %v4290 = vunpack.c.l.b16 %v4194
        %v4291 = vunpack.c.l.b16 %v4195
        %v4292 = vunpack.c.l.b16 %v4196
        %v4293 = vunpack.c.l.b16 %v4197
        %v4294 = vunpack.c.l.b16 %v4198
        %v4295 = vunpack.c.l.b16 %v4199
        %v4296 = vunpack.c.l.b16 %v4200
        %v4297 = vunpack.c.l.b16 %v4201
        %v4298 = vunpack.c.l.b16 %v4202
        %v4299 = vunpack.c.l.b16 %v4203
        %v4300 = vunpack.c.l.b16 %v4204
        %v4301 = vunpack.c.l.b16 %v4205
        %v4302 = vunpack.c.l.b16 %v4206
        %v4303 = vunpack.c.l.b16 %v4207
        %v4304 = vunpack.c.l.b16 %v4208
        %v4305 = vunpack.c.l.b16 %v4209
        %v4306 = vunpack.c.l.b16 %v4210
        %v4307 = vunpack.c.l.b16 %v4211
        %v4308 = vunpack.c.l.b16 %v4212
        %v4309 = vunpack.c.l.b16 %v4213
        %v4310 = vunpack.c.l.b16 %v4214
        %v4311 = vunpack.c.l.b16 %v4215
        %v4312 = vpack.c.b16 %v4265, %v4264
        %v4313 = vpack.c.b16 %v4267, %v4266
        %v4314 = vpack.c.b16 %v4269, %v4268
        %v4315 = vpack.c.b16 %v4271, %v4270
        %v4316 = vpack.c.b16 %v4273, %v4272
        %v4317 = vpack.c.b16 %v4275, %v4274
        %v4318 = vpack.c.b16 %v4277, %v4276
        %v4319 = vpack.c.b16 %v4279, %v4278
        %v4320 = vpack.c.b16 %v4281, %v4280
        %v4321 = vpack.c.b16 %v4283, %v4282
        %v4322 = vpack.c.b16 %v4285, %v4284
        %v4323 = vpack.c.b16 %v4287, %v4286
        %v4324 = vpack.c.b16 %v4289, %v4288
        %v4325 = vpack.c.b16 %v4291, %v4290
        %v4326 = vpack.c.b16 %v4293, %v4292
        %v4327 = vpack.c.b16 %v4295, %v4294
        %v4328 = vpack.c.b16 %v4297, %v4296
        %v4329 = vpack.c.b16 %v4299, %v4298
        %v4330 = vpack.c.b16 %v4301, %v4300
        %v4331 = vpack.c.b16 %v4303, %v4302
        %v4332 = vpack.c.b16 %v4305, %v4304
        %v4333 = vpack.c.b16 %v4307, %v4306
        %v4334 = vpack.c.b16 %v4309, %v4308
        %v4335 = vpack.c.b16 %v4311, %v4310
        %4360 = vmatprep.subr.bf16.mxu0 0
        %4361 = vmatpush1.bf16.msra.mxu0 %v4319
        %4362 = vmatprep.subr.bf16.mxu0 0
        %4363 = vmatpush1.bf16.msra.mxu0 %v4318
        %4364 = vmatprep.subr.bf16.mxu0 0
        %4365 = vmatpush1.bf16.msra.mxu0 %v4317
        %4366 = vmatprep.subr.bf16.mxu0 0
        %4367 = vmatpush1.bf16.msra.mxu0 %v4316
        %4368 = vmatprep.subr.bf16.mxu0 0
        %4369 = vmatpush1.bf16.msra.mxu0 %v4315
        %4370 = vmatprep.subr.bf16.mxu0 0
        %4371 = vmatpush1.bf16.msra.mxu0 %v4314
        %4372 = vmatprep.subr.bf16.mxu0 0
        %4373 = vmatpush1.bf16.msra.mxu0 %v4313
        %4374 = vmatprep.subr.bf16.mxu0 0
        %4375 = vmatpush1.bf16.msra.mxu0 %v4312
        %4376 = vmatprep.subr.bf16.mxu0 0
        %4377 = vmatpush2.bf16.msra.mxu0 %v4327
        %4378 = vmatprep.subr.bf16.mxu0 0
        %4379 = vmatpush2.bf16.msra.mxu0 %v4326
        %4380 = vmatprep.subr.bf16.mxu0 0
        %4381 = vmatpush2.bf16.msra.mxu0 %v4325
        %4382 = vmatprep.subr.bf16.mxu0 0
        %4383 = vmatpush2.bf16.msra.mxu0 %v4324
        %4384 = vmatprep.subr.bf16.mxu0 0
        %4385 = vmatpush2.bf16.msra.mxu0 %v4323
        %4386 = vmatprep.subr.bf16.mxu0 0
        %4387 = vmatpush2.bf16.msra.mxu0 %v4322
        %4388 = vmatprep.subr.bf16.mxu0 0
        %4389 = vmatpush2.bf16.msra.mxu0 %v4321
        %4390 = vmatprep.subr.bf16.mxu0 0
        %4391 = vmatpush2.bf16.msra.mxu0 %v4320
        %4392 = vmatprep.mubr.bf16.mxu0 %v3858
        %4393 = vmatmul.mubr.bf16.gmra.mxu0 %v3767
        %v4394 = vpop.f32.mrf.mxu0
        %v4395 = vadd.f32 0.0, %v4394
        %v4396 = vpop.f32.mrf.mxu0
        %v4397 = vpop.f32.mrf.mxu0
        %v4398 = vadd.f32 0.0, %v4397
        %v4399 = vpop.f32.mrf.mxu0
        %4400 = vmatprep.mubr.bf16.mxu0 %v3870
        %4401 = vmatmul.mubr.bf16.gmra.mxu0 %v3768
        %v4402 = vpop.f32.mrf.mxu0
        %v4403 = vadd.f32 0.0, %v4402
        %v4404 = vpop.f32.mrf.mxu0
        %v4405 = vpop.f32.mrf.mxu0
        %v4406 = vadd.f32 0.0, %v4405
        %v4407 = vpop.f32.mrf.mxu0
        %4408 = vmatprep.mubr.bf16.mxu0 %v3882
        %4409 = vmatmul.mubr.bf16.gmra.mxu0 %v3769
        %v4410 = vpop.f32.mrf.mxu0
        %v4411 = vadd.f32 0.0, %v4410
        %v4412 = vpop.f32.mrf.mxu0
        %v4413 = vpop.f32.mrf.mxu0
        %v4414 = vadd.f32 0.0, %v4413
        %v4415 = vpop.f32.mrf.mxu0
        %4416 = vmatprep.mubr.bf16.mxu0 %v3894
        %4417 = vmatmul.mubr.bf16.gmra.mxu0 %v3770
        %v4418 = vpop.f32.mrf.mxu0
        %v4419 = vadd.f32 0.0, %v4418
        %v4420 = vpop.f32.mrf.mxu0
        %v4421 = vpop.f32.mrf.mxu0
        %v4422 = vadd.f32 0.0, %v4421
        %v4423 = vpop.f32.mrf.mxu0
        %4424 = vmatprep.mubr.bf16.mxu0 %v3906
        %4425 = vmatmul.mubr.bf16.gmra.mxu0 %v3771
        %v4426 = vpop.f32.mrf.mxu0
        %v4427 = vadd.f32 0.0, %v4426
        %v4428 = vpop.f32.mrf.mxu0
        %v4429 = vpop.f32.mrf.mxu0
        %v4430 = vadd.f32 0.0, %v4429
        %v4431 = vpop.f32.mrf.mxu0
        %4432 = vmatprep.mubr.bf16.mxu0 %v3918
        %4433 = vmatmul.mubr.bf16.gmra.mxu0 %v3772
        %v4434 = vpop.f32.mrf.mxu0
        %v4435 = vadd.f32 0.0, %v4434
        %v4436 = vpop.f32.mrf.mxu0
        %v4437 = vpop.f32.mrf.mxu0
        %v4438 = vadd.f32 0.0, %v4437
        %v4439 = vpop.f32.mrf.mxu0
        %4440 = vmatprep.mubr.bf16.mxu0 %v3930
        %4441 = vmatmul.mubr.bf16.gmra.mxu0 %v3773
        %v4442 = vpop.f32.mrf.mxu0
        %v4443 = vadd.f32 0.0, %v4442
        %v4444 = vpop.f32.mrf.mxu0
        %v4445 = vpop.f32.mrf.mxu0
        %v4446 = vadd.f32 0.0, %v4445
        %v4447 = vpop.f32.mrf.mxu0
        %4448 = vmatprep.mubr.bf16.mxu0 %v3942
        %4449 = vmatmul.mubr.bf16.gmra.mxu0 %v3774
        %v4450 = vpop.f32.mrf.mxu0
        %v4451 = vadd.f32 0.0, %v4450
        %v4452 = vpop.f32.mrf.mxu0
        %v4453 = vpop.f32.mrf.mxu0
        %v4454 = vadd.f32 0.0, %v4453
        %v4455 = vpop.f32.mrf.mxu0
        %4456 = vmatprep.mubr.bf16.mxu0 %v3954
        %4457 = vmatmul.mubr.bf16.gmra.mxu0 %v3775
        %v4458 = vpop.f32.mrf.mxu0
        %v4459 = vadd.f32 0.0, %v4458
        %v4460 = vpop.f32.mrf.mxu0
        %v4461 = vpop.f32.mrf.mxu0
        %v4462 = vadd.f32 0.0, %v4461
        %v4463 = vpop.f32.mrf.mxu0
        %4464 = vmatprep.mubr.bf16.mxu0 %v3966
        %4465 = vmatmul.mubr.bf16.gmra.mxu0 %v3776
        %v4466 = vpop.f32.mrf.mxu0
        %v4467 = vadd.f32 0.0, %v4466
        %v4468 = vpop.f32.mrf.mxu0
        %v4469 = vpop.f32.mrf.mxu0
        %v4470 = vadd.f32 0.0, %v4469
        %v4471 = vpop.f32.mrf.mxu0
        %4472 = vmatprep.mubr.bf16.mxu0 %v3978
        %4473 = vmatmul.mubr.bf16.gmra.mxu0 %v3777
        %v4474 = vpop.f32.mrf.mxu0
        %v4475 = vadd.f32 0.0, %v4474
        %v4476 = vpop.f32.mrf.mxu0
        %v4477 = vpop.f32.mrf.mxu0
        %v4478 = vadd.f32 0.0, %v4477
        %v4479 = vpop.f32.mrf.mxu0
        %4480 = vmatprep.mubr.bf16.mxu0 %v3990
        %4481 = vmatmul.mubr.bf16.gmra.mxu0 %v3778
        %v4482 = vpop.f32.mrf.mxu0
        %v4483 = vadd.f32 0.0, %v4482
        %v4484 = vpop.f32.mrf.mxu0
        %v4485 = vpop.f32.mrf.mxu0
        %v4486 = vadd.f32 0.0, %v4485
        %v4487 = vpop.f32.mrf.mxu0
        %4488 = vmatprep.mubr.bf16.mxu0 %v4002
        %4489 = vmatmul.mubr.bf16.gmra.mxu0 %v3779
        %v4490 = vpop.f32.mrf.mxu0
        %v4491 = vadd.f32 0.0, %v4490
        %v4492 = vpop.f32.mrf.mxu0
        %v4493 = vpop.f32.mrf.mxu0
        %v4494 = vadd.f32 0.0, %v4493
        %v4495 = vpop.f32.mrf.mxu0
        %4496 = vmatprep.mubr.bf16.mxu0 %v4014
        %4497 = vmatmul.mubr.bf16.gmra.mxu0 %v3780
        %v4498 = vpop.f32.mrf.mxu0
        %v4499 = vadd.f32 0.0, %v4498
        %v4500 = vpop.f32.mrf.mxu0
        %v4501 = vpop.f32.mrf.mxu0
        %v4502 = vadd.f32 0.0, %v4501
        %v4503 = vpop.f32.mrf.mxu0
        %4504 = vmatprep.mubr.bf16.mxu0 %v4026
        %4505 = vmatmul.mubr.bf16.gmra.mxu0 %v3781
        %v4506 = vpop.f32.mrf.mxu0
        %v4507 = vadd.f32 0.0, %v4506
        %v4508 = vpop.f32.mrf.mxu0
        %v4509 = vpop.f32.mrf.mxu0
        %v4510 = vadd.f32 0.0, %v4509
        %v4511 = vpop.f32.mrf.mxu0
        %4512 = vmatprep.mubr.bf16.mxu0 %v4038
        %4513 = vmatmul.mubr.bf16.gmra.mxu0 %v3782
        %v4514 = vpop.f32.mrf.mxu0
        %v4515 = vadd.f32 0.0, %v4514
        %v4516 = vpop.f32.mrf.mxu0
        %v4517 = vpop.f32.mrf.mxu0
        %v4518 = vadd.f32 0.0, %v4517
        %v4519 = vpop.f32.mrf.mxu0
        %4520 = vdwg.mxu0
        %4521 = vmatprep.subr.bf16.mxu0 0
        %4522 = vmatpush1.bf16.msra.mxu0 %v4335
        %4523 = vmatprep.subr.bf16.mxu0 0
        %4524 = vmatpush1.bf16.msra.mxu0 %v4334
        %4525 = vmatprep.subr.bf16.mxu0 0
        %4526 = vmatpush1.bf16.msra.mxu0 %v4333
        %4527 = vmatprep.subr.bf16.mxu0 0
        %4528 = vmatpush1.bf16.msra.mxu0 %v4332
        %4529 = vmatprep.subr.bf16.mxu0 0
        %4530 = vmatpush1.bf16.msra.mxu0 %v4331
        %4531 = vmatprep.subr.bf16.mxu0 0
        %4532 = vmatpush1.bf16.msra.mxu0 %v4330
        %4533 = vmatprep.subr.bf16.mxu0 0
        %4534 = vmatpush1.bf16.msra.mxu0 %v4329
        %4535 = vmatprep.subr.bf16.mxu0 0
        %4536 = vmatpush1.bf16.msra.mxu0 %v4328
        %4537 = vmatprep.subr.bf16.mxu0 0
        %4538 = vmatpush2.bf16.msra.mxu0 0
        %4539 = vmatprep.subr.bf16.mxu0 0
        %4540 = vmatpush2.bf16.msra.mxu0 0
        %4541 = vmatprep.subr.bf16.mxu0 0
        %4542 = vmatpush2.bf16.msra.mxu0 0
        %4543 = vmatprep.subr.bf16.mxu0 0
        %4544 = vmatpush2.bf16.msra.mxu0 0
        %4545 = vmatprep.subr.bf16.mxu0 0
        %4546 = vmatpush2.bf16.msra.mxu0 0
        %4547 = vmatprep.subr.bf16.mxu0 0
        %4548 = vmatpush2.bf16.msra.mxu0 0
        %4549 = vmatprep.subr.bf16.mxu0 0
        %4550 = vmatpush2.bf16.msra.mxu0 0
        %4551 = vmatprep.subr.bf16.mxu0 0
        %4552 = vmatpush2.bf16.msra.mxu0 0
        %4553 = vmatprep.mubr.bf16.mxu0 0
        %4554 = vmatmul.mubr.bf16.gmra.mxu0 %v4105
        %v4555 = vpop.f32.mrf.mxu0
        %v4556 = vadd.f32 %v4395, %v4555
        %v4557 = vpop.f32.mrf.mxu0
        %v4558 = vpop.f32.mrf.mxu0
        %v4559 = vadd.f32 %v4398, %v4558
        %v4560 = vpop.f32.mrf.mxu0
        %4561 = vmatprep.mubr.bf16.mxu0 0
        %4562 = vmatmul.mubr.bf16.gmra.mxu0 %v4108
        %v4563 = vpop.f32.mrf.mxu0
        %v4564 = vadd.f32 %v4403, %v4563
        %v4565 = vpop.f32.mrf.mxu0
        %v4566 = vpop.f32.mrf.mxu0
        %v4567 = vadd.f32 %v4406, %v4566
        %v4568 = vpop.f32.mrf.mxu0
        %4569 = vmatprep.mubr.bf16.mxu0 0
        %4570 = vmatmul.mubr.bf16.gmra.mxu0 %v4111
        %v4571 = vpop.f32.mrf.mxu0
        %v4572 = vadd.f32 %v4411, %v4571
        %v4573 = vpop.f32.mrf.mxu0
        %v4574 = vpop.f32.mrf.mxu0
        %v4575 = vadd.f32 %v4414, %v4574
        %v4576 = vpop.f32.mrf.mxu0
        %4577 = vmatprep.mubr.bf16.mxu0 0
        %4578 = vmatmul.mubr.bf16.gmra.mxu0 %v4114
        %v4579 = vpop.f32.mrf.mxu0
        %v4580 = vadd.f32 %v4419, %v4579
        %v4581 = vpop.f32.mrf.mxu0
        %v4582 = vpop.f32.mrf.mxu0
        %v4583 = vadd.f32 %v4422, %v4582
        %v4584 = vpop.f32.mrf.mxu0
        %4585 = vmatprep.mubr.bf16.mxu0 0
        %4586 = vmatmul.mubr.bf16.gmra.mxu0 %v4117
        %v4587 = vpop.f32.mrf.mxu0
        %v4588 = vadd.f32 %v4427, %v4587
        %v4589 = vpop.f32.mrf.mxu0
        %v4590 = vpop.f32.mrf.mxu0
        %v4591 = vadd.f32 %v4430, %v4590
        %v4592 = vpop.f32.mrf.mxu0
        %4593 = vmatprep.mubr.bf16.mxu0 0
        %4594 = vmatmul.mubr.bf16.gmra.mxu0 %v4120
        %v4595 = vpop.f32.mrf.mxu0
        %v4596 = vadd.f32 %v4435, %v4595
        %v4597 = vpop.f32.mrf.mxu0
        %v4598 = vpop.f32.mrf.mxu0
        %v4599 = vadd.f32 %v4438, %v4598
        %v4600 = vpop.f32.mrf.mxu0
        %4601 = vmatprep.mubr.bf16.mxu0 0
        %4602 = vmatmul.mubr.bf16.gmra.mxu0 %v4123
        %v4603 = vpop.f32.mrf.mxu0
        %v4604 = vadd.f32 %v4443, %v4603
        %v4605 = vpop.f32.mrf.mxu0
        %v4606 = vpop.f32.mrf.mxu0
        %v4607 = vadd.f32 %v4446, %v4606
        %v4608 = vpop.f32.mrf.mxu0
        %4609 = vmatprep.mubr.bf16.mxu0 0
        %4610 = vmatmul.mubr.bf16.gmra.mxu0 %v4126
        %v4611 = vpop.f32.mrf.mxu0
        %v4612 = vadd.f32 %v4451, %v4611
        %v4613 = vpop.f32.mrf.mxu0
        %v4614 = vpop.f32.mrf.mxu0
        %v4615 = vadd.f32 %v4454, %v4614
        %v4616 = vpop.f32.mrf.mxu0
        %4617 = vmatprep.mubr.bf16.mxu0 0
        %4618 = vmatmul.mubr.bf16.gmra.mxu0 %v4129
        %v4619 = vpop.f32.mrf.mxu0
        %v4620 = vadd.f32 %v4459, %v4619
        %v4621 = vpop.f32.mrf.mxu0
        %v4622 = vpop.f32.mrf.mxu0
        %v4623 = vadd.f32 %v4462, %v4622
        %v4624 = vpop.f32.mrf.mxu0
        %4625 = vmatprep.mubr.bf16.mxu0 0
        %4626 = vmatmul.mubr.bf16.gmra.mxu0 %v4132
        %v4627 = vpop.f32.mrf.mxu0
        %v4628 = vadd.f32 %v4467, %v4627
        %v4629 = vpop.f32.mrf.mxu0
        %v4630 = vpop.f32.mrf.mxu0
        %v4631 = vadd.f32 %v4470, %v4630
        %v4632 = vpop.f32.mrf.mxu0
        %4633 = vmatprep.mubr.bf16.mxu0 0
        %4634 = vmatmul.mubr.bf16.gmra.mxu0 %v4135
        %v4635 = vpop.f32.mrf.mxu0
        %v4636 = vadd.f32 %v4475, %v4635
        %v4637 = vpop.f32.mrf.mxu0
        %v4638 = vpop.f32.mrf.mxu0
        %v4639 = vadd.f32 %v4478, %v4638
        %v4640 = vpop.f32.mrf.mxu0
        %4641 = vmatprep.mubr.bf16.mxu0 0
        %4642 = vmatmul.mubr.bf16.gmra.mxu0 %v4138
        %v4643 = vpop.f32.mrf.mxu0
        %v4644 = vadd.f32 %v4483, %v4643
        %v4645 = vpop.f32.mrf.mxu0
        %v4646 = vpop.f32.mrf.mxu0
        %v4647 = vadd.f32 %v4486, %v4646
        %v4648 = vpop.f32.mrf.mxu0
        %4649 = vmatprep.mubr.bf16.mxu0 0
        %4650 = vmatmul.mubr.bf16.gmra.mxu0 %v4141
        %v4651 = vpop.f32.mrf.mxu0
        %v4652 = vadd.f32 %v4491, %v4651
        %v4653 = vpop.f32.mrf.mxu0
        %v4654 = vpop.f32.mrf.mxu0
        %v4655 = vadd.f32 %v4494, %v4654
        %v4656 = vpop.f32.mrf.mxu0
        %4657 = vmatprep.mubr.bf16.mxu0 0
        %4658 = vmatmul.mubr.bf16.gmra.mxu0 %v4144
        %v4659 = vpop.f32.mrf.mxu0
        %v4660 = vadd.f32 %v4499, %v4659
        %v4661 = vpop.f32.mrf.mxu0
        %v4662 = vpop.f32.mrf.mxu0
        %v4663 = vadd.f32 %v4502, %v4662
        %v4664 = vpop.f32.mrf.mxu0
        %4665 = vmatprep.mubr.bf16.mxu0 0
        %4666 = vmatmul.mubr.bf16.gmra.mxu0 %v4147
        %v4667 = vpop.f32.mrf.mxu0
        %v4668 = vadd.f32 %v4507, %v4667
        %v4669 = vpop.f32.mrf.mxu0
        %v4670 = vpop.f32.mrf.mxu0
        %v4671 = vadd.f32 %v4510, %v4670
        %v4672 = vpop.f32.mrf.mxu0
        %4673 = vmatprep.mubr.bf16.mxu0 0
        %4674 = vmatmul.mubr.bf16.gmra.mxu0 %v4150
        %v4675 = vpop.f32.mrf.mxu0
        %v4676 = vadd.f32 %v4515, %v4675
        %v4677 = vpop.f32.mrf.mxu0
        %v4678 = vpop.f32.mrf.mxu0
        %v4679 = vadd.f32 %v4518, %v4678
        %v4680 = vpop.f32.mrf.mxu0
        %4681 = vdwg.mxu0
        %v4682 = vadd.f32 %v3512, %v4556
        %v4683 = vadd.f32 %v3515, %v4559
        %v4684 = vadd.f32 %v3520, %v4564
        %v4685 = vadd.f32 %v3523, %v4567
        %v4686 = vadd.f32 %v3528, %v4572
        %v4687 = vadd.f32 %v3531, %v4575
        %v4688 = vadd.f32 %v3536, %v4580
        %v4689 = vadd.f32 %v3539, %v4583
        %v4690 = vadd.f32 %v3544, %v4588
        %v4691 = vadd.f32 %v3547, %v4591
        %v4692 = vadd.f32 %v3552, %v4596
        %v4693 = vadd.f32 %v3555, %v4599
        %v4694 = vadd.f32 %v3560, %v4604
        %v4695 = vadd.f32 %v3563, %v4607
        %v4696 = vadd.f32 %v3568, %v4612
        %v4697 = vadd.f32 %v3571, %v4615
        %v4698 = vadd.f32 %v3576, %v4620
        %v4699 = vadd.f32 %v3579, %v4623
        %v4700 = vadd.f32 %v3584, %v4628
        %v4701 = vadd.f32 %v3587, %v4631
        %v4702 = vadd.f32 %v3592, %v4636
        %v4703 = vadd.f32 %v3595, %v4639
        %v4704 = vadd.f32 %v3600, %v4644
        %v4705 = vadd.f32 %v3603, %v4647
        %v4706 = vadd.f32 %v3608, %v4652
        %v4707 = vadd.f32 %v3611, %v4655
        %v4708 = vadd.f32 %v3616, %v4660
        %v4709 = vadd.f32 %v3619, %v4663
        %v4710 = vadd.f32 %v3624, %v4668
        %v4711 = vadd.f32 %v3627, %v4671
        %v4712 = vadd.f32 %v3632, %v4676
        %v4713 = vadd.f32 %v3635, %v4679
        %v4714 = vld [vmem:[%s7 + $0x2] sm:$0x1]
        %v4715 = vlaneseq
        %v4716 = vshrl.u32 %v4715, 7
        %v4717 = vsub.s32 0, %v4716
        %v4718 = vrot.slane %v4714, %v4717
        %v4719 = vadd.f32 %v4682, %v4718
        %v4720 = vadd.f32 %v4683, %v4718
        %v4721 = vadd.f32 %v4684, %v4718
        %v4722 = vadd.f32 %v4685, %v4718
        %v4723 = vadd.f32 %v4686, %v4718
        %v4724 = vadd.f32 %v4687, %v4718
        %v4725 = vadd.f32 %v4688, %v4718
        %v4726 = vadd.f32 %v4689, %v4718
        %v4727 = vadd.f32 %v4690, %v4718
        %v4728 = vadd.f32 %v4691, %v4718
        %v4729 = vadd.f32 %v4692, %v4718
        %v4730 = vadd.f32 %v4693, %v4718
        %v4731 = vadd.f32 %v4694, %v4718
        %v4732 = vadd.f32 %v4695, %v4718
        %v4733 = vadd.f32 %v4696, %v4718
        %v4734 = vadd.f32 %v4697, %v4718
        %v4735 = vadd.f32 %v4698, %v4718
        %v4736 = vadd.f32 %v4699, %v4718
        %v4737 = vadd.f32 %v4700, %v4718
        %v4738 = vadd.f32 %v4701, %v4718
        %v4739 = vadd.f32 %v4702, %v4718
        %v4740 = vadd.f32 %v4703, %v4718
        %v4741 = vadd.f32 %v4704, %v4718
        %v4742 = vadd.f32 %v4705, %v4718
        %v4743 = vadd.f32 %v4706, %v4718
        %v4744 = vadd.f32 %v4707, %v4718
        %v4745 = vadd.f32 %v4708, %v4718
        %v4746 = vadd.f32 %v4709, %v4718
        %v4747 = vadd.f32 %v4710, %v4718
        %v4748 = vadd.f32 %v4711, %v4718
        %v4749 = vadd.f32 %v4712, %v4718
        %v4750 = vadd.f32 %v4713, %v4718
        %v4751 = vmax.f32 %v4719, 0.0
        %v4752 = vmax.f32 %v4720, 0.0
        %v4753 = vmax.f32 %v4721, 0.0
        %v4754 = vmax.f32 %v4722, 0.0
        %v4755 = vmax.f32 %v4723, 0.0
        %v4756 = vmax.f32 %v4724, 0.0
        %v4757 = vmax.f32 %v4725, 0.0
        %v4758 = vmax.f32 %v4726, 0.0
        %v4759 = vmax.f32 %v4727, 0.0
        %v4760 = vmax.f32 %v4728, 0.0
        %v4761 = vmax.f32 %v4729, 0.0
        %v4762 = vmax.f32 %v4730, 0.0
        %v4763 = vmax.f32 %v4731, 0.0
        %v4764 = vmax.f32 %v4732, 0.0
        %v4765 = vmax.f32 %v4733, 0.0
        %v4766 = vmax.f32 %v4734, 0.0
        %v4767 = vmax.f32 %v4735, 0.0
        %v4768 = vmax.f32 %v4736, 0.0
        %v4769 = vmax.f32 %v4737, 0.0
        %v4770 = vmax.f32 %v4738, 0.0
        %v4771 = vmax.f32 %v4739, 0.0
        %v4772 = vmax.f32 %v4740, 0.0
        %v4773 = vmax.f32 %v4741, 0.0
        %v4774 = vmax.f32 %v4742, 0.0
        %v4775 = vmax.f32 %v4743, 0.0
        %v4776 = vmax.f32 %v4744, 0.0
        %v4777 = vmax.f32 %v4745, 0.0
        %v4778 = vmax.f32 %v4746, 0.0
        %v4779 = vmax.f32 %v4747, 0.0
        %v4780 = vmax.f32 %v4748, 0.0
        %v4781 = vmax.f32 %v4749, 0.0
        %v4782 = vmax.f32 %v4750, 0.0
        %v4783 = vpack.c.bf16 %v4752, %v4751
        %v4784 = vpack.c.bf16 %v4754, %v4753
        %v4785 = vpack.c.bf16 %v4756, %v4755
        %v4786 = vpack.c.bf16 %v4758, %v4757
        %v4787 = vpack.c.bf16 %v4760, %v4759
        %v4788 = vpack.c.bf16 %v4762, %v4761
        %v4789 = vpack.c.bf16 %v4764, %v4763
        %v4790 = vpack.c.bf16 %v4766, %v4765
        %v4791 = vpack.c.bf16 %v4768, %v4767
        %v4792 = vpack.c.bf16 %v4770, %v4769
        %v4793 = vpack.c.bf16 %v4772, %v4771
        %v4794 = vpack.c.bf16 %v4774, %v4773
        %v4795 = vpack.c.bf16 %v4776, %v4775
        %v4796 = vpack.c.bf16 %v4778, %v4777
        %v4797 = vpack.c.bf16 %v4780, %v4779
        %v4798 = vpack.c.bf16 %v4782, %v4781
        %v4800 = vunpack.i.l.s16 %v4783
        %v4801 = vunpack.i.h.s16 %v4783
        %v4803 = vunpack.i.l.s16 %v4784
        %v4804 = vunpack.i.h.s16 %v4784
        %v4806 = vunpack.i.l.s16 %v4785
        %v4807 = vunpack.i.h.s16 %v4785
        %v4809 = vunpack.i.l.s16 %v4786
        %v4810 = vunpack.i.h.s16 %v4786
        %v4812 = vunpack.i.l.s16 %v4787
        %v4813 = vunpack.i.h.s16 %v4787
        %v4815 = vunpack.i.l.s16 %v4788
        %v4816 = vunpack.i.h.s16 %v4788
        %v4818 = vunpack.i.l.s16 %v4789
        %v4819 = vunpack.i.h.s16 %v4789
        %v4821 = vunpack.i.l.s16 %v4790
        %v4822 = vunpack.i.h.s16 %v4790
        %v4824 = vunpack.i.l.s16 %v4791
        %v4825 = vunpack.i.h.s16 %v4791
        %v4827 = vunpack.i.l.s16 %v4792
        %v4828 = vunpack.i.h.s16 %v4792
        %v4830 = vunpack.i.l.s16 %v4793
        %v4831 = vunpack.i.h.s16 %v4793
        %v4833 = vunpack.i.l.s16 %v4794
        %v4834 = vunpack.i.h.s16 %v4794
        %v4836 = vunpack.i.l.s16 %v4795
        %v4837 = vunpack.i.h.s16 %v4795
        %v4839 = vunpack.i.l.s16 %v4796
        %v4840 = vunpack.i.h.s16 %v4796
        %v4842 = vunpack.i.l.s16 %v4797
        %v4843 = vunpack.i.h.s16 %v4797
        %v4845 = vunpack.i.l.s16 %v4798
        %v4846 = vunpack.i.h.s16 %v4798
        %v4847 = vld [vmem:[%s5] sm:$0xf]
        %v4848 = vld [vmem:[%s5 + $0x4] sm:$0xf]
        %v4849 = vld [vmem:[%s5 + $0x8] sm:$0xf]
        %v4850 = vld [vmem:[%s5 + $0xc] sm:$0xf]
        %v4851 = vld [vmem:[%s5 + $0x10] sm:$0xf]
        %v4852 = vld [vmem:[%s5 + $0x14] sm:$0xf]
        %v4853 = vld [vmem:[%s5 + $0x18] sm:$0xf]
        %v4854 = vld [vmem:[%s5 + $0x1c] sm:$0xf]
        %v4855 = vld [vmem:[%s5 + $0x20] sm:$0xf]
        %v4856 = vld [vmem:[%s5 + $0x24] sm:$0xf]
        %v4857 = vld [vmem:[%s5 + $0x28] sm:$0xf]
        %v4858 = vld [vmem:[%s5 + $0x2c] sm:$0xf]
        %v4859 = vld [vmem:[%s5 + $0x30] sm:$0xf]
        %v4860 = vld [vmem:[%s5 + $0x34] sm:$0xf]
        %v4861 = vld [vmem:[%s5 + $0x38] sm:$0xf]
        %v4862 = vld [vmem:[%s5 + $0x3c] sm:$0xf]
        %v4863 = vld [vmem:[%s5 + $0x40] sm:$0xf]
        %v4864 = vld [vmem:[%s5 + $0x44] sm:$0xf]
        %v4865 = vld [vmem:[%s5 + $0x48] sm:$0xf]
        %v4866 = vld [vmem:[%s5 + $0x4c] sm:$0xf]
        %v4867 = vld [vmem:[%s5 + $0x50] sm:$0xf]
        %v4868 = vld [vmem:[%s5 + $0x54] sm:$0xf]
        %v4869 = vld [vmem:[%s5 + $0x58] sm:$0xf]
        %v4870 = vld [vmem:[%s5 + $0x5c] sm:$0xf]
        %v4871 = vld [vmem:[%s5 + $0x60] sm:$0xf]
        %v4872 = vld [vmem:[%s5 + $0x64] sm:$0xf]
        %v4873 = vld [vmem:[%s5 + $0x68] sm:$0xf]
        %v4874 = vld [vmem:[%s5 + $0x6c] sm:$0xf]
        %v4875 = vld [vmem:[%s5 + $0x70] sm:$0xf]
        %v4876 = vld [vmem:[%s5 + $0x74] sm:$0xf]
        %v4877 = vld [vmem:[%s5 + $0x78] sm:$0xf]
        %v4878 = vld [vmem:[%s5 + $0x7c] sm:$0xf]
        %s4879 = scalar_lea.vmem %s5, 128
        %v4880 = vld [vmem:[%s4879] sm:$0xf]
        %v4881 = vld [vmem:[%s4879 + $0x4] sm:$0xf]
        %v4882 = vld [vmem:[%s4879 + $0x8] sm:$0xf]
        %v4883 = vld [vmem:[%s4879 + $0xc] sm:$0xf]
        %v4884 = vld [vmem:[%s4879 + $0x10] sm:$0xf]
        %v4885 = vld [vmem:[%s4879 + $0x14] sm:$0xf]
        %v4886 = vld [vmem:[%s4879 + $0x18] sm:$0xf]
        %v4887 = vld [vmem:[%s4879 + $0x1c] sm:$0xf]
        %v4888 = vld [vmem:[%s4879 + $0x20] sm:$0xf]
        %v4889 = vld [vmem:[%s4879 + $0x24] sm:$0xf]
        %v4890 = vld [vmem:[%s4879 + $0x28] sm:$0xf]
        %v4891 = vld [vmem:[%s4879 + $0x2c] sm:$0xf]
        %v4892 = vld [vmem:[%s4879 + $0x30] sm:$0xf]
        %v4893 = vld [vmem:[%s4879 + $0x34] sm:$0xf]
        %v4894 = vld [vmem:[%s4879 + $0x38] sm:$0xf]
        %v4895 = vld [vmem:[%s4879 + $0x3c] sm:$0xf]
        %v4896 = vld [vmem:[%s4879 + $0x40] sm:$0xf]
        %v4897 = vld [vmem:[%s4879 + $0x44] sm:$0xf]
        %v4898 = vld [vmem:[%s4879 + $0x48] sm:$0xf]
        %v4899 = vld [vmem:[%s4879 + $0x4c] sm:$0xf]
        %v4900 = vld [vmem:[%s4879 + $0x50] sm:$0xf]
        %v4901 = vld [vmem:[%s4879 + $0x54] sm:$0xf]
        %v4902 = vld [vmem:[%s4879 + $0x58] sm:$0xf]
        %v4903 = vld [vmem:[%s4879 + $0x5c] sm:$0xf]
        %v4904 = vld [vmem:[%s4879 + $0x60] sm:$0xf]
        %v4905 = vld [vmem:[%s4879 + $0x64] sm:$0xf]
        %v4906 = vld [vmem:[%s4879 + $0x68] sm:$0xf]
        %v4907 = vld [vmem:[%s4879 + $0x6c] sm:$0xf]
        %v4908 = vld [vmem:[%s4879 + $0x70] sm:$0xf]
        %v4909 = vld [vmem:[%s4879 + $0x74] sm:$0xf]
        %v4910 = vld [vmem:[%s4879 + $0x78] sm:$0xf]
        %v4911 = vld [vmem:[%s4879 + $0x7c] sm:$0xf]
        %v4912 = vpack.c.b16 %v4809, %v4803
        %v4913 = vpack.c.b16 %v4810, %v4804
        %v4914 = vpack.c.b16 %v4821, %v4815
        %v4915 = vpack.c.b16 %v4822, %v4816
        %v4916 = vpack.c.b16 %v4833, %v4827
        %v4917 = vpack.c.b16 %v4834, %v4828
        %v4918 = vpack.c.b16 %v4845, %v4839
        %v4919 = vpack.c.b16 %v4846, %v4840
        %v4960 = vunpack.c.l.b16 %v4880
        %v4961 = vunpack.c.l.b16 %v4881
        %v4962 = vunpack.c.l.b16 %v4882
        %v4963 = vunpack.c.l.b16 %v4883
        %v4964 = vunpack.c.l.b16 %v4884
        %v4965 = vunpack.c.l.b16 %v4885
        %v4966 = vunpack.c.l.b16 %v4886
        %v4967 = vunpack.c.l.b16 %v4887
        %v4968 = vunpack.c.l.b16 %v4888
        %v4969 = vunpack.c.l.b16 %v4889
        %v4970 = vunpack.c.l.b16 %v4890
        %v4971 = vunpack.c.l.b16 %v4891
        %v4972 = vunpack.c.l.b16 %v4892
        %v4973 = vunpack.c.l.b16 %v4893
        %v4974 = vunpack.c.l.b16 %v4894
        %v4975 = vunpack.c.l.b16 %v4895
        %v4976 = vunpack.c.l.b16 %v4896
        %v4977 = vunpack.c.l.b16 %v4897
        %v4978 = vunpack.c.l.b16 %v4898
        %v4979 = vunpack.c.l.b16 %v4899
        %v4980 = vunpack.c.l.b16 %v4900
        %v4981 = vunpack.c.l.b16 %v4901
        %v4982 = vunpack.c.l.b16 %v4902
        %v4983 = vunpack.c.l.b16 %v4903
        %v4984 = vunpack.c.l.b16 %v4904
        %v4985 = vunpack.c.l.b16 %v4905
        %v4986 = vunpack.c.l.b16 %v4906
        %v4987 = vunpack.c.l.b16 %v4907
        %v4988 = vunpack.c.l.b16 %v4908
        %v4989 = vunpack.c.l.b16 %v4909
        %v4990 = vunpack.c.l.b16 %v4910
        %v4991 = vunpack.c.l.b16 %v4911
        %v4992 = vpack.c.b16 %v4961, %v4960
        %v4993 = vpack.c.b16 %v4963, %v4962
        %v4994 = vpack.c.b16 %v4965, %v4964
        %v4995 = vpack.c.b16 %v4967, %v4966
        %v4996 = vpack.c.b16 %v4969, %v4968
        %v4997 = vpack.c.b16 %v4971, %v4970
        %v4998 = vpack.c.b16 %v4973, %v4972
        %v4999 = vpack.c.b16 %v4975, %v4974
        %v5000 = vpack.c.b16 %v4977, %v4976
        %v5001 = vpack.c.b16 %v4979, %v4978
        %v5002 = vpack.c.b16 %v4981, %v4980
        %v5003 = vpack.c.b16 %v4983, %v4982
        %v5004 = vpack.c.b16 %v4985, %v4984
        %v5005 = vpack.c.b16 %v4987, %v4986
        %v5006 = vpack.c.b16 %v4989, %v4988
        %v5007 = vpack.c.b16 %v4991, %v4990
        %5024 = vmatprep.subr.bf16.mxu0 0
        %5025 = vmatpush1.bf16.msra.mxu0 %v4999
        %5026 = vmatprep.subr.bf16.mxu0 0
        %5027 = vmatpush1.bf16.msra.mxu0 %v4998
        %5028 = vmatprep.subr.bf16.mxu0 0
        %5029 = vmatpush1.bf16.msra.mxu0 %v4997
        %5030 = vmatprep.subr.bf16.mxu0 0
        %5031 = vmatpush1.bf16.msra.mxu0 %v4996
        %5032 = vmatprep.subr.bf16.mxu0 0
        %5033 = vmatpush1.bf16.msra.mxu0 %v4995
        %5034 = vmatprep.subr.bf16.mxu0 0
        %5035 = vmatpush1.bf16.msra.mxu0 %v4994
        %5036 = vmatprep.subr.bf16.mxu0 0
        %5037 = vmatpush1.bf16.msra.mxu0 %v4993
        %5038 = vmatprep.subr.bf16.mxu0 0
        %5039 = vmatpush1.bf16.msra.mxu0 %v4992
        %5040 = vmatprep.subr.bf16.mxu0 0
        %5041 = vmatpush2.bf16.msra.mxu0 %v5007
        %5042 = vmatprep.subr.bf16.mxu0 0
        %5043 = vmatpush2.bf16.msra.mxu0 %v5006
        %5044 = vmatprep.subr.bf16.mxu0 0
        %5045 = vmatpush2.bf16.msra.mxu0 %v5005
        %5046 = vmatprep.subr.bf16.mxu0 0
        %5047 = vmatpush2.bf16.msra.mxu0 %v5004
        %5048 = vmatprep.subr.bf16.mxu0 0
        %5049 = vmatpush2.bf16.msra.mxu0 %v5003
        %5050 = vmatprep.subr.bf16.mxu0 0
        %5051 = vmatpush2.bf16.msra.mxu0 %v5002
        %5052 = vmatprep.subr.bf16.mxu0 0
        %5053 = vmatpush2.bf16.msra.mxu0 %v5001
        %5054 = vmatprep.subr.bf16.mxu0 0
        %5055 = vmatpush2.bf16.msra.mxu0 %v5000
        %5056 = vmatprep.mubr.bf16.mxu0 %v4913
        %5057 = vmatmul.mubr.bf16.gmra.mxu0 %v4912
        %v5058 = vpop.f32.mrf.mxu0
        %v5059 = vadd.f32 0.0, %v5058
        %v5060 = vpop.f32.mrf.mxu0
        %v5061 = vpop.f32.mrf.mxu0
        %v5062 = vadd.f32 0.0, %v5061
        %v5063 = vpop.f32.mrf.mxu0
        %5064 = vmatprep.mubr.bf16.mxu0 %v4915
        %5065 = vmatmul.mubr.bf16.gmra.mxu0 %v4914
        %v5066 = vpop.f32.mrf.mxu0
        %v5067 = vadd.f32 0.0, %v5066
        %v5068 = vpop.f32.mrf.mxu0
        %v5069 = vpop.f32.mrf.mxu0
        %v5070 = vadd.f32 0.0, %v5069
        %v5071 = vpop.f32.mrf.mxu0
        %5072 = vmatprep.mubr.bf16.mxu0 %v4917
        %5073 = vmatmul.mubr.bf16.gmra.mxu0 %v4916
        %v5074 = vpop.f32.mrf.mxu0
        %v5075 = vadd.f32 0.0, %v5074
        %v5076 = vpop.f32.mrf.mxu0
        %v5077 = vpop.f32.mrf.mxu0
        %v5078 = vadd.f32 0.0, %v5077
        %v5079 = vpop.f32.mrf.mxu0
        %5080 = vmatprep.mubr.bf16.mxu0 %v4919
        %5081 = vmatmul.mubr.bf16.gmra.mxu0 %v4918
        %v5082 = vpop.f32.mrf.mxu0
        %v5083 = vadd.f32 0.0, %v5082
        %v5084 = vpop.f32.mrf.mxu0
        %v5085 = vpop.f32.mrf.mxu0
        %v5086 = vadd.f32 0.0, %v5085
        %v5087 = vpop.f32.mrf.mxu0
        %5088 = vdwg.mxu0
        %v5089 = vpack.c.b16 %v4806, %v4800
        %v5090 = vpack.c.b16 %v4807, %v4801
        %v5091 = vpack.c.b16 %v4818, %v4812
        %v5092 = vpack.c.b16 %v4819, %v4813
        %v5093 = vpack.c.b16 %v4830, %v4824
        %v5094 = vpack.c.b16 %v4831, %v4825
        %v5095 = vpack.c.b16 %v4842, %v4836
        %v5096 = vpack.c.b16 %v4843, %v4837
        %v5137 = vunpack.c.l.b16 %v4847
        %v5138 = vunpack.c.l.b16 %v4848
        %v5139 = vunpack.c.l.b16 %v4849
        %v5140 = vunpack.c.l.b16 %v4850
        %v5141 = vunpack.c.l.b16 %v4851
        %v5142 = vunpack.c.l.b16 %v4852
        %v5143 = vunpack.c.l.b16 %v4853
        %v5144 = vunpack.c.l.b16 %v4854
        %v5145 = vunpack.c.l.b16 %v4855
        %v5146 = vunpack.c.l.b16 %v4856
        %v5147 = vunpack.c.l.b16 %v4857
        %v5148 = vunpack.c.l.b16 %v4858
        %v5149 = vunpack.c.l.b16 %v4859
        %v5150 = vunpack.c.l.b16 %v4860
        %v5151 = vunpack.c.l.b16 %v4861
        %v5152 = vunpack.c.l.b16 %v4862
        %v5153 = vunpack.c.l.b16 %v4863
        %v5154 = vunpack.c.l.b16 %v4864
        %v5155 = vunpack.c.l.b16 %v4865
        %v5156 = vunpack.c.l.b16 %v4866
        %v5157 = vunpack.c.l.b16 %v4867
        %v5158 = vunpack.c.l.b16 %v4868
        %v5159 = vunpack.c.l.b16 %v4869
        %v5160 = vunpack.c.l.b16 %v4870
        %v5161 = vunpack.c.l.b16 %v4871
        %v5162 = vunpack.c.l.b16 %v4872
        %v5163 = vunpack.c.l.b16 %v4873
        %v5164 = vunpack.c.l.b16 %v4874
        %v5165 = vunpack.c.l.b16 %v4875
        %v5166 = vunpack.c.l.b16 %v4876
        %v5167 = vunpack.c.l.b16 %v4877
        %v5168 = vunpack.c.l.b16 %v4878
        %v5169 = vpack.c.b16 %v5138, %v5137
        %v5170 = vpack.c.b16 %v5140, %v5139
        %v5171 = vpack.c.b16 %v5142, %v5141
        %v5172 = vpack.c.b16 %v5144, %v5143
        %v5173 = vpack.c.b16 %v5146, %v5145
        %v5174 = vpack.c.b16 %v5148, %v5147
        %v5175 = vpack.c.b16 %v5150, %v5149
        %v5176 = vpack.c.b16 %v5152, %v5151
        %v5177 = vpack.c.b16 %v5154, %v5153
        %v5178 = vpack.c.b16 %v5156, %v5155
        %v5179 = vpack.c.b16 %v5158, %v5157
        %v5180 = vpack.c.b16 %v5160, %v5159
        %v5181 = vpack.c.b16 %v5162, %v5161
        %v5182 = vpack.c.b16 %v5164, %v5163
        %v5183 = vpack.c.b16 %v5166, %v5165
        %v5184 = vpack.c.b16 %v5168, %v5167
        %5201 = vmatprep.subr.bf16.mxu0 0
        %5202 = vmatpush1.bf16.msra.mxu0 %v5176
        %5203 = vmatprep.subr.bf16.mxu0 0
        %5204 = vmatpush1.bf16.msra.mxu0 %v5175
        %5205 = vmatprep.subr.bf16.mxu0 0
        %5206 = vmatpush1.bf16.msra.mxu0 %v5174
        %5207 = vmatprep.subr.bf16.mxu0 0
        %5208 = vmatpush1.bf16.msra.mxu0 %v5173
        %5209 = vmatprep.subr.bf16.mxu0 0
        %5210 = vmatpush1.bf16.msra.mxu0 %v5172
        %5211 = vmatprep.subr.bf16.mxu0 0
        %5212 = vmatpush1.bf16.msra.mxu0 %v5171
        %5213 = vmatprep.subr.bf16.mxu0 0
        %5214 = vmatpush1.bf16.msra.mxu0 %v5170
        %5215 = vmatprep.subr.bf16.mxu0 0
        %5216 = vmatpush1.bf16.msra.mxu0 %v5169
        %5217 = vmatprep.subr.bf16.mxu0 0
        %5218 = vmatpush2.bf16.msra.mxu0 %v5184
        %5219 = vmatprep.subr.bf16.mxu0 0
        %5220 = vmatpush2.bf16.msra.mxu0 %v5183
        %5221 = vmatprep.subr.bf16.mxu0 0
        %5222 = vmatpush2.bf16.msra.mxu0 %v5182
        %5223 = vmatprep.subr.bf16.mxu0 0
        %5224 = vmatpush2.bf16.msra.mxu0 %v5181
        %5225 = vmatprep.subr.bf16.mxu0 0
        %5226 = vmatpush2.bf16.msra.mxu0 %v5180
        %5227 = vmatprep.subr.bf16.mxu0 0
        %5228 = vmatpush2.bf16.msra.mxu0 %v5179
        %5229 = vmatprep.subr.bf16.mxu0 0
        %5230 = vmatpush2.bf16.msra.mxu0 %v5178
        %5231 = vmatprep.subr.bf16.mxu0 0
        %5232 = vmatpush2.bf16.msra.mxu0 %v5177
        %5233 = vmatprep.mubr.bf16.mxu0 %v5090
        %5234 = vmatmul.mubr.bf16.gmra.mxu0 %v5089
        %v5235 = vpop.f32.mrf.mxu0
        %v5236 = vadd.f32 %v5059, %v5235
        %v5237 = vpop.f32.mrf.mxu0
        %v5238 = vpop.f32.mrf.mxu0
        %v5239 = vadd.f32 %v5062, %v5238
        %v5240 = vpop.f32.mrf.mxu0
        %5241 = vmatprep.mubr.bf16.mxu0 %v5092
        %5242 = vmatmul.mubr.bf16.gmra.mxu0 %v5091
        %v5243 = vpop.f32.mrf.mxu0
        %v5244 = vadd.f32 %v5067, %v5243
        %v5245 = vpop.f32.mrf.mxu0
        %v5246 = vpop.f32.mrf.mxu0
        %v5247 = vadd.f32 %v5070, %v5246
        %v5248 = vpop.f32.mrf.mxu0
        %5249 = vmatprep.mubr.bf16.mxu0 %v5094
        %5250 = vmatmul.mubr.bf16.gmra.mxu0 %v5093
        %v5251 = vpop.f32.mrf.mxu0
        %v5252 = vadd.f32 %v5075, %v5251
        %v5253 = vpop.f32.mrf.mxu0
        %v5254 = vpop.f32.mrf.mxu0
        %v5255 = vadd.f32 %v5078, %v5254
        %v5256 = vpop.f32.mrf.mxu0
        %5257 = vmatprep.mubr.bf16.mxu0 %v5096
        %5258 = vmatmul.mubr.bf16.gmra.mxu0 %v5095
        %v5259 = vpop.f32.mrf.mxu0
        %v5260 = vadd.f32 %v5083, %v5259
        %v5261 = vpop.f32.mrf.mxu0
        %v5262 = vpop.f32.mrf.mxu0
        %v5263 = vadd.f32 %v5086, %v5262
        %v5264 = vpop.f32.mrf.mxu0
        %5265 = vdwg.mxu0
        %v5266 = vld [vmem:[%s7 + $0x3] sm:$0x1]
        %v5267 = vlaneseq
        %v5268 = vshrl.u32 %v5267, 7
        %v5269 = vsub.s32 0, %v5268
        %v5270 = vrot.slane %v5266, %v5269
        %v5271 = vadd.f32 %v5236, %v5270
        %v5272 = vadd.f32 %v5239, %v5270
        %v5273 = vadd.f32 %v5244, %v5270
        %v5274 = vadd.f32 %v5247, %v5270
        %v5275 = vadd.f32 %v5252, %v5270
        %v5276 = vadd.f32 %v5255, %v5270
        %v5277 = vadd.f32 %v5260, %v5270
        %v5278 = vadd.f32 %v5263, %v5270
        %v5279 = vmax.f32 %v5271, 0.0
        %v5280 = vmax.f32 %v5272, 0.0
        %v5281 = vmax.f32 %v5273, 0.0
        %v5282 = vmax.f32 %v5274, 0.0
        %v5283 = vmax.f32 %v5275, 0.0
        %v5284 = vmax.f32 %v5276, 0.0
        %v5285 = vmax.f32 %v5277, 0.0
        %v5286 = vmax.f32 %v5278, 0.0
        %v5287 = vadd.f32 %v739, %v5279
        %v5288 = vadd.f32 %v740, %v5280
        %v5289 = vadd.f32 %v741, %v5281
        %v5290 = vadd.f32 %v742, %v5282
        %v5291 = vadd.f32 %v743, %v5283
        %v5292 = vadd.f32 %v744, %v5284
        %v5293 = vadd.f32 %v745, %v5285
        %v5294 = vadd.f32 %v746, %v5286
        %v5295 = vmul.f32 %v5287, 0.5
        %v5296 = vmul.f32 %v5288, 0.5
        %v5297 = vmul.f32 %v5289, 0.5
        %v5298 = vmul.f32 %v5290, 0.5
        %v5299 = vmul.f32 %v5291, 0.5
        %v5300 = vmul.f32 %v5292, 0.5
        %v5301 = vmul.f32 %v5293, 0.5
        %v5302 = vmul.f32 %v5294, 0.5
        %v5303 = vpack.c.bf16 %v5296, %v5295
        %v5304 = vpack.c.bf16 %v5298, %v5297
        %v5305 = vpack.c.bf16 %v5300, %v5299
        %v5306 = vpack.c.bf16 %v5302, %v5301
        %v5307 = vsel %vm1292, %v5303, 0
        %v5308 = vrot.slane %v5303, 1
        %v5310 = vshll.u32 %v5308, 16
        %vm5312 = vsmask.f32 770
        %v5313 = vsel %vm5312, %v5310, %v5307
        %vm5314 = vsmask.f32 1284
        %v5315 = vsel %vm5314, %v5308, %v5313
        %v5316 = vrot.slane %v5303, 2
        %v5318 = vshll.u32 %v5316, 16
        %vm5320 = vsmask.f32 1798
        %v5321 = vsel %vm5320, %v5318, %v5315
        %v5323 = vshrl.u32 %v5303, 16
        %v5325 = vsel %vm1292, %v5323, 0
        %v5326 = vsel %vm5312, %v5308, %v5325
        %v5327 = vshrl.u32 %v5308, 16
        %v5329 = vsel %vm5314, %v5327, %v5326
        %v5330 = vsel %vm5320, %v5316, %v5329
        %v5331 = vrot.slane %v5303, 4
        %v5332 = vsel %vm1292, %v5331, 0
        %v5333 = vrot.slane %v5303, 5
        %v5335 = vshll.u32 %v5333, 16
        %v5337 = vsel %vm5312, %v5335, %v5332
        %v5338 = vsel %vm5314, %v5333, %v5337
        %v5339 = vrot.slane %v5303, 6
        %v5341 = vshll.u32 %v5339, 16
        %v5343 = vsel %vm5320, %v5341, %v5338
        %v5345 = vshrl.u32 %v5331, 16
        %v5347 = vsel %vm1292, %v5345, 0
        %v5348 = vsel %vm5312, %v5333, %v5347
        %v5349 = vshrl.u32 %v5333, 16
        %v5351 = vsel %vm5314, %v5349, %v5348
        %v5352 = vsel %vm5320, %v5339, %v5351
        %v5353 = vsel %vm1292, %v5304, 0
        %v5354 = vrot.slane %v5304, 1
        %v5356 = vshll.u32 %v5354, 16
        %v5358 = vsel %vm5312, %v5356, %v5353
        %v5359 = vsel %vm5314, %v5354, %v5358
        %v5360 = vrot.slane %v5304, 2
        %v5362 = vshll.u32 %v5360, 16
        %v5364 = vsel %vm5320, %v5362, %v5359
        %v5366 = vshrl.u32 %v5304, 16
        %v5368 = vsel %vm1292, %v5366, 0
        %v5369 = vsel %vm5312, %v5354, %v5368
        %v5370 = vshrl.u32 %v5354, 16
        %v5372 = vsel %vm5314, %v5370, %v5369
        %v5373 = vsel %vm5320, %v5360, %v5372
        %v5374 = vrot.slane %v5304, 4
        %v5375 = vsel %vm1292, %v5374, 0
        %v5376 = vrot.slane %v5304, 5
        %v5378 = vshll.u32 %v5376, 16
        %v5380 = vsel %vm5312, %v5378, %v5375
        %v5381 = vsel %vm5314, %v5376, %v5380
        %v5382 = vrot.slane %v5304, 6
        %v5384 = vshll.u32 %v5382, 16
        %v5386 = vsel %vm5320, %v5384, %v5381
        %v5388 = vshrl.u32 %v5374, 16
        %v5390 = vsel %vm1292, %v5388, 0
        %v5391 = vsel %vm5312, %v5376, %v5390
        %v5392 = vshrl.u32 %v5376, 16
        %v5394 = vsel %vm5314, %v5392, %v5391
        %v5395 = vsel %vm5320, %v5382, %v5394
        %v5396 = vsel %vm1292, %v5305, 0
        %v5397 = vrot.slane %v5305, 1
        %v5399 = vshll.u32 %v5397, 16
        %v5401 = vsel %vm5312, %v5399, %v5396
        %v5402 = vsel %vm5314, %v5397, %v5401
        %v5403 = vrot.slane %v5305, 2
        %v5405 = vshll.u32 %v5403, 16
        %v5407 = vsel %vm5320, %v5405, %v5402
        %v5409 = vshrl.u32 %v5305, 16
        %v5411 = vsel %vm1292, %v5409, 0
        %v5412 = vsel %vm5312, %v5397, %v5411
        %v5413 = vshrl.u32 %v5397, 16
        %v5415 = vsel %vm5314, %v5413, %v5412
        %v5416 = vsel %vm5320, %v5403, %v5415
        %v5417 = vrot.slane %v5305, 4
        %v5418 = vsel %vm1292, %v5417, 0
        %v5419 = vrot.slane %v5305, 5
        %v5421 = vshll.u32 %v5419, 16
        %v5423 = vsel %vm5312, %v5421, %v5418
        %v5424 = vsel %vm5314, %v5419, %v5423
        %v5425 = vrot.slane %v5305, 6
        %v5427 = vshll.u32 %v5425, 16
        %v5429 = vsel %vm5320, %v5427, %v5424
        %v5431 = vshrl.u32 %v5417, 16
        %v5433 = vsel %vm1292, %v5431, 0
        %v5434 = vsel %vm5312, %v5419, %v5433
        %v5435 = vshrl.u32 %v5419, 16
        %v5437 = vsel %vm5314, %v5435, %v5434
        %v5438 = vsel %vm5320, %v5425, %v5437
        %v5439 = vsel %vm1292, %v5306, 0
        %v5440 = vrot.slane %v5306, 1
        %v5442 = vshll.u32 %v5440, 16
        %v5444 = vsel %vm5312, %v5442, %v5439
        %v5445 = vsel %vm5314, %v5440, %v5444
        %v5446 = vrot.slane %v5306, 2
        %v5448 = vshll.u32 %v5446, 16
        %v5450 = vsel %vm5320, %v5448, %v5445
        %v5452 = vshrl.u32 %v5306, 16
        %v5454 = vsel %vm1292, %v5452, 0
        %v5455 = vsel %vm5312, %v5440, %v5454
        %v5456 = vshrl.u32 %v5440, 16
        %v5458 = vsel %vm5314, %v5456, %v5455
        %v5459 = vsel %vm5320, %v5446, %v5458
        %v5460 = vrot.slane %v5306, 4
        %v5461 = vsel %vm1292, %v5460, 0
        %v5462 = vrot.slane %v5306, 5
        %v5464 = vshll.u32 %v5462, 16
        %v5466 = vsel %vm5312, %v5464, %v5461
        %v5467 = vsel %vm5314, %v5462, %v5466
        %v5468 = vrot.slane %v5306, 6
        %v5470 = vshll.u32 %v5468, 16
        %v5472 = vsel %vm5320, %v5470, %v5467
        %v5474 = vshrl.u32 %v5460, 16
        %v5476 = vsel %vm1292, %v5474, 0
        %v5477 = vsel %vm5312, %v5462, %v5476
        %v5478 = vshrl.u32 %v5462, 16
        %v5480 = vsel %vm5314, %v5478, %v5477
        %v5481 = vsel %vm5320, %v5468, %v5480
        %v5490 = vcombine.low %v5321, %v5330
        %v5492 = vunpack.c.l.s4 1983009808
        %v5493 = vunpack.c.0.s8 %v5492
        %v5494 = vlaneseq
        %v5495 = vshrl.u32 %v5494, 7
        %v5496 = vsub.s32 %v5493, %v5495
        %v5497 = vrot.slane %v5490, %v5496
        %v5498 = vcombine.low %v5364, %v5373
        %v5500 = vunpack.c.l.s4 1983009808
        %v5501 = vunpack.c.0.s8 %v5500
        %v5502 = vlaneseq
        %v5503 = vshrl.u32 %v5502, 7
        %v5504 = vsub.s32 %v5501, %v5503
        %v5505 = vrot.slane %v5498, %v5504
        %v5506 = vcombine.low %v5407, %v5416
        %v5508 = vunpack.c.l.s4 1983009808
        %v5509 = vunpack.c.0.s8 %v5508
        %v5510 = vlaneseq
        %v5511 = vshrl.u32 %v5510, 7
        %v5512 = vsub.s32 %v5509, %v5511
        %v5513 = vrot.slane %v5506, %v5512
        %v5514 = vcombine.low %v5450, %v5459
        %v5516 = vunpack.c.l.s4 1983009808
        %v5517 = vunpack.c.0.s8 %v5516
        %v5518 = vlaneseq
        %v5519 = vshrl.u32 %v5518, 7
        %v5520 = vsub.s32 %v5517, %v5519
        %v5521 = vrot.slane %v5514, %v5520
        %v5522 = vld [vmem:[%s6] sm:$0xf]
        %v5523 = vld [vmem:[%s6 + $0x4] sm:$0xf]
        %v5524 = vld [vmem:[%s6 + $0x8] sm:$0xf]
        %v5525 = vld [vmem:[%s6 + $0xc] sm:$0xf]
        %v5526 = vld [vmem:[%s6 + $0x10] sm:$0xf]
        %v5527 = vld [vmem:[%s6 + $0x14] sm:$0xf]
        %v5528 = vld [vmem:[%s6 + $0x18] sm:$0xf]
        %v5529 = vld [vmem:[%s6 + $0x1c] sm:$0xf]
        %v5530 = vld [vmem:[%s6 + $0x20] sm:$0xf]
        %v5531 = vld [vmem:[%s6 + $0x24] sm:$0xf]
        %v5532 = vld [vmem:[%s6 + $0x28] sm:$0xf]
        %v5533 = vld [vmem:[%s6 + $0x2c] sm:$0xf]
        %v5534 = vld [vmem:[%s6 + $0x30] sm:$0xf]
        %v5535 = vld [vmem:[%s6 + $0x34] sm:$0xf]
        %v5536 = vld [vmem:[%s6 + $0x38] sm:$0xf]
        %v5537 = vld [vmem:[%s6 + $0x3c] sm:$0xf]
        %v5538 = vld [vmem:[%s6 + $0x40] sm:$0xf]
        %v5539 = vld [vmem:[%s6 + $0x44] sm:$0xf]
        %v5540 = vld [vmem:[%s6 + $0x48] sm:$0xf]
        %v5541 = vld [vmem:[%s6 + $0x4c] sm:$0xf]
        %v5542 = vld [vmem:[%s6 + $0x50] sm:$0xf]
        %v5543 = vld [vmem:[%s6 + $0x54] sm:$0xf]
        %v5544 = vld [vmem:[%s6 + $0x58] sm:$0xf]
        %v5545 = vld [vmem:[%s6 + $0x5c] sm:$0xf]
        %v5546 = vld [vmem:[%s6 + $0x60] sm:$0xf]
        %v5547 = vld [vmem:[%s6 + $0x64] sm:$0xf]
        %v5548 = vld [vmem:[%s6 + $0x68] sm:$0xf]
        %v5549 = vld [vmem:[%s6 + $0x6c] sm:$0xf]
        %v5550 = vld [vmem:[%s6 + $0x70] sm:$0xf]
        %v5551 = vld [vmem:[%s6 + $0x74] sm:$0xf]
        %v5552 = vld [vmem:[%s6 + $0x78] sm:$0xf]
        %v5553 = vld [vmem:[%s6 + $0x7c] sm:$0xf]
        %v5562 = vcombine.low %v5343, %v5352
        %v5564 = vunpack.c.l.s4 1983009808
        %v5565 = vunpack.c.0.s8 %v5564
        %v5566 = vlaneseq
        %v5567 = vshrl.u32 %v5566, 7
        %v5568 = vsub.s32 %v5565, %v5567
        %v5569 = vrot.slane %v5562, %v5568
        %v5570 = vcombine.low %v5386, %v5395
        %v5572 = vunpack.c.l.s4 1983009808
        %v5573 = vunpack.c.0.s8 %v5572
        %v5574 = vlaneseq
        %v5575 = vshrl.u32 %v5574, 7
        %v5576 = vsub.s32 %v5573, %v5575
        %v5577 = vrot.slane %v5570, %v5576
        %v5578 = vcombine.low %v5429, %v5438
        %v5580 = vunpack.c.l.s4 1983009808
        %v5581 = vunpack.c.0.s8 %v5580
        %v5582 = vlaneseq
        %v5583 = vshrl.u32 %v5582, 7
        %v5584 = vsub.s32 %v5581, %v5583
        %v5585 = vrot.slane %v5578, %v5584
        %v5586 = vcombine.low %v5472, %v5481
        %v5588 = vunpack.c.l.s4 1983009808
        %v5589 = vunpack.c.0.s8 %v5588
        %v5590 = vlaneseq
        %v5591 = vshrl.u32 %v5590, 7
        %v5592 = vsub.s32 %v5589, %v5591
        %v5593 = vrot.slane %v5586, %v5592
        %s5594 = scalar_lea.vmem %s6, 128
        %v5595 = vld [vmem:[%s5594] sm:$0xf]
        %v5596 = vld [vmem:[%s5594 + $0x4] sm:$0xf]
        %v5597 = vld [vmem:[%s5594 + $0x8] sm:$0xf]
        %v5598 = vld [vmem:[%s5594 + $0xc] sm:$0xf]
        %v5599 = vld [vmem:[%s5594 + $0x10] sm:$0xf]
        %v5600 = vld [vmem:[%s5594 + $0x14] sm:$0xf]
        %v5601 = vld [vmem:[%s5594 + $0x18] sm:$0xf]
        %v5602 = vld [vmem:[%s5594 + $0x1c] sm:$0xf]
        %v5603 = vld [vmem:[%s5594 + $0x20] sm:$0xf]
        %v5604 = vld [vmem:[%s5594 + $0x24] sm:$0xf]
        %v5605 = vld [vmem:[%s5594 + $0x28] sm:$0xf]
        %v5606 = vld [vmem:[%s5594 + $0x2c] sm:$0xf]
        %v5607 = vld [vmem:[%s5594 + $0x30] sm:$0xf]
        %v5608 = vld [vmem:[%s5594 + $0x34] sm:$0xf]
        %v5609 = vld [vmem:[%s5594 + $0x38] sm:$0xf]
        %v5610 = vld [vmem:[%s5594 + $0x3c] sm:$0xf]
        %v5611 = vld [vmem:[%s5594 + $0x40] sm:$0xf]
        %v5612 = vld [vmem:[%s5594 + $0x44] sm:$0xf]
        %v5613 = vld [vmem:[%s5594 + $0x48] sm:$0xf]
        %v5614 = vld [vmem:[%s5594 + $0x4c] sm:$0xf]
        %v5615 = vld [vmem:[%s5594 + $0x50] sm:$0xf]
        %v5616 = vld [vmem:[%s5594 + $0x54] sm:$0xf]
        %v5617 = vld [vmem:[%s5594 + $0x58] sm:$0xf]
        %v5618 = vld [vmem:[%s5594 + $0x5c] sm:$0xf]
        %v5619 = vld [vmem:[%s5594 + $0x60] sm:$0xf]
        %v5620 = vld [vmem:[%s5594 + $0x64] sm:$0xf]
        %v5621 = vld [vmem:[%s5594 + $0x68] sm:$0xf]
        %v5622 = vld [vmem:[%s5594 + $0x6c] sm:$0xf]
        %v5623 = vld [vmem:[%s5594 + $0x70] sm:$0xf]
        %v5624 = vld [vmem:[%s5594 + $0x74] sm:$0xf]
        %v5625 = vld [vmem:[%s5594 + $0x78] sm:$0xf]
        %v5626 = vld [vmem:[%s5594 + $0x7c] sm:$0xf]
        %v5627 = vcombine.low %v5569, %v5577
        %v5628 = vcombine.low %v5585, %v5593
        %v5630 = vunpack.c.l.s4 1983009808
        %v5631 = vunpack.c.0.s8 %v5630
        %v5632 = vlaneseq
        %v5633 = vshrl.u32 %v5632, 7
        %v5634 = vsub.s32 %v5631, %v5633
        %v5635 = vrot.slane %v5627, %v5634
        %v5637 = vunpack.c.l.s4 1983009808
        %v5638 = vunpack.c.0.s8 %v5637
        %v5639 = vlaneseq
        %v5640 = vshrl.u32 %v5639, 7
        %v5641 = vsub.s32 %v5638, %v5640
        %v5642 = vrot.slane %v5628, %v5641
        %v5643 = vcombine.low %v5635, %v5642
        %v5644 = vcombine.high %v5635, %v5642
        %v5679 = vunpack.c.l.b16 %v5595
        %v5680 = vunpack.c.l.b16 %v5596
        %v5681 = vunpack.c.l.b16 %v5597
        %v5682 = vunpack.c.l.b16 %v5598
        %v5683 = vunpack.c.l.b16 %v5599
        %v5684 = vunpack.c.l.b16 %v5600
        %v5685 = vunpack.c.l.b16 %v5601
        %v5686 = vunpack.c.l.b16 %v5602
        %v5687 = vunpack.c.l.b16 %v5603
        %v5688 = vunpack.c.l.b16 %v5604
        %v5689 = vunpack.c.l.b16 %v5605
        %v5690 = vunpack.c.l.b16 %v5606
        %v5691 = vunpack.c.l.b16 %v5607
        %v5692 = vunpack.c.l.b16 %v5608
        %v5693 = vunpack.c.l.b16 %v5609
        %v5694 = vunpack.c.l.b16 %v5610
        %v5695 = vunpack.c.l.b16 %v5611
        %v5696 = vunpack.c.l.b16 %v5612
        %v5697 = vunpack.c.l.b16 %v5613
        %v5698 = vunpack.c.l.b16 %v5614
        %v5699 = vunpack.c.l.b16 %v5615
        %v5700 = vunpack.c.l.b16 %v5616
        %v5701 = vunpack.c.l.b16 %v5617
        %v5702 = vunpack.c.l.b16 %v5618
        %v5703 = vunpack.c.l.b16 %v5619
        %v5704 = vunpack.c.l.b16 %v5620
        %v5705 = vunpack.c.l.b16 %v5621
        %v5706 = vunpack.c.l.b16 %v5622
        %v5707 = vunpack.c.l.b16 %v5623
        %v5708 = vunpack.c.l.b16 %v5624
        %v5709 = vunpack.c.l.b16 %v5625
        %v5710 = vunpack.c.l.b16 %v5626
        %v5711 = vpack.c.b16 %v5680, %v5679
        %v5712 = vpack.c.b16 %v5682, %v5681
        %v5713 = vpack.c.b16 %v5684, %v5683
        %v5714 = vpack.c.b16 %v5686, %v5685
        %v5715 = vpack.c.b16 %v5688, %v5687
        %v5716 = vpack.c.b16 %v5690, %v5689
        %v5717 = vpack.c.b16 %v5692, %v5691
        %v5718 = vpack.c.b16 %v5694, %v5693
        %v5719 = vpack.c.b16 %v5696, %v5695
        %v5720 = vpack.c.b16 %v5698, %v5697
        %v5721 = vpack.c.b16 %v5700, %v5699
        %v5722 = vpack.c.b16 %v5702, %v5701
        %v5723 = vpack.c.b16 %v5704, %v5703
        %v5724 = vpack.c.b16 %v5706, %v5705
        %v5725 = vpack.c.b16 %v5708, %v5707
        %v5726 = vpack.c.b16 %v5710, %v5709
        %5743 = vmatprep.subr.bf16.mxu0 0
        %5744 = vmatpush1.bf16.msra.mxu0 %v5718
        %5745 = vmatprep.subr.bf16.mxu0 0
        %5746 = vmatpush1.bf16.msra.mxu0 %v5717
        %5747 = vmatprep.subr.bf16.mxu0 0
        %5748 = vmatpush1.bf16.msra.mxu0 %v5716
        %5749 = vmatprep.subr.bf16.mxu0 0
        %5750 = vmatpush1.bf16.msra.mxu0 %v5715
        %5751 = vmatprep.subr.bf16.mxu0 0
        %5752 = vmatpush1.bf16.msra.mxu0 %v5714
        %5753 = vmatprep.subr.bf16.mxu0 0
        %5754 = vmatpush1.bf16.msra.mxu0 %v5713
        %5755 = vmatprep.subr.bf16.mxu0 0
        %5756 = vmatpush1.bf16.msra.mxu0 %v5712
        %5757 = vmatprep.subr.bf16.mxu0 0
        %5758 = vmatpush1.bf16.msra.mxu0 %v5711
        %5759 = vmatprep.subr.bf16.mxu0 0
        %5760 = vmatpush2.bf16.msra.mxu0 %v5726
        %5761 = vmatprep.subr.bf16.mxu0 0
        %5762 = vmatpush2.bf16.msra.mxu0 %v5725
        %5763 = vmatprep.subr.bf16.mxu0 0
        %5764 = vmatpush2.bf16.msra.mxu0 %v5724
        %5765 = vmatprep.subr.bf16.mxu0 0
        %5766 = vmatpush2.bf16.msra.mxu0 %v5723
        %5767 = vmatprep.subr.bf16.mxu0 0
        %5768 = vmatpush2.bf16.msra.mxu0 %v5722
        %5769 = vmatprep.subr.bf16.mxu0 0
        %5770 = vmatpush2.bf16.msra.mxu0 %v5721
        %5771 = vmatprep.subr.bf16.mxu0 0
        %5772 = vmatpush2.bf16.msra.mxu0 %v5720
        %5773 = vmatprep.subr.bf16.mxu0 0
        %5774 = vmatpush2.bf16.msra.mxu0 %v5719
        %5775 = vmatprep.mubr.bf16.mxu0 %v5644
        %5776 = vmatmul.mubr.bf16.gmra.mxu0 %v5643
        %v5777 = vpop.f32.mrf.mxu0
        %v5778 = vadd.f32 0.0, %v5777
        %v5779 = vpop.f32.mrf.mxu0
        %v5780 = vpop.f32.mrf.mxu0
        %v5781 = vadd.f32 0.0, %v5780
        %v5782 = vpop.f32.mrf.mxu0
        %5783 = vdwg.mxu0
        %v5784 = vcombine.low %v5497, %v5505
        %v5785 = vcombine.low %v5513, %v5521
        %v5787 = vunpack.c.l.s4 1983009808
        %v5788 = vunpack.c.0.s8 %v5787
        %v5789 = vlaneseq
        %v5790 = vshrl.u32 %v5789, 7
        %v5791 = vsub.s32 %v5788, %v5790
        %v5792 = vrot.slane %v5784, %v5791
        %v5794 = vunpack.c.l.s4 1983009808
        %v5795 = vunpack.c.0.s8 %v5794
        %v5796 = vlaneseq
        %v5797 = vshrl.u32 %v5796, 7
        %v5798 = vsub.s32 %v5795, %v5797
        %v5799 = vrot.slane %v5785, %v5798
        %v5800 = vcombine.low %v5792, %v5799
        %v5801 = vcombine.high %v5792, %v5799
        %v5836 = vunpack.c.l.b16 %v5522
        %v5837 = vunpack.c.l.b16 %v5523
        %v5838 = vunpack.c.l.b16 %v5524
        %v5839 = vunpack.c.l.b16 %v5525
        %v5840 = vunpack.c.l.b16 %v5526
        %v5841 = vunpack.c.l.b16 %v5527
        %v5842 = vunpack.c.l.b16 %v5528
        %v5843 = vunpack.c.l.b16 %v5529
        %v5844 = vunpack.c.l.b16 %v5530
        %v5845 = vunpack.c.l.b16 %v5531
        %v5846 = vunpack.c.l.b16 %v5532
        %v5847 = vunpack.c.l.b16 %v5533
        %v5848 = vunpack.c.l.b16 %v5534
        %v5849 = vunpack.c.l.b16 %v5535
        %v5850 = vunpack.c.l.b16 %v5536
        %v5851 = vunpack.c.l.b16 %v5537
        %v5852 = vunpack.c.l.b16 %v5538
        %v5853 = vunpack.c.l.b16 %v5539
        %v5854 = vunpack.c.l.b16 %v5540
        %v5855 = vunpack.c.l.b16 %v5541
        %v5856 = vunpack.c.l.b16 %v5542
        %v5857 = vunpack.c.l.b16 %v5543
        %v5858 = vunpack.c.l.b16 %v5544
        %v5859 = vunpack.c.l.b16 %v5545
        %v5860 = vunpack.c.l.b16 %v5546
        %v5861 = vunpack.c.l.b16 %v5547
        %v5862 = vunpack.c.l.b16 %v5548
        %v5863 = vunpack.c.l.b16 %v5549
        %v5864 = vunpack.c.l.b16 %v5550
        %v5865 = vunpack.c.l.b16 %v5551
        %v5866 = vunpack.c.l.b16 %v5552
        %v5867 = vunpack.c.l.b16 %v5553
        %v5868 = vpack.c.b16 %v5837, %v5836
        %v5869 = vpack.c.b16 %v5839, %v5838
        %v5870 = vpack.c.b16 %v5841, %v5840
        %v5871 = vpack.c.b16 %v5843, %v5842
        %v5872 = vpack.c.b16 %v5845, %v5844
        %v5873 = vpack.c.b16 %v5847, %v5846
        %v5874 = vpack.c.b16 %v5849, %v5848
        %v5875 = vpack.c.b16 %v5851, %v5850
        %v5876 = vpack.c.b16 %v5853, %v5852
        %v5877 = vpack.c.b16 %v5855, %v5854
        %v5878 = vpack.c.b16 %v5857, %v5856
        %v5879 = vpack.c.b16 %v5859, %v5858
        %v5880 = vpack.c.b16 %v5861, %v5860
        %v5881 = vpack.c.b16 %v5863, %v5862
        %v5882 = vpack.c.b16 %v5865, %v5864
        %v5883 = vpack.c.b16 %v5867, %v5866
        %5900 = vmatprep.subr.bf16.mxu0 0
        %5901 = vmatpush1.bf16.msra.mxu0 %v5875
        %5902 = vmatprep.subr.bf16.mxu0 0
        %5903 = vmatpush1.bf16.msra.mxu0 %v5874
        %5904 = vmatprep.subr.bf16.mxu0 0
        %5905 = vmatpush1.bf16.msra.mxu0 %v5873
        %5906 = vmatprep.subr.bf16.mxu0 0
        %5907 = vmatpush1.bf16.msra.mxu0 %v5872
        %5908 = vmatprep.subr.bf16.mxu0 0
        %5909 = vmatpush1.bf16.msra.mxu0 %v5871
        %5910 = vmatprep.subr.bf16.mxu0 0
        %5911 = vmatpush1.bf16.msra.mxu0 %v5870
        %5912 = vmatprep.subr.bf16.mxu0 0
        %5913 = vmatpush1.bf16.msra.mxu0 %v5869
        %5914 = vmatprep.subr.bf16.mxu0 0
        %5915 = vmatpush1.bf16.msra.mxu0 %v5868
        %5916 = vmatprep.subr.bf16.mxu0 0
        %5917 = vmatpush2.bf16.msra.mxu0 %v5883
        %5918 = vmatprep.subr.bf16.mxu0 0
        %5919 = vmatpush2.bf16.msra.mxu0 %v5882
        %5920 = vmatprep.subr.bf16.mxu0 0
        %5921 = vmatpush2.bf16.msra.mxu0 %v5881
        %5922 = vmatprep.subr.bf16.mxu0 0
        %5923 = vmatpush2.bf16.msra.mxu0 %v5880
        %5924 = vmatprep.subr.bf16.mxu0 0
        %5925 = vmatpush2.bf16.msra.mxu0 %v5879
        %5926 = vmatprep.subr.bf16.mxu0 0
        %5927 = vmatpush2.bf16.msra.mxu0 %v5878
        %5928 = vmatprep.subr.bf16.mxu0 0
        %5929 = vmatpush2.bf16.msra.mxu0 %v5877
        %5930 = vmatprep.subr.bf16.mxu0 0
        %5931 = vmatpush2.bf16.msra.mxu0 %v5876
        %5932 = vmatprep.mubr.bf16.mxu0 %v5801
        %5933 = vmatmul.mubr.bf16.gmra.mxu0 %v5800
        %v5934 = vpop.f32.mrf.mxu0
        %v5935 = vadd.f32 %v5778, %v5934
        %v5936 = vpop.f32.mrf.mxu0
        %v5937 = vpop.f32.mrf.mxu0
        %v5938 = vadd.f32 %v5781, %v5937
        %v5939 = vpop.f32.mrf.mxu0
        %5940 = vdwg.mxu0
        %v5941 = vld [vmem:[%s7 + $0x4] sm:$0x1]
        %v5942 = vlaneseq
        %v5943 = vshrl.u32 %v5942, 7
        %v5944 = vsub.s32 0, %v5943
        %v5945 = vrot.slane %v5941, %v5944
        %v5946 = vadd.f32 %v5935, %v5945
        %v5947 = vadd.f32 %v5938, %v5945
        %v5948 = vmax.f32 %v5946, 0.0
        %v5949 = vmax.f32 %v5947, 0.0
        %5950 = vst [vmem:[%s313] sm:$0xff] %v5948
        %5951 = vst [vmem:[%s313 + $0x8] sm:$0xff] %v5949
        %s5952 = sand.u32 %s208, 1
        %s5953 = scalar_lea.sflag [#allocation4], %s5952
        %s5954 = sand.u32 %s208, 1
        %s5955 = smul.addr %s5954, 16
        %s5956 = scalar_lea.vmem [#allocation3], %s5955
        // Predicated region
        $region53: #{receptive_field_forward.1} parent=51 // pred_check
          %p5957 = pneg %p218
        $region54: #{receptive_field_forward.1} parent=51 // pred_check_branch
          %5959 = sbr.rel (%p5957) target = $region56
        $region55: #{receptive_field_forward.1} parent=51 // pred_region
          %s5961 = ssub.s32 256, 256
          %5962 = vsyncadd %s5953, %s5961
          %s5963 = smul.addr %s22, 2
          %s5964 = smul.addr %s5963, 128
          %s5965 = scalar_lea.hbm %s8, %s5964
          %s5966 = sshll.u32 %s5956, 4
          %s5967 = int_to_ptr.vmem [resolvable:$true] %s5966
          %5972 = dma.vmem_to_hbm [thread:$0]  %s5967, 256, %s5965, %s5953, 128, 128, 8
        $region56: #{receptive_field_forward.1} parent=51 // pred_fallthru
          _
      $region52: #{receptive_field_forward.1} parent=5 // pred_fallthru
        _
      %p5973 = scmp.le.s32.totalorder 2, %s17
      // Predicated region
      $region57: #{receptive_field_forward.1} parent=5 // pred_check
        %p5974 = pneg %p5973
      $region58: #{receptive_field_forward.1} parent=5 // pred_check_branch
        %5976 = sbr.rel (%p5974) target = $region60
      $region59: #{receptive_field_forward.1} parent=5 // pred_region
        %s5977 = ssub.s32 %s17, 2
        // Predicated region
        $region61: #{receptive_field_forward.1} parent=59 // pred_check
          %p5978 = pneg %p224
        $region62: #{receptive_field_forward.1} parent=59 // pred_check_branch
          %5980 = sbr.rel (%p5978) target = $region64
        $region63: #{receptive_field_forward.1} parent=59 // pred_region
          %s5981 = sand.u32 %s209, 1
          %s5982 = scalar_lea.sflag [#allocation4], %s5981
          %s5983 = sand.u32 %s209, 1
          %s5984 = smul.addr %s5983, 16
          %s5985 = scalar_lea.vmem [#allocation3], %s5984
          %5986 = dma.done %s5982, 256
        $region64: #{receptive_field_forward.1} parent=59 // pred_fallthru
          _
      $region60: #{receptive_field_forward.1} parent=5 // pred_fallthru
        _
    $region6: #{receptive_field_forward.1} parent=1 // loop_footer
      %s21 = sadd.s32 1, %s17
    $region7: #{receptive_field_forward.1} parent=1 // loop_footer_branch
      %16 = sbr.rel target = $region3
    $region8: #{receptive_field_forward.1} parent=1 // loop_exit
      _
    %5987 = vsyncpa [#allocation4], 1
    %s5988 = scalar_lea.sflag [#allocation4], 1
    %5989 = vsyncpa %s5988, 1

</llo_original>
